<compile_context>
chip_gen: v5e
topology: v5e:2x2
jax: 0.10.0
libtpu: 0.0.40
codegen_flags: <defaults>
</compile_context>

<pallas_src>
import math

import jax
import jax.numpy as jnp
from jax.experimental import pallas as pl
from jax.experimental.pallas import tpu as pltpu


def make_encoder_kernel(Bt, S, D, H, tF, nF, eps=1e-5):
    Dh = D // H
    scale = 1.0 / math.sqrt(Dh)
    N = Bt * S  # rows handled per grid step (matmul M dimension)
    bf16 = jnp.bfloat16

    def kernel(x_ref,
               wqkv_ref, bqkv_ref,
               wo_ref, bo_ref,
               g1_ref, bt1_ref,
               w1_ref, b1_ref, w2_ref, b2_ref,
               g2_ref, bt2_ref,
               o_ref,
               xn_sc, ff_sc):
        f = pl.program_id(1)

        # ------------- f == 0 : attention + residual + LayerNorm1 -------------
        @pl.when(f == 0)
        def _attention_and_ln1():
            # (Bt, S, D) -> (Bt*S, D): fold batch rows into the matmul M dim.
            x = x_ref[...].reshape(N, D)                      # f32
            xb = x.astype(bf16)

            # fused QKV projection: one (N, D) @ (D, 3D) MXU matmul, f32 acc.
            qkv = jnp.dot(xb, wqkv_ref[...],
                          preferred_element_type=jnp.float32) + bqkv_ref[...]

            # Per-head attention.  Heads' contexts are concatenated once and
            # pushed through a SINGLE full-K (N, D) @ (D, D) output projection
            # (no per-head K=Dh matmuls against Wo slices).
            # TODO(synk): for large H, bound live ranges with lax.fori_loop over
            #   a VMEM-resident qkv scratch and use 128-lane-aligned head groups
            #   instead of this static unrolled loop with 64-lane value slices.
            ctx_heads = []
            for h in range(H):
                # 1/sqrt(Dh) folded into q (S*Dh mul) instead of logits (S*S).
                qh = (qkv[:, h * Dh:(h + 1) * Dh] * scale
                      ).reshape(Bt, S, Dh).astype(bf16)
                kh = qkv[:, D + h * Dh:D + (h + 1) * Dh
                         ].reshape(Bt, S, Dh).astype(bf16)
                vh = qkv[:, 2 * D + h * Dh:2 * D + (h + 1) * Dh
                         ].reshape(Bt, S, Dh).astype(bf16)

                # TODO(synk): KV-tile with flash-style online softmax for long S
                #   so the (Bt, S, S) logits never materialize (v7x, S >= 2k).
                logits = jnp.einsum("bqd,bkd->bqk", qh, kh,
                                    preferred_element_type=jnp.float32)
                logits = logits - jnp.max(logits, axis=-1, keepdims=True)
                p = jnp.exp(logits)
                p = p * pl.reciprocal(jnp.sum(p, axis=-1, keepdims=True),
                                      approx=True)
                ctx = jnp.einsum("bqk,bkd->bqd", p.astype(bf16), vh,
                                 preferred_element_type=jnp.float32)
                ctx_heads.append(ctx.reshape(N, Dh).astype(bf16))

            ctx_all = jnp.concatenate(ctx_heads, axis=-1)      # (N, D) bf16
            attn_out = jnp.dot(ctx_all, wo_ref[...],
                               preferred_element_type=jnp.float32) + bo_ref[...]

            # residual + LayerNorm1 (f32)
            x1 = x + attn_out
            mu1 = jnp.mean(x1, axis=-1, keepdims=True)
            var1 = jnp.mean((x1 - mu1) ** 2, axis=-1, keepdims=True)
            xn = (x1 - mu1) * jax.lax.rsqrt(var1 + eps)
            xn_sc[...] = xn * g1_ref[...] + bt1_ref[...]
            ff_sc[...] = jnp.zeros_like(ff_sc)

        # ------ every f : one tF-wide FFN tile, accumulated into VMEM ---------
        hdn = jnp.dot(xn_sc[...].astype(bf16), w1_ref[...],
                      preferred_element_type=jnp.float32) + b1_ref[...]
        hdn = jnp.maximum(hdn, 0.0)                            # ReLU
        ff_sc[...] += jnp.dot(hdn.astype(bf16), w2_ref[...],
                              preferred_element_type=jnp.float32)

        # ------------- f == last : residual + LayerNorm2 + store --------------
        @pl.when(f == nF - 1)
        def _ln2_and_store():
            x2 = xn_sc[...] + ff_sc[...] + b2_ref[...]
            mu2 = jnp.mean(x2, axis=-1, keepdims=True)
            var2 = jnp.mean((x2 - mu2) ** 2, axis=-1, keepdims=True)
            out = (x2 - mu2) * jax.lax.rsqrt(var2 + eps)
            out = out * g2_ref[...] + bt2_ref[...]
            o_ref[...] = out.reshape(Bt, S, D)

    return kernel


def _vmem_limit_bytes():
    """~3/4 of physical VMEM: ~48 MiB on v7x (64 MiB/TC), ~96 MiB on v5e/v6e."""
    try:
        cap = pltpu.get_tpu_info().vmem_capacity_bytes
    except Exception:
        cap = 64 * 1024 * 1024          # conservative (v7x-sized) fallback
    return min(int(cap) * 3 // 4, 112 * 1024 * 1024)


def _pick_bt(B, S, target_rows):
    """Largest divisor of B with Bt*S near target_rows, but keep >= 2 grid
    steps when B allows it so the 'parallel' batch axis can split across the
    two v7x TensorCores and x/out DMA overlaps compute."""
    bt = max(1, min(B, max(1, target_rows // max(S, 1))))
    while B % bt:
        bt -= 1
    if B >= 2 and B // bt < 2:
        bt = max(1, B // 2)
        while B % bt:
            bt -= 1
    return bt


def _pick_tf(F, target=512):
    """FFN column-tile width: divides F, <= target, 128-lane aligned if possible."""
    for tf in range(min(F, target), 0, -1):
        if F % tf == 0 and (tf % 128 == 0 or tf == F):
            return tf
    return F


def encoder_block(x, params, num_heads):
    B, S, D = x.shape
    F = params["w1"].shape[1]
    vmem_limit = _vmem_limit_bytes()
    target_rows = 512 if vmem_limit > 64 * 1024 * 1024 else 256
    Bt = _pick_bt(B, S, target_rows)
    tF = _pick_tf(F)
    nF = F // tF
    N = Bt * S
    kernel = make_encoder_kernel(Bt, S, D, num_heads, tF, nF)

    def run(single_buffer_weights):
        if single_buffer_weights:
            # grid-invariant weights: one resident copy (halves weight VMEM).
            const = lambda shape: pl.BlockSpec(
                shape, lambda b, f: tuple(0 for _ in shape),
                pipeline_mode=pl.Buffered(1))
        else:
            const = lambda shape: pl.BlockSpec(
                shape, lambda b, f: tuple(0 for _ in shape))

        grid_spec = pltpu.PrefetchScalarGridSpec(
            num_scalar_prefetch=0,
            grid=(B // Bt, nF),                                   # (batch, ffn-tile)
            in_specs=[
                pl.BlockSpec((Bt, S, D), lambda b, f: (b, 0, 0)),  # x
                const((D, 3 * D)), const((1, 3 * D)),              # Wqkv, bqkv
                const((D, D)), const((1, D)),                      # Wo, bo
                const((1, D)), const((1, D)),                      # ln1 gamma, beta
                pl.BlockSpec((D, tF), lambda b, f: (0, f)),        # W1 column tile
                pl.BlockSpec((1, tF), lambda b, f: (0, f)),        # b1 tile
                pl.BlockSpec((tF, D), lambda b, f: (f, 0)),        # W2 row tile
                const((1, D)),                                     # b2
                const((1, D)), const((1, D)),                      # ln2 gamma, beta
            ],
            out_specs=pl.BlockSpec((Bt, S, D), lambda b, f: (b, 0, 0)),
            scratch_shapes=[pltpu.VMEM((N, D), jnp.float32),       # LN1 output
                            pltpu.VMEM((N, D), jnp.float32)])      # FFN accumulator

        out = pl.pallas_call(
            kernel,
            out_shape=jax.ShapeDtypeStruct((B, S, D), jnp.float32),
            grid_spec=grid_spec,
            compiler_params=pltpu.CompilerParams(
                dimension_semantics=("parallel", "arbitrary"),     # megacore on b
                vmem_limit_bytes=vmem_limit),
        )(
            x,
            params["wqkv"], params["bqkv"],
            params["wo"], params["bo"],
            params["g1"], params["bt1"],
            params["w1"], params["b1"],
            params["w2"], params["b2"],
            params["g2"], params["bt2"],
        )
        return jax.block_until_ready(out)

    try:
        return run(single_buffer_weights=True)
    except Exception:
        # Fallback for Pallas builds without BlockSpec pipeline_mode support.
        return run(single_buffer_weights=False)


def init_params(key, D, H, F):
    """Deterministic synthetic weights. Matmul weights stored pre-transposed to
    (in, out) for the x @ W convention and cast to bf16 (MXU inputs); biases and
    LayerNorm params stay f32."""
    ks = jax.random.split(key, 6)
    bf = jnp.bfloat16

    def xavier(k, fan_in, fan_out, shape):
        limit = math.sqrt(6.0 / (fan_in + fan_out))
        return jax.random.uniform(k, shape, jnp.float32, -limit, limit)

    # fused QKV weight (D, 3D): columns = [Q_allheads | K_allheads | V_allheads]
    wqkv = xavier(ks[0], D, 3 * D, (D, 3 * D))
    bqkv = jnp.zeros((1, 3 * D), jnp.float32)

    wo = xavier(ks[1], D, D, (D, D))
    bo = jnp.zeros((1, D), jnp.float32)

    w1 = xavier(ks[2], D, F, (D, F))
    b1 = 0.01 * jax.random.normal(ks[3], (1, F), jnp.float32)
    w2 = xavier(ks[4], F, D, (F, D))
    b2 = 0.01 * jax.random.normal(ks[5], (1, D), jnp.float32)

    g1 = jnp.ones((1, D), jnp.float32)
    bt1 = jnp.zeros((1, D), jnp.float32)
    g2 = jnp.ones((1, D), jnp.float32)
    bt2 = jnp.zeros((1, D), jnp.float32)

    return dict(wqkv=wqkv.astype(bf), bqkv=bqkv,
                wo=wo.astype(bf), bo=bo,
                g1=g1, bt1=bt1,
                w1=w1.astype(bf), b1=b1,
                w2=w2.astype(bf), b2=b2,
                g2=g2, bt2=bt2)


def encoder_block_ref(x, p, H, eps=1e-5):
    """Pure-JAX reference reproducing the PyTorch forward semantics with the
    same mixed precision (bf16 MXU inputs, f32 accumulation / norm math)."""
    bf = jnp.bfloat16
    f32 = jnp.float32
    B, S, D = x.shape
    Dh = D // H
    scale = 1.0 / math.sqrt(Dh)

    xb = x.astype(bf)
    qkv = jnp.dot(xb, p["wqkv"], preferred_element_type=f32) + p["bqkv"]
    q, k, v = qkv[..., :D], qkv[..., D:2 * D], qkv[..., 2 * D:]

    def heads(t):
        return t.reshape(B, S, H, Dh).transpose(0, 2, 1, 3).astype(bf)

    qh, kh, vh = heads(q), heads(k), heads(v)
    logits = jnp.einsum("bhqd,bhkd->bhqk", qh, kh,
                        preferred_element_type=f32) * scale
    attn = jax.nn.softmax(logits, axis=-1)
    vals = jnp.einsum("bhqk,bhkd->bhqd", attn.astype(bf), vh,
                      preferred_element_type=f32)
    vals = vals.transpose(0, 2, 1, 3).reshape(B, S, D)
    attn_out = jnp.dot(vals.astype(bf), p["wo"],
                       preferred_element_type=f32) + p["bo"]

    def ln(z, g, b):
        mu = z.mean(-1, keepdims=True)
        var = ((z - mu) ** 2).mean(-1, keepdims=True)
        return (z - mu) * jax.lax.rsqrt(var + eps) * g + b

    x1 = ln(x + attn_out, p["g1"], p["bt1"])
    hdn = jnp.dot(x1.astype(bf), p["w1"], preferred_element_type=f32) + p["b1"]
    hdn = jnp.maximum(hdn, 0.0)
    ff = jnp.dot(hdn.astype(bf), p["w2"], preferred_element_type=f32) + p["b2"]
    return ln(x1 + ff, p["g2"], p["bt2"])


if __name__ == "__main__":
    B, S, D, H, F = 2, 8, 32, 4, 64  # batch, seq, embed, heads, ffn hidden

    key = jax.random.PRNGKey(0)
    kx, kp = jax.random.split(key)
    x = jax.random.normal(kx, (B, S, D), jnp.float32)
    params = init_params(kp, D, H, F)

    out = encoder_block(x, params, num_heads=H)
    out = jax.block_until_ready(out)

    ref = encoder_block_ref(x, params, H)
    assert out.shape == (B, S, D)
    # bf16 MXU inputs + EUP approx reciprocal in softmax -> loosened tolerance.
    assert jnp.allclose(out, ref, atol=2e-2, rtol=2e-2), float(
        jnp.max(jnp.abs(out - ref)))

    print("KERNEL_OK")
</pallas_src>

<mosaic_0001>
module attributes {stable_mosaic.version = 11 : i64} {
  func.func @kernel(%arg0: i32, %arg1: i32, %arg2: memref<1x8x32xf32, #tpu.memory_space<vmem>>, %arg3: memref<32x96xbf16, #tpu.memory_space<vmem>>, %arg4: memref<1x96xf32, #tpu.memory_space<vmem>>, %arg5: memref<32x32xbf16, #tpu.memory_space<vmem>>, %arg6: memref<1x32xf32, #tpu.memory_space<vmem>>, %arg7: memref<1x32xf32, #tpu.memory_space<vmem>>, %arg8: memref<1x32xf32, #tpu.memory_space<vmem>>, %arg9: memref<32x64xbf16, #tpu.memory_space<vmem>>, %arg10: memref<1x64xf32, #tpu.memory_space<vmem>>, %arg11: memref<64x32xbf16, #tpu.memory_space<vmem>>, %arg12: memref<1x32xf32, #tpu.memory_space<vmem>>, %arg13: memref<1x32xf32, #tpu.memory_space<vmem>>, %arg14: memref<1x32xf32, #tpu.memory_space<vmem>>, %arg15: memref<1x8x32xf32, #tpu.memory_space<vmem>>, %arg16: memref<8x32xf32, #tpu.memory_space<vmem>>, %arg17: memref<8x32xf32, #tpu.memory_space<vmem>>) attributes {dimension_semantics = [#tpu.dimension_semantics<parallel>, #tpu.dimension_semantics<arbitrary>], iteration_bounds = array<i64: 2, 1>, scalar_prefetch = 0 : i64, scratch_operands = 2 : i64, tpu.core_type = #tpu.core_type<tc>, window_params = [{transform_indices = @transform_0, window_bounds = array<i64: 1, 8, 32>}, {pipeline_mode = #tpu.pipeline_mode<synchronous>, transform_indices = @transform_1, window_bounds = array<i64: 32, 96>}, {pipeline_mode = #tpu.pipeline_mode<synchronous>, transform_indices = @transform_2, window_bounds = array<i64: 1, 96>}, {pipeline_mode = #tpu.pipeline_mode<synchronous>, transform_indices = @transform_3, window_bounds = array<i64: 32, 32>}, {pipeline_mode = #tpu.pipeline_mode<synchronous>, transform_indices = @transform_4, window_bounds = array<i64: 1, 32>}, {pipeline_mode = #tpu.pipeline_mode<synchronous>, transform_indices = @transform_5, window_bounds = array<i64: 1, 32>}, {pipeline_mode = #tpu.pipeline_mode<synchronous>, transform_indices = @transform_6, window_bounds = array<i64: 1, 32>}, {transform_indices = @transform_7, window_bounds = array<i64: 32, 64>}, {transform_indices = @transform_8, window_bounds = array<i64: 1, 64>}, {transform_indices = @transform_9, window_bounds = array<i64: 64, 32>}, {pipeline_mode = #tpu.pipeline_mode<synchronous>, transform_indices = @transform_10, window_bounds = array<i64: 1, 32>}, {pipeline_mode = #tpu.pipeline_mode<synchronous>, transform_indices = @transform_11, window_bounds = array<i64: 1, 32>}, {pipeline_mode = #tpu.pipeline_mode<synchronous>, transform_indices = @transform_12, window_bounds = array<i64: 1, 32>}, {transform_indices = @transform_13, window_bounds = array<i64: 1, 8, 32>}]} {
    %c0_i32 = arith.constant 0 : i32
    %0 = arith.cmpi eq, %arg1, %c0_i32 : i32
    %1 = arith.extui %0 : i1 to i32
    %c0_i32_0 = arith.constant 0 : i32
    %2 = arith.cmpi ne, %1, %c0_i32_0 : i32
    scf.if %2 {
      %c0_16 = arith.constant 0 : index
      %c0_17 = arith.constant 0 : index
      %c0_18 = arith.constant 0 : index
      %21 = vector.load %arg2[%c0_16, %c0_17, %c0_18] : memref<1x8x32xf32, #tpu.memory_space<vmem>>, vector<1x8x32xf32>
      %22 = vector.shape_cast %21 : vector<1x8x32xf32> to vector<8x32xf32>
      %23 = arith.truncf %22 : vector<8x32xf32> to vector<8x32xbf16>
      %c0_19 = arith.constant 0 : index
      %c0_20 = arith.constant 0 : index
      %24 = vector.load %arg3[%c0_19, %c0_20] : memref<32x96xbf16, #tpu.memory_space<vmem>>, vector<32x96xbf16>
      %cst_21 = arith.constant dense<0.000000e+00> : vector<8x96xf32>
      %25 = tpu.matmul %23, %24, %cst_21 {dimension_numbers = #tpu.dot_dimension_numbers<[1], [0], [0], [1], [0, 0, 1, 1], [], []>} : vector<8x32xbf16>, vector<32x96xbf16>, vector<8x96xf32> -> vector<8x96xf32>
      %c0_22 = arith.constant 0 : index
      %c0_23 = arith.constant 0 : index
      %26 = vector.load %arg4[%c0_22, %c0_23] : memref<1x96xf32, #tpu.memory_space<vmem>>, vector<1x96xf32>
      %27 = vector.broadcast %26 : vector<1x96xf32> to vector<8x96xf32>
      %28 = arith.addf %25, %27 : vector<8x96xf32>
      %29 = vector.extract_strided_slice %28 {offsets = [0, 0], sizes = [8, 8], strides = [1, 1]} : vector<8x96xf32> to vector<8x8xf32>
      %cst_24 = arith.constant 0.353553385 : f32
      %30 = vector.broadcast %cst_24 : f32 to vector<8x8xf32>
      %31 = arith.mulf %29, %30 : vector<8x8xf32>
      %32 = vector.shape_cast %31 : vector<8x8xf32> to vector<1x8x8xf32>
      %33 = arith.truncf %32 : vector<1x8x8xf32> to vector<1x8x8xbf16>
      %34 = vector.extract_strided_slice %28 {offsets = [0, 32], sizes = [8, 8], strides = [1, 1]} : vector<8x96xf32> to vector<8x8xf32>
      %35 = vector.shape_cast %34 : vector<8x8xf32> to vector<1x8x8xf32>
      %36 = arith.truncf %35 : vector<1x8x8xf32> to vector<1x8x8xbf16>
      %37 = vector.extract_strided_slice %28 {offsets = [0, 64], sizes = [8, 8], strides = [1, 1]} : vector<8x96xf32> to vector<8x8xf32>
      %38 = vector.shape_cast %37 : vector<8x8xf32> to vector<1x8x8xf32>
      %39 = arith.truncf %38 : vector<1x8x8xf32> to vector<1x8x8xbf16>
      "tpu.trace_start"() <{level = 10 : i32, message = "bqd,bkd->bqk"}> : () -> ()
      %cst_25 = arith.constant dense<0.000000e+00> : vector<1x8x8xf32>
      %40 = tpu.matmul %33, %36, %cst_25 {dimension_numbers = #tpu.dot_dimension_numbers<[2], [2], [1], [1], [0, 0, 0, 1, 1, 1], [0], [0]>} : vector<1x8x8xbf16>, vector<1x8x8xbf16>, vector<1x8x8xf32> -> vector<1x8x8xf32>
      "tpu.trace_stop"() : () -> ()
      %cst_26 = arith.constant dense<0xFF800000> : vector<1x8xf32>
      %41 = vector.multi_reduction <maximumf>, %40, %cst_26 [2] : vector<1x8x8xf32> to vector<1x8xf32>
      %42 = vector.shape_cast %41 : vector<1x8xf32> to vector<1x8x1xf32>
      %43 = vector.broadcast %42 : vector<1x8x1xf32> to vector<1x8x8xf32>
      %44 = arith.subf %40, %43 : vector<1x8x8xf32>
      %45 = math.exp %44 : vector<1x8x8xf32>
      %cst_27 = arith.constant dense<0.000000e+00> : vector<1x8xf32>
      %46 = vector.multi_reduction <add>, %45, %cst_27 [2] : vector<1x8x8xf32> to vector<1x8xf32>
      %47 = vector.shape_cast %46 : vector<1x8xf32> to vector<1x8x1xf32>
      %48 = tpu.reciprocal %47 {approx = true} : vector<1x8x1xf32> -> vector<1x8x1xf32>
      %49 = vector.broadcast %48 : vector<1x8x1xf32> to vector<1x8x8xf32>
      %50 = arith.mulf %45, %49 : vector<1x8x8xf32>
      %51 = arith.truncf %50 : vector<1x8x8xf32> to vector<1x8x8xbf16>
      "tpu.trace_start"() <{level = 10 : i32, message = "bqk,bkd->bqd"}> : () -> ()
      %cst_28 = arith.constant dense<0.000000e+00> : vector<1x8x8xf32>
      %52 = tpu.matmul %51, %39, %cst_28 {dimension_numbers = #tpu.dot_dimension_numbers<[2], [1], [1], [2], [0, 0, 0, 1, 1, 2], [0], [0]>} : vector<1x8x8xbf16>, vector<1x8x8xbf16>, vector<1x8x8xf32> -> vector<1x8x8xf32>
      "tpu.trace_stop"() : () -> ()
      %53 = vector.shape_cast %52 : vector<1x8x8xf32> to vector<8x8xf32>
      %54 = arith.truncf %53 : vector<8x8xf32> to vector<8x8xbf16>
      %55 = vector.extract_strided_slice %28 {offsets = [0, 8], sizes = [8, 8], strides = [1, 1]} : vector<8x96xf32> to vector<8x8xf32>
      %cst_29 = arith.constant 0.353553385 : f32
      %56 = vector.broadcast %cst_29 : f32 to vector<8x8xf32>
      %57 = arith.mulf %55, %56 : vector<8x8xf32>
      %58 = vector.shape_cast %57 : vector<8x8xf32> to vector<1x8x8xf32>
      %59 = arith.truncf %58 : vector<1x8x8xf32> to vector<1x8x8xbf16>
      %60 = vector.extract_strided_slice %28 {offsets = [0, 40], sizes = [8, 8], strides = [1, 1]} : vector<8x96xf32> to vector<8x8xf32>
      %61 = vector.shape_cast %60 : vector<8x8xf32> to vector<1x8x8xf32>
      %62 = arith.truncf %61 : vector<1x8x8xf32> to vector<1x8x8xbf16>
      %63 = vector.extract_strided_slice %28 {offsets = [0, 72], sizes = [8, 8], strides = [1, 1]} : vector<8x96xf32> to vector<8x8xf32>
      %64 = vector.shape_cast %63 : vector<8x8xf32> to vector<1x8x8xf32>
      %65 = arith.truncf %64 : vector<1x8x8xf32> to vector<1x8x8xbf16>
      "tpu.trace_start"() <{level = 10 : i32, message = "bqd,bkd->bqk"}> : () -> ()
      %cst_30 = arith.constant dense<0.000000e+00> : vector<1x8x8xf32>
      %66 = tpu.matmul %59, %62, %cst_30 {dimension_numbers = #tpu.dot_dimension_numbers<[2], [2], [1], [1], [0, 0, 0, 1, 1, 1], [0], [0]>} : vector<1x8x8xbf16>, vector<1x8x8xbf16>, vector<1x8x8xf32> -> vector<1x8x8xf32>
      "tpu.trace_stop"() : () -> ()
      %cst_31 = arith.constant dense<0xFF800000> : vector<1x8xf32>
      %67 = vector.multi_reduction <maximumf>, %66, %cst_31 [2] : vector<1x8x8xf32> to vector<1x8xf32>
      %68 = vector.shape_cast %67 : vector<1x8xf32> to vector<1x8x1xf32>
      %69 = vector.broadcast %68 : vector<1x8x1xf32> to vector<1x8x8xf32>
      %70 = arith.subf %66, %69 : vector<1x8x8xf32>
      %71 = math.exp %70 : vector<1x8x8xf32>
      %cst_32 = arith.constant dense<0.000000e+00> : vector<1x8xf32>
      %72 = vector.multi_reduction <add>, %71, %cst_32 [2] : vector<1x8x8xf32> to vector<1x8xf32>
      %73 = vector.shape_cast %72 : vector<1x8xf32> to vector<1x8x1xf32>
      %74 = tpu.reciprocal %73 {approx = true} : vector<1x8x1xf32> -> vector<1x8x1xf32>
      %75 = vector.broadcast %74 : vector<1x8x1xf32> to vector<1x8x8xf32>
      %76 = arith.mulf %71, %75 : vector<1x8x8xf32>
      %77 = arith.truncf %76 : vector<1x8x8xf32> to vector<1x8x8xbf16>
      "tpu.trace_start"() <{level = 10 : i32, message = "bqk,bkd->bqd"}> : () -> ()
      %cst_33 = arith.constant dense<0.000000e+00> : vector<1x8x8xf32>
      %78 = tpu.matmul %77, %65, %cst_33 {dimension_numbers = #tpu.dot_dimension_numbers<[2], [1], [1], [2], [0, 0, 0, 1, 1, 2], [0], [0]>} : vector<1x8x8xbf16>, vector<1x8x8xbf16>, vector<1x8x8xf32> -> vector<1x8x8xf32>
      "tpu.trace_stop"() : () -> ()
      %79 = vector.shape_cast %78 : vector<1x8x8xf32> to vector<8x8xf32>
      %80 = arith.truncf %79 : vector<8x8xf32> to vector<8x8xbf16>
      %81 = vector.extract_strided_slice %28 {offsets = [0, 16], sizes = [8, 8], strides = [1, 1]} : vector<8x96xf32> to vector<8x8xf32>
      %cst_34 = arith.constant 0.353553385 : f32
      %82 = vector.broadcast %cst_34 : f32 to vector<8x8xf32>
      %83 = arith.mulf %81, %82 : vector<8x8xf32>
      %84 = vector.shape_cast %83 : vector<8x8xf32> to vector<1x8x8xf32>
      %85 = arith.truncf %84 : vector<1x8x8xf32> to vector<1x8x8xbf16>
      %86 = vector.extract_strided_slice %28 {offsets = [0, 48], sizes = [8, 8], strides = [1, 1]} : vector<8x96xf32> to vector<8x8xf32>
      %87 = vector.shape_cast %86 : vector<8x8xf32> to vector<1x8x8xf32>
      %88 = arith.truncf %87 : vector<1x8x8xf32> to vector<1x8x8xbf16>
      %89 = vector.extract_strided_slice %28 {offsets = [0, 80], sizes = [8, 8], strides = [1, 1]} : vector<8x96xf32> to vector<8x8xf32>
      %90 = vector.shape_cast %89 : vector<8x8xf32> to vector<1x8x8xf32>
      %91 = arith.truncf %90 : vector<1x8x8xf32> to vector<1x8x8xbf16>
      "tpu.trace_start"() <{level = 10 : i32, message = "bqd,bkd->bqk"}> : () -> ()
      %cst_35 = arith.constant dense<0.000000e+00> : vector<1x8x8xf32>
      %92 = tpu.matmul %85, %88, %cst_35 {dimension_numbers = #tpu.dot_dimension_numbers<[2], [2], [1], [1], [0, 0, 0, 1, 1, 1], [0], [0]>} : vector<1x8x8xbf16>, vector<1x8x8xbf16>, vector<1x8x8xf32> -> vector<1x8x8xf32>
      "tpu.trace_stop"() : () -> ()
      %cst_36 = arith.constant dense<0xFF800000> : vector<1x8xf32>
      %93 = vector.multi_reduction <maximumf>, %92, %cst_36 [2] : vector<1x8x8xf32> to vector<1x8xf32>
      %94 = vector.shape_cast %93 : vector<1x8xf32> to vector<1x8x1xf32>
      %95 = vector.broadcast %94 : vector<1x8x1xf32> to vector<1x8x8xf32>
      %96 = arith.subf %92, %95 : vector<1x8x8xf32>
      %97 = math.exp %96 : vector<1x8x8xf32>
      %cst_37 = arith.constant dense<0.000000e+00> : vector<1x8xf32>
      %98 = vector.multi_reduction <add>, %97, %cst_37 [2] : vector<1x8x8xf32> to vector<1x8xf32>
      %99 = vector.shape_cast %98 : vector<1x8xf32> to vector<1x8x1xf32>
      %100 = tpu.reciprocal %99 {approx = true} : vector<1x8x1xf32> -> vector<1x8x1xf32>
      %101 = vector.broadcast %100 : vector<1x8x1xf32> to vector<1x8x8xf32>
      %102 = arith.mulf %97, %101 : vector<1x8x8xf32>
      %103 = arith.truncf %102 : vector<1x8x8xf32> to vector<1x8x8xbf16>
      "tpu.trace_start"() <{level = 10 : i32, message = "bqk,bkd->bqd"}> : () -> ()
      %cst_38 = arith.constant dense<0.000000e+00> : vector<1x8x8xf32>
      %104 = tpu.matmul %103, %91, %cst_38 {dimension_numbers = #tpu.dot_dimension_numbers<[2], [1], [1], [2], [0, 0, 0, 1, 1, 2], [0], [0]>} : vector<1x8x8xbf16>, vector<1x8x8xbf16>, vector<1x8x8xf32> -> vector<1x8x8xf32>
      "tpu.trace_stop"() : () -> ()
      %105 = vector.shape_cast %104 : vector<1x8x8xf32> to vector<8x8xf32>
      %106 = arith.truncf %105 : vector<8x8xf32> to vector<8x8xbf16>
      %107 = vector.extract_strided_slice %28 {offsets = [0, 24], sizes = [8, 8], strides = [1, 1]} : vector<8x96xf32> to vector<8x8xf32>
      %cst_39 = arith.constant 0.353553385 : f32
      %108 = vector.broadcast %cst_39 : f32 to vector<8x8xf32>
      %109 = arith.mulf %107, %108 : vector<8x8xf32>
      %110 = vector.shape_cast %109 : vector<8x8xf32> to vector<1x8x8xf32>
      %111 = arith.truncf %110 : vector<1x8x8xf32> to vector<1x8x8xbf16>
      %112 = vector.extract_strided_slice %28 {offsets = [0, 56], sizes = [8, 8], strides = [1, 1]} : vector<8x96xf32> to vector<8x8xf32>
      %113 = vector.shape_cast %112 : vector<8x8xf32> to vector<1x8x8xf32>
      %114 = arith.truncf %113 : vector<1x8x8xf32> to vector<1x8x8xbf16>
      %115 = vector.extract_strided_slice %28 {offsets = [0, 88], sizes = [8, 8], strides = [1, 1]} : vector<8x96xf32> to vector<8x8xf32>
      %116 = vector.shape_cast %115 : vector<8x8xf32> to vector<1x8x8xf32>
      %117 = arith.truncf %116 : vector<1x8x8xf32> to vector<1x8x8xbf16>
      "tpu.trace_start"() <{level = 10 : i32, message = "bqd,bkd->bqk"}> : () -> ()
      %cst_40 = arith.constant dense<0.000000e+00> : vector<1x8x8xf32>
      %118 = tpu.matmul %111, %114, %cst_40 {dimension_numbers = #tpu.dot_dimension_numbers<[2], [2], [1], [1], [0, 0, 0, 1, 1, 1], [0], [0]>} : vector<1x8x8xbf16>, vector<1x8x8xbf16>, vector<1x8x8xf32> -> vector<1x8x8xf32>
      "tpu.trace_stop"() : () -> ()
      %cst_41 = arith.constant dense<0xFF800000> : vector<1x8xf32>
      %119 = vector.multi_reduction <maximumf>, %118, %cst_41 [2] : vector<1x8x8xf32> to vector<1x8xf32>
      %120 = vector.shape_cast %119 : vector<1x8xf32> to vector<1x8x1xf32>
      %121 = vector.broadcast %120 : vector<1x8x1xf32> to vector<1x8x8xf32>
      %122 = arith.subf %118, %121 : vector<1x8x8xf32>
      %123 = math.exp %122 : vector<1x8x8xf32>
      %cst_42 = arith.constant dense<0.000000e+00> : vector<1x8xf32>
      %124 = vector.multi_reduction <add>, %123, %cst_42 [2] : vector<1x8x8xf32> to vector<1x8xf32>
      %125 = vector.shape_cast %124 : vector<1x8xf32> to vector<1x8x1xf32>
      %126 = tpu.reciprocal %125 {approx = true} : vector<1x8x1xf32> -> vector<1x8x1xf32>
      %127 = vector.broadcast %126 : vector<1x8x1xf32> to vector<1x8x8xf32>
      %128 = arith.mulf %123, %127 : vector<1x8x8xf32>
      %129 = arith.truncf %128 : vector<1x8x8xf32> to vector<1x8x8xbf16>
      "tpu.trace_start"() <{level = 10 : i32, message = "bqk,bkd->bqd"}> : () -> ()
      %cst_43 = arith.constant dense<0.000000e+00> : vector<1x8x8xf32>
      %130 = tpu.matmul %129, %117, %cst_43 {dimension_numbers = #tpu.dot_dimension_numbers<[2], [1], [1], [2], [0, 0, 0, 1, 1, 2], [0], [0]>} : vector<1x8x8xbf16>, vector<1x8x8xbf16>, vector<1x8x8xf32> -> vector<1x8x8xf32>
      "tpu.trace_stop"() : () -> ()
      %131 = vector.shape_cast %130 : vector<1x8x8xf32> to vector<8x8xf32>
      %132 = arith.truncf %131 : vector<8x8xf32> to vector<8x8xbf16>
      %133 = tpu.concatenate %54, %80, %106, %132 in 1 : vector<8x8xbf16>, vector<8x8xbf16>, vector<8x8xbf16>, vector<8x8xbf16> -> vector<8x32xbf16>
      %c0_44 = arith.constant 0 : index
      %c0_45 = arith.constant 0 : index
      %134 = vector.load %arg5[%c0_44, %c0_45] : memref<32x32xbf16, #tpu.memory_space<vmem>>, vector<32x32xbf16>
      %cst_46 = arith.constant dense<0.000000e+00> : vector<8x32xf32>
      %135 = tpu.matmul %133, %134, %cst_46 {dimension_numbers = #tpu.dot_dimension_numbers<[1], [0], [0], [1], [0, 0, 1, 1], [], []>} : vector<8x32xbf16>, vector<32x32xbf16>, vector<8x32xf32> -> vector<8x32xf32>
      %c0_47 = arith.constant 0 : index
      %c0_48 = arith.constant 0 : index
      %136 = vector.load %arg6[%c0_47, %c0_48] : memref<1x32xf32, #tpu.memory_space<vmem>>, vector<1x32xf32>
      %137 = vector.broadcast %136 : vector<1x32xf32> to vector<8x32xf32>
      %138 = arith.addf %135, %137 : vector<8x32xf32>
      %139 = arith.addf %22, %138 : vector<8x32xf32>
      %cst_49 = arith.constant dense<0.000000e+00> : vector<8xf32>
      %140 = vector.multi_reduction <add>, %139, %cst_49 [1] : vector<8x32xf32> to vector<8xf32>
      %141 = vector.shape_cast %140 : vector<8xf32> to vector<8x1xf32>
      %cst_50 = arith.constant 3.200000e+01 : f32
      %142 = vector.broadcast %cst_50 : f32 to vector<8x1xf32>
      %143 = arith.divf %141, %142 : vector<8x1xf32>
      %144 = vector.broadcast %143 : vector<8x1xf32> to vector<8x32xf32>
      %145 = arith.subf %139, %144 : vector<8x32xf32>
      %146 = arith.mulf %145, %145 : vector<8x32xf32>
      %cst_51 = arith.constant dense<0.000000e+00> : vector<8xf32>
      %147 = vector.multi_reduction <add>, %146, %cst_51 [1] : vector<8x32xf32> to vector<8xf32>
      %148 = vector.shape_cast %147 : vector<8xf32> to vector<8x1xf32>
      %cst_52 = arith.constant 3.200000e+01 : f32
      %149 = vector.broadcast %cst_52 : f32 to vector<8x1xf32>
      %150 = arith.divf %148, %149 : vector<8x1xf32>
      %151 = vector.broadcast %143 : vector<8x1xf32> to vector<8x32xf32>
      %152 = arith.subf %139, %151 : vector<8x32xf32>
      %cst_53 = arith.constant 9.99999974E-6 : f32
      %153 = vector.broadcast %cst_53 : f32 to vector<8x1xf32>
      %154 = arith.addf %150, %153 : vector<8x1xf32>
      %155 = math.rsqrt %154 : vector<8x1xf32>
      %156 = vector.broadcast %155 : vector<8x1xf32> to vector<8x32xf32>
      %157 = arith.mulf %152, %156 : vector<8x32xf32>
      %c0_54 = arith.constant 0 : index
      %c0_55 = arith.constant 0 : index
      %158 = vector.load %arg7[%c0_54, %c0_55] : memref<1x32xf32, #tpu.memory_space<vmem>>, vector<1x32xf32>
      %159 = vector.broadcast %158 : vector<1x32xf32> to vector<8x32xf32>
      %160 = arith.mulf %157, %159 : vector<8x32xf32>
      %c0_56 = arith.constant 0 : index
      %c0_57 = arith.constant 0 : index
      %161 = vector.load %arg8[%c0_56, %c0_57] : memref<1x32xf32, #tpu.memory_space<vmem>>, vector<1x32xf32>
      %162 = vector.broadcast %161 : vector<1x32xf32> to vector<8x32xf32>
      %163 = arith.addf %160, %162 : vector<8x32xf32>
      %c0_58 = arith.constant 0 : index
      %c0_59 = arith.constant 0 : index
      %164 = vector.load %arg16[%c0_58, %c0_59] : memref<8x32xf32, #tpu.memory_space<vmem>>, vector<8x32xf32>
      tpu.vector_store %arg16[%c0_58, %c0_59], %163 {strides = array<i32>} : memref<8x32xf32, #tpu.memory_space<vmem>>, vector<8x32xf32>,
      %cst_60 = arith.constant 0.000000e+00 : f32
      %165 = vector.broadcast %cst_60 : f32 to vector<8x32xf32>
      %c0_61 = arith.constant 0 : index
      %c0_62 = arith.constant 0 : index
      %166 = vector.load %arg17[%c0_61, %c0_62] : memref<8x32xf32, #tpu.memory_space<vmem>>, vector<8x32xf32>
      tpu.vector_store %arg17[%c0_61, %c0_62], %165 {strides = array<i32>} : memref<8x32xf32, #tpu.memory_space<vmem>>, vector<8x32xf32>,
    } else {
    }
    %c0 = arith.constant 0 : index
    %c0_1 = arith.constant 0 : index
    %3 = vector.load %arg16[%c0, %c0_1] : memref<8x32xf32, #tpu.memory_space<vmem>>, vector<8x32xf32>
    %4 = arith.truncf %3 : vector<8x32xf32> to vector<8x32xbf16>
    %c0_2 = arith.constant 0 : index
    %c0_3 = arith.constant 0 : index
    %5 = vector.load %arg9[%c0_2, %c0_3] : memref<32x64xbf16, #tpu.memory_space<vmem>>, vector<32x64xbf16>
    %cst = arith.constant dense<0.000000e+00> : vector<8x64xf32>
    %6 = tpu.matmul %4, %5, %cst {dimension_numbers = #tpu.dot_dimension_numbers<[1], [0], [0], [1], [0, 0, 1, 1], [], []>} : vector<8x32xbf16>, vector<32x64xbf16>, vector<8x64xf32> -> vector<8x64xf32>
    %c0_4 = arith.constant 0 : index
    %c0_5 = arith.constant 0 : index
    %7 = vector.load %arg10[%c0_4, %c0_5] : memref<1x64xf32, #tpu.memory_space<vmem>>, vector<1x64xf32>
    %8 = vector.broadcast %7 : vector<1x64xf32> to vector<8x64xf32>
    %9 = arith.addf %6, %8 : vector<8x64xf32>
    %cst_6 = arith.constant 0.000000e+00 : f32
    %10 = vector.broadcast %cst_6 : f32 to vector<8x64xf32>
    %11 = arith.maximumf %9, %10 : vector<8x64xf32>
    %c0_7 = arith.constant 0 : index
    %c0_8 = arith.constant 0 : index
    %12 = vector.load %arg17[%c0_7, %c0_8] : memref<8x32xf32, #tpu.memory_space<vmem>>, vector<8x32xf32>
    %13 = arith.truncf %11 : vector<8x64xf32> to vector<8x64xbf16>
    %c0_9 = arith.constant 0 : index
    %c0_10 = arith.constant 0 : index
    %14 = vector.load %arg11[%c0_9, %c0_10] : memref<64x32xbf16, #tpu.memory_space<vmem>>, vector<64x32xbf16>
    %cst_11 = arith.constant dense<0.000000e+00> : vector<8x32xf32>
    %15 = tpu.matmul %13, %14, %cst_11 {dimension_numbers = #tpu.dot_dimension_numbers<[1], [0], [0], [1], [0, 0, 1, 1], [], []>} : vector<8x64xbf16>, vector<64x32xbf16>, vector<8x32xf32> -> vector<8x32xf32>
    %16 = arith.addf %12, %15 : vector<8x32xf32>
    %c0_12 = arith.constant 0 : index
    %c0_13 = arith.constant 0 : index
    %17 = vector.load %arg17[%c0_12, %c0_13] : memref<8x32xf32, #tpu.memory_space<vmem>>, vector<8x32xf32>
    tpu.vector_store %arg17[%c0_12, %c0_13], %16 {strides = array<i32>} : memref<8x32xf32, #tpu.memory_space<vmem>>, vector<8x32xf32>,
    %c0_i32_14 = arith.constant 0 : i32
    %18 = arith.cmpi eq, %arg1, %c0_i32_14 : i32
    %19 = arith.extui %18 : i1 to i32
    %c0_i32_15 = arith.constant 0 : i32
    %20 = arith.cmpi ne, %19, %c0_i32_15 : i32
    scf.if %20 {
      %c0_16 = arith.constant 0 : index
      %c0_17 = arith.constant 0 : index
      %21 = vector.load %arg16[%c0_16, %c0_17] : memref<8x32xf32, #tpu.memory_space<vmem>>, vector<8x32xf32>
      %c0_18 = arith.constant 0 : index
      %c0_19 = arith.constant 0 : index
      %22 = vector.load %arg17[%c0_18, %c0_19] : memref<8x32xf32, #tpu.memory_space<vmem>>, vector<8x32xf32>
      %23 = arith.addf %21, %22 : vector<8x32xf32>
      %c0_20 = arith.constant 0 : index
      %c0_21 = arith.constant 0 : index
      %24 = vector.load %arg12[%c0_20, %c0_21] : memref<1x32xf32, #tpu.memory_space<vmem>>, vector<1x32xf32>
      %25 = vector.broadcast %24 : vector<1x32xf32> to vector<8x32xf32>
      %26 = arith.addf %23, %25 : vector<8x32xf32>
      %cst_22 = arith.constant dense<0.000000e+00> : vector<8xf32>
      %27 = vector.multi_reduction <add>, %26, %cst_22 [1] : vector<8x32xf32> to vector<8xf32>
      %28 = vector.shape_cast %27 : vector<8xf32> to vector<8x1xf32>
      %cst_23 = arith.constant 3.200000e+01 : f32
      %29 = vector.broadcast %cst_23 : f32 to vector<8x1xf32>
      %30 = arith.divf %28, %29 : vector<8x1xf32>
      %31 = vector.broadcast %30 : vector<8x1xf32> to vector<8x32xf32>
      %32 = arith.subf %26, %31 : vector<8x32xf32>
      %33 = arith.mulf %32, %32 : vector<8x32xf32>
      %cst_24 = arith.constant dense<0.000000e+00> : vector<8xf32>
      %34 = vector.multi_reduction <add>, %33, %cst_24 [1] : vector<8x32xf32> to vector<8xf32>
      %35 = vector.shape_cast %34 : vector<8xf32> to vector<8x1xf32>
      %cst_25 = arith.constant 3.200000e+01 : f32
      %36 = vector.broadcast %cst_25 : f32 to vector<8x1xf32>
      %37 = arith.divf %35, %36 : vector<8x1xf32>
      %38 = vector.broadcast %30 : vector<8x1xf32> to vector<8x32xf32>
      %39 = arith.subf %26, %38 : vector<8x32xf32>
      %cst_26 = arith.constant 9.99999974E-6 : f32
      %40 = vector.broadcast %cst_26 : f32 to vector<8x1xf32>
      %41 = arith.addf %37, %40 : vector<8x1xf32>
      %42 = math.rsqrt %41 : vector<8x1xf32>
      %43 = vector.broadcast %42 : vector<8x1xf32> to vector<8x32xf32>
      %44 = arith.mulf %39, %43 : vector<8x32xf32>
      %c0_27 = arith.constant 0 : index
      %c0_28 = arith.constant 0 : index
      %45 = vector.load %arg13[%c0_27, %c0_28] : memref<1x32xf32, #tpu.memory_space<vmem>>, vector<1x32xf32>
      %46 = vector.broadcast %45 : vector<1x32xf32> to vector<8x32xf32>
      %47 = arith.mulf %44, %46 : vector<8x32xf32>
      %c0_29 = arith.constant 0 : index
      %c0_30 = arith.constant 0 : index
      %48 = vector.load %arg14[%c0_29, %c0_30] : memref<1x32xf32, #tpu.memory_space<vmem>>, vector<1x32xf32>
      %49 = vector.broadcast %48 : vector<1x32xf32> to vector<8x32xf32>
      %50 = arith.addf %47, %49 : vector<8x32xf32>
      %51 = vector.shape_cast %50 : vector<8x32xf32> to vector<1x8x32xf32>
      %c0_31 = arith.constant 0 : index
      %c0_32 = arith.constant 0 : index
      %c0_33 = arith.constant 0 : index
      %52 = vector.load %arg15[%c0_31, %c0_32, %c0_33] : memref<1x8x32xf32, #tpu.memory_space<vmem>>, vector<1x8x32xf32>
      tpu.vector_store %arg15[%c0_31, %c0_32, %c0_33], %51 {strides = array<i32>} : memref<1x8x32xf32, #tpu.memory_space<vmem>>, vector<1x8x32xf32>,
    } else {
    }
    return
  }
  func.func @transform_0(%arg0: i32, %arg1: i32) -> (i32, i32, i32) {
    %c0_i32 = arith.constant 0 : i32
    %c0_i32_0 = arith.constant 0 : i32
    %c0_i32_1 = arith.constant 0 : i32
    return %arg0, %c0_i32, %c0_i32_0 : i32, i32, i32
  }
  func.func @transform_1(%arg0: i32, %arg1: i32) -> (i32, i32) {
    %c0_i32 = arith.constant 0 : i32
    %c0_i32_0 = arith.constant 0 : i32
    %c0_i32_1 = arith.constant 0 : i32
    return %c0_i32, %c0_i32_0 : i32, i32
  }
  func.func @transform_2(%arg0: i32, %arg1: i32) -> (i32, i32) {
    %c0_i32 = arith.constant 0 : i32
    %c0_i32_0 = arith.constant 0 : i32
    %c0_i32_1 = arith.constant 0 : i32
    return %c0_i32, %c0_i32_0 : i32, i32
  }
  func.func @transform_3(%arg0: i32, %arg1: i32) -> (i32, i32) {
    %c0_i32 = arith.constant 0 : i32
    %c0_i32_0 = arith.constant 0 : i32
    %c0_i32_1 = arith.constant 0 : i32
    return %c0_i32, %c0_i32_0 : i32, i32
  }
  func.func @transform_4(%arg0: i32, %arg1: i32) -> (i32, i32) {
    %c0_i32 = arith.constant 0 : i32
    %c0_i32_0 = arith.constant 0 : i32
    %c0_i32_1 = arith.constant 0 : i32
    return %c0_i32, %c0_i32_0 : i32, i32
  }
  func.func @transform_5(%arg0: i32, %arg1: i32) -> (i32, i32) {
    %c0_i32 = arith.constant 0 : i32
    %c0_i32_0 = arith.constant 0 : i32
    %c0_i32_1 = arith.constant 0 : i32
    return %c0_i32, %c0_i32_0 : i32, i32
  }
  func.func @transform_6(%arg0: i32, %arg1: i32) -> (i32, i32) {
    %c0_i32 = arith.constant 0 : i32
    %c0_i32_0 = arith.constant 0 : i32
    %c0_i32_1 = arith.constant 0 : i32
    return %c0_i32, %c0_i32_0 : i32, i32
  }
  func.func @transform_7(%arg0: i32, %arg1: i32) -> (i32, i32) {
    %c0_i32 = arith.constant 0 : i32
    %c0_i32_0 = arith.constant 0 : i32
    return %c0_i32, %arg1 : i32, i32
  }
  func.func @transform_8(%arg0: i32, %arg1: i32) -> (i32, i32) {
    %c0_i32 = arith.constant 0 : i32
    %c0_i32_0 = arith.constant 0 : i32
    return %c0_i32, %arg1 : i32, i32
  }
  func.func @transform_9(%arg0: i32, %arg1: i32) -> (i32, i32) {
    %c0_i32 = arith.constant 0 : i32
    %c0_i32_0 = arith.constant 0 : i32
    return %arg1, %c0_i32 : i32, i32
  }
  func.func @transform_10(%arg0: i32, %arg1: i32) -> (i32, i32) {
    %c0_i32 = arith.constant 0 : i32
    %c0_i32_0 = arith.constant 0 : i32
    %c0_i32_1 = arith.constant 0 : i32
    return %c0_i32, %c0_i32_0 : i32, i32
  }
  func.func @transform_11(%arg0: i32, %arg1: i32) -> (i32, i32) {
    %c0_i32 = arith.constant 0 : i32
    %c0_i32_0 = arith.constant 0 : i32
    %c0_i32_1 = arith.constant 0 : i32
    return %c0_i32, %c0_i32_0 : i32, i32
  }
  func.func @transform_12(%arg0: i32, %arg1: i32) -> (i32, i32) {
    %c0_i32 = arith.constant 0 : i32
    %c0_i32_0 = arith.constant 0 : i32
    %c0_i32_1 = arith.constant 0 : i32
    return %c0_i32, %c0_i32_0 : i32, i32
  }
  func.func @transform_13(%arg0: i32, %arg1: i32) -> (i32, i32, i32) {
    %c0_i32 = arith.constant 0 : i32
    %c0_i32_0 = arith.constant 0 : i32
    %c0_i32_1 = arith.constant 0 : i32
    return %arg0, %c0_i32, %c0_i32_0 : i32, i32, i32
  }
}

module attributes {stable_mosaic.version = 11 : i64} {
  func.func @kernel(%arg0: i32, %arg1: i32, %arg2: memref<1x8x32xf32, #tpu.memory_space<vmem>>, %arg3: memref<32x96xbf16, #tpu.memory_space<vmem>>, %arg4: memref<1x96xf32, #tpu.memory_space<vmem>>, %arg5: memref<32x32xbf16, #tpu.memory_space<vmem>>, %arg6: memref<1x32xf32, #tpu.memory_space<vmem>>, %arg7: memref<1x32xf32, #tpu.memory_space<vmem>>, %arg8: memref<1x32xf32, #tpu.memory_space<vmem>>, %arg9: memref<32x64xbf16, #tpu.memory_space<vmem>>, %arg10: memref<1x64xf32, #tpu.memory_space<vmem>>, %arg11: memref<64x32xbf16, #tpu.memory_space<vmem>>, %arg12: memref<1x32xf32, #tpu.memory_space<vmem>>, %arg13: memref<1x32xf32, #tpu.memory_space<vmem>>, %arg14: memref<1x32xf32, #tpu.memory_space<vmem>>, %arg15: memref<1x8x32xf32, #tpu.memory_space<vmem>>, %arg16: memref<8x32xf32, #tpu.memory_space<vmem>>, %arg17: memref<8x32xf32, #tpu.memory_space<vmem>>) attributes {dimension_semantics = [#tpu.dimension_semantics<parallel>, #tpu.dimension_semantics<arbitrary>], iteration_bounds = array<i64: 2, 1>, scalar_prefetch = 0 : i64, scratch_operands = 2 : i64, tpu.core_type = #tpu.core_type<tc>, window_params = [{transform_indices = @transform_0, window_bounds = array<i64: 1, 8, 32>}, {pipeline_mode = #tpu.pipeline_mode<synchronous>, transform_indices = @transform_1, window_bounds = array<i64: 32, 96>}, {pipeline_mode = #tpu.pipeline_mode<synchronous>, transform_indices = @transform_2, window_bounds = array<i64: 1, 96>}, {pipeline_mode = #tpu.pipeline_mode<synchronous>, transform_indices = @transform_3, window_bounds = array<i64: 32, 32>}, {pipeline_mode = #tpu.pipeline_mode<synchronous>, transform_indices = @transform_4, window_bounds = array<i64: 1, 32>}, {pipeline_mode = #tpu.pipeline_mode<synchronous>, transform_indices = @transform_5, window_bounds = array<i64: 1, 32>}, {pipeline_mode = #tpu.pipeline_mode<synchronous>, transform_indices = @transform_6, window_bounds = array<i64: 1, 32>}, {transform_indices = @transform_7, window_bounds = array<i64: 32, 64>}, {transform_indices = @transform_8, window_bounds = array<i64: 1, 64>}, {transform_indices = @transform_9, window_bounds = array<i64: 64, 32>}, {pipeline_mode = #tpu.pipeline_mode<synchronous>, transform_indices = @transform_10, window_bounds = array<i64: 1, 32>}, {pipeline_mode = #tpu.pipeline_mode<synchronous>, transform_indices = @transform_11, window_bounds = array<i64: 1, 32>}, {pipeline_mode = #tpu.pipeline_mode<synchronous>, transform_indices = @transform_12, window_bounds = array<i64: 1, 32>}, {transform_indices = @transform_13, window_bounds = array<i64: 1, 8, 32>}]} {
    %c0_i32 = arith.constant 0 : i32
    %0 = arith.cmpi eq, %arg1, %c0_i32 : i32
    %1 = arith.extui %0 : i1 to i32
    %c0_i32_0 = arith.constant 0 : i32
    %2 = arith.cmpi ne, %1, %c0_i32_0 : i32
    scf.if %2 {
      %c0_16 = arith.constant 0 : index
      %c0_17 = arith.constant 0 : index
      %c0_18 = arith.constant 0 : index
      %21 = vector.load %arg2[%c0_16, %c0_17, %c0_18] : memref<1x8x32xf32, #tpu.memory_space<vmem>>, vector<1x8x32xf32>
      %22 = vector.shape_cast %21 : vector<1x8x32xf32> to vector<8x32xf32>
      %23 = arith.truncf %22 : vector<8x32xf32> to vector<8x32xbf16>
      %c0_19 = arith.constant 0 : index
      %c0_20 = arith.constant 0 : index
      %24 = vector.load %arg3[%c0_19, %c0_20] : memref<32x96xbf16, #tpu.memory_space<vmem>>, vector<32x96xbf16>
      %cst_21 = arith.constant dense<0.000000e+00> : vector<8x96xf32>
      %25 = tpu.matmul %23, %24, %cst_21 {dimension_numbers = #tpu.dot_dimension_numbers<[1], [0], [0], [1], [0, 0, 1, 1], [], []>} : vector<8x32xbf16>, vector<32x96xbf16>, vector<8x96xf32> -> vector<8x96xf32>
      %c0_22 = arith.constant 0 : index
      %c0_23 = arith.constant 0 : index
      %26 = vector.load %arg4[%c0_22, %c0_23] : memref<1x96xf32, #tpu.memory_space<vmem>>, vector<1x96xf32>
      %27 = vector.broadcast %26 : vector<1x96xf32> to vector<8x96xf32>
      %28 = arith.addf %25, %27 : vector<8x96xf32>
      %29 = vector.extract_strided_slice %28 {offsets = [0, 0], sizes = [8, 8], strides = [1, 1]} : vector<8x96xf32> to vector<8x8xf32>
      %cst_24 = arith.constant 0.353553385 : f32
      %30 = vector.broadcast %cst_24 : f32 to vector<8x8xf32>
      %31 = arith.mulf %29, %30 : vector<8x8xf32>
      %32 = vector.shape_cast %31 : vector<8x8xf32> to vector<1x8x8xf32>
      %33 = arith.truncf %32 : vector<1x8x8xf32> to vector<1x8x8xbf16>
      %34 = vector.extract_strided_slice %28 {offsets = [0, 32], sizes = [8, 8], strides = [1, 1]} : vector<8x96xf32> to vector<8x8xf32>
      %35 = vector.shape_cast %34 : vector<8x8xf32> to vector<1x8x8xf32>
      %36 = arith.truncf %35 : vector<1x8x8xf32> to vector<1x8x8xbf16>
      %37 = vector.extract_strided_slice %28 {offsets = [0, 64], sizes = [8, 8], strides = [1, 1]} : vector<8x96xf32> to vector<8x8xf32>
      %38 = vector.shape_cast %37 : vector<8x8xf32> to vector<1x8x8xf32>
      %39 = arith.truncf %38 : vector<1x8x8xf32> to vector<1x8x8xbf16>
      "tpu.trace_start"() <{level = 10 : i32, message = "bqd,bkd->bqk"}> : () -> ()
      %cst_25 = arith.constant dense<0.000000e+00> : vector<1x8x8xf32>
      %40 = tpu.matmul %33, %36, %cst_25 {dimension_numbers = #tpu.dot_dimension_numbers<[2], [2], [1], [1], [0, 0, 0, 1, 1, 1], [0], [0]>} : vector<1x8x8xbf16>, vector<1x8x8xbf16>, vector<1x8x8xf32> -> vector<1x8x8xf32>
      "tpu.trace_stop"() : () -> ()
      %cst_26 = arith.constant dense<0xFF800000> : vector<1x8xf32>
      %41 = vector.multi_reduction <maximumf>, %40, %cst_26 [2] : vector<1x8x8xf32> to vector<1x8xf32>
      %42 = vector.shape_cast %41 : vector<1x8xf32> to vector<1x8x1xf32>
      %43 = vector.broadcast %42 : vector<1x8x1xf32> to vector<1x8x8xf32>
      %44 = arith.subf %40, %43 : vector<1x8x8xf32>
      %45 = math.exp %44 : vector<1x8x8xf32>
      %cst_27 = arith.constant dense<0.000000e+00> : vector<1x8xf32>
      %46 = vector.multi_reduction <add>, %45, %cst_27 [2] : vector<1x8x8xf32> to vector<1x8xf32>
      %47 = vector.shape_cast %46 : vector<1x8xf32> to vector<1x8x1xf32>
      %48 = tpu.reciprocal %47 {approx = true} : vector<1x8x1xf32> -> vector<1x8x1xf32>
      %49 = vector.broadcast %48 : vector<1x8x1xf32> to vector<1x8x8xf32>
      %50 = arith.mulf %45, %49 : vector<1x8x8xf32>
      %51 = arith.truncf %50 : vector<1x8x8xf32> to vector<1x8x8xbf16>
      "tpu.trace_start"() <{level = 10 : i32, message = "bqk,bkd->bqd"}> : () -> ()
      %cst_28 = arith.constant dense<0.000000e+00> : vector<1x8x8xf32>
      %52 = tpu.matmul %51, %39, %cst_28 {dimension_numbers = #tpu.dot_dimension_numbers<[2], [1], [1], [2], [0, 0, 0, 1, 1, 2], [0], [0]>} : vector<1x8x8xbf16>, vector<1x8x8xbf16>, vector<1x8x8xf32> -> vector<1x8x8xf32>
      "tpu.trace_stop"() : () -> ()
      %53 = vector.shape_cast %52 : vector<1x8x8xf32> to vector<8x8xf32>
      %54 = arith.truncf %53 : vector<8x8xf32> to vector<8x8xbf16>
      %55 = vector.extract_strided_slice %28 {offsets = [0, 8], sizes = [8, 8], strides = [1, 1]} : vector<8x96xf32> to vector<8x8xf32>
      %cst_29 = arith.constant 0.353553385 : f32
      %56 = vector.broadcast %cst_29 : f32 to vector<8x8xf32>
      %57 = arith.mulf %55, %56 : vector<8x8xf32>
      %58 = vector.shape_cast %57 : vector<8x8xf32> to vector<1x8x8xf32>
      %59 = arith.truncf %58 : vector<1x8x8xf32> to vector<1x8x8xbf16>
      %60 = vector.extract_strided_slice %28 {offsets = [0, 40], sizes = [8, 8], strides = [1, 1]} : vector<8x96xf32> to vector<8x8xf32>
      %61 = vector.shape_cast %60 : vector<8x8xf32> to vector<1x8x8xf32>
      %62 = arith.truncf %61 : vector<1x8x8xf32> to vector<1x8x8xbf16>
      %63 = vector.extract_strided_slice %28 {offsets = [0, 72], sizes = [8, 8], strides = [1, 1]} : vector<8x96xf32> to vector<8x8xf32>
      %64 = vector.shape_cast %63 : vector<8x8xf32> to vector<1x8x8xf32>
      %65 = arith.truncf %64 : vector<1x8x8xf32> to vector<1x8x8xbf16>
      "tpu.trace_start"() <{level = 10 : i32, message = "bqd,bkd->bqk"}> : () -> ()
      %cst_30 = arith.constant dense<0.000000e+00> : vector<1x8x8xf32>
      %66 = tpu.matmul %59, %62, %cst_30 {dimension_numbers = #tpu.dot_dimension_numbers<[2], [2], [1], [1], [0, 0, 0, 1, 1, 1], [0], [0]>} : vector<1x8x8xbf16>, vector<1x8x8xbf16>, vector<1x8x8xf32> -> vector<1x8x8xf32>
      "tpu.trace_stop"() : () -> ()
      %cst_31 = arith.constant dense<0xFF800000> : vector<1x8xf32>
      %67 = vector.multi_reduction <maximumf>, %66, %cst_31 [2] : vector<1x8x8xf32> to vector<1x8xf32>
      %68 = vector.shape_cast %67 : vector<1x8xf32> to vector<1x8x1xf32>
      %69 = vector.broadcast %68 : vector<1x8x1xf32> to vector<1x8x8xf32>
      %70 = arith.subf %66, %69 : vector<1x8x8xf32>
      %71 = math.exp %70 : vector<1x8x8xf32>
      %cst_32 = arith.constant dense<0.000000e+00> : vector<1x8xf32>
      %72 = vector.multi_reduction <add>, %71, %cst_32 [2] : vector<1x8x8xf32> to vector<1x8xf32>
      %73 = vector.shape_cast %72 : vector<1x8xf32> to vector<1x8x1xf32>
      %74 = tpu.reciprocal %73 {approx = true} : vector<1x8x1xf32> -> vector<1x8x1xf32>
      %75 = vector.broadcast %74 : vector<1x8x1xf32> to vector<1x8x8xf32>
      %76 = arith.mulf %71, %75 : vector<1x8x8xf32>
      %77 = arith.truncf %76 : vector<1x8x8xf32> to vector<1x8x8xbf16>
      "tpu.trace_start"() <{level = 10 : i32, message = "bqk,bkd->bqd"}> : () -> ()
      %cst_33 = arith.constant dense<0.000000e+00> : vector<1x8x8xf32>
      %78 = tpu.matmul %77, %65, %cst_33 {dimension_numbers = #tpu.dot_dimension_numbers<[2], [1], [1], [2], [0, 0, 0, 1, 1, 2], [0], [0]>} : vector<1x8x8xbf16>, vector<1x8x8xbf16>, vector<1x8x8xf32> -> vector<1x8x8xf32>
      "tpu.trace_stop"() : () -> ()
      %79 = vector.shape_cast %78 : vector<1x8x8xf32> to vector<8x8xf32>
      %80 = arith.truncf %79 : vector<8x8xf32> to vector<8x8xbf16>
      %81 = vector.extract_strided_slice %28 {offsets = [0, 16], sizes = [8, 8], strides = [1, 1]} : vector<8x96xf32> to vector<8x8xf32>
      %cst_34 = arith.constant 0.353553385 : f32
      %82 = vector.broadcast %cst_34 : f32 to vector<8x8xf32>
      %83 = arith.mulf %81, %82 : vector<8x8xf32>
      %84 = vector.shape_cast %83 : vector<8x8xf32> to vector<1x8x8xf32>
      %85 = arith.truncf %84 : vector<1x8x8xf32> to vector<1x8x8xbf16>
      %86 = vector.extract_strided_slice %28 {offsets = [0, 48], sizes = [8, 8], strides = [1, 1]} : vector<8x96xf32> to vector<8x8xf32>
      %87 = vector.shape_cast %86 : vector<8x8xf32> to vector<1x8x8xf32>
      %88 = arith.truncf %87 : vector<1x8x8xf32> to vector<1x8x8xbf16>
      %89 = vector.extract_strided_slice %28 {offsets = [0, 80], sizes = [8, 8], strides = [1, 1]} : vector<8x96xf32> to vector<8x8xf32>
      %90 = vector.shape_cast %89 : vector<8x8xf32> to vector<1x8x8xf32>
      %91 = arith.truncf %90 : vector<1x8x8xf32> to vector<1x8x8xbf16>
      "tpu.trace_start"() <{level = 10 : i32, message = "bqd,bkd->bqk"}> : () -> ()
      %cst_35 = arith.constant dense<0.000000e+00> : vector<1x8x8xf32>
      %92 = tpu.matmul %85, %88, %cst_35 {dimension_numbers = #tpu.dot_dimension_numbers<[2], [2], [1], [1], [0, 0, 0, 1, 1, 1], [0], [0]>} : vector<1x8x8xbf16>, vector<1x8x8xbf16>, vector<1x8x8xf32> -> vector<1x8x8xf32>
      "tpu.trace_stop"() : () -> ()
      %cst_36 = arith.constant dense<0xFF800000> : vector<1x8xf32>
      %93 = vector.multi_reduction <maximumf>, %92, %cst_36 [2] : vector<1x8x8xf32> to vector<1x8xf32>
      %94 = vector.shape_cast %93 : vector<1x8xf32> to vector<1x8x1xf32>
      %95 = vector.broadcast %94 : vector<1x8x1xf32> to vector<1x8x8xf32>
      %96 = arith.subf %92, %95 : vector<1x8x8xf32>
      %97 = math.exp %96 : vector<1x8x8xf32>
      %cst_37 = arith.constant dense<0.000000e+00> : vector<1x8xf32>
      %98 = vector.multi_reduction <add>, %97, %cst_37 [2] : vector<1x8x8xf32> to vector<1x8xf32>
      %99 = vector.shape_cast %98 : vector<1x8xf32> to vector<1x8x1xf32>
      %100 = tpu.reciprocal %99 {approx = true} : vector<1x8x1xf32> -> vector<1x8x1xf32>
      %101 = vector.broadcast %100 : vector<1x8x1xf32> to vector<1x8x8xf32>
      %102 = arith.mulf %97, %101 : vector<1x8x8xf32>
      %103 = arith.truncf %102 : vector<1x8x8xf32> to vector<1x8x8xbf16>
      "tpu.trace_start"() <{level = 10 : i32, message = "bqk,bkd->bqd"}> : () -> ()
      %cst_38 = arith.constant dense<0.000000e+00> : vector<1x8x8xf32>
      %104 = tpu.matmul %103, %91, %cst_38 {dimension_numbers = #tpu.dot_dimension_numbers<[2], [1], [1], [2], [0, 0, 0, 1, 1, 2], [0], [0]>} : vector<1x8x8xbf16>, vector<1x8x8xbf16>, vector<1x8x8xf32> -> vector<1x8x8xf32>
      "tpu.trace_stop"() : () -> ()
      %105 = vector.shape_cast %104 : vector<1x8x8xf32> to vector<8x8xf32>
      %106 = arith.truncf %105 : vector<8x8xf32> to vector<8x8xbf16>
      %107 = vector.extract_strided_slice %28 {offsets = [0, 24], sizes = [8, 8], strides = [1, 1]} : vector<8x96xf32> to vector<8x8xf32>
      %cst_39 = arith.constant 0.353553385 : f32
      %108 = vector.broadcast %cst_39 : f32 to vector<8x8xf32>
      %109 = arith.mulf %107, %108 : vector<8x8xf32>
      %110 = vector.shape_cast %109 : vector<8x8xf32> to vector<1x8x8xf32>
      %111 = arith.truncf %110 : vector<1x8x8xf32> to vector<1x8x8xbf16>
      %112 = vector.extract_strided_slice %28 {offsets = [0, 56], sizes = [8, 8], strides = [1, 1]} : vector<8x96xf32> to vector<8x8xf32>
      %113 = vector.shape_cast %112 : vector<8x8xf32> to vector<1x8x8xf32>
      %114 = arith.truncf %113 : vector<1x8x8xf32> to vector<1x8x8xbf16>
      %115 = vector.extract_strided_slice %28 {offsets = [0, 88], sizes = [8, 8], strides = [1, 1]} : vector<8x96xf32> to vector<8x8xf32>
      %116 = vector.shape_cast %115 : vector<8x8xf32> to vector<1x8x8xf32>
      %117 = arith.truncf %116 : vector<1x8x8xf32> to vector<1x8x8xbf16>
      "tpu.trace_start"() <{level = 10 : i32, message = "bqd,bkd->bqk"}> : () -> ()
      %cst_40 = arith.constant dense<0.000000e+00> : vector<1x8x8xf32>
      %118 = tpu.matmul %111, %114, %cst_40 {dimension_numbers = #tpu.dot_dimension_numbers<[2], [2], [1], [1], [0, 0, 0, 1, 1, 1], [0], [0]>} : vector<1x8x8xbf16>, vector<1x8x8xbf16>, vector<1x8x8xf32> -> vector<1x8x8xf32>
      "tpu.trace_stop"() : () -> ()
      %cst_41 = arith.constant dense<0xFF800000> : vector<1x8xf32>
      %119 = vector.multi_reduction <maximumf>, %118, %cst_41 [2] : vector<1x8x8xf32> to vector<1x8xf32>
      %120 = vector.shape_cast %119 : vector<1x8xf32> to vector<1x8x1xf32>
      %121 = vector.broadcast %120 : vector<1x8x1xf32> to vector<1x8x8xf32>
      %122 = arith.subf %118, %121 : vector<1x8x8xf32>
      %123 = math.exp %122 : vector<1x8x8xf32>
      %cst_42 = arith.constant dense<0.000000e+00> : vector<1x8xf32>
      %124 = vector.multi_reduction <add>, %123, %cst_42 [2] : vector<1x8x8xf32> to vector<1x8xf32>
      %125 = vector.shape_cast %124 : vector<1x8xf32> to vector<1x8x1xf32>
      %126 = tpu.reciprocal %125 {approx = true} : vector<1x8x1xf32> -> vector<1x8x1xf32>
      %127 = vector.broadcast %126 : vector<1x8x1xf32> to vector<1x8x8xf32>
      %128 = arith.mulf %123, %127 : vector<1x8x8xf32>
      %129 = arith.truncf %128 : vector<1x8x8xf32> to vector<1x8x8xbf16>
      "tpu.trace_start"() <{level = 10 : i32, message = "bqk,bkd->bqd"}> : () -> ()
      %cst_43 = arith.constant dense<0.000000e+00> : vector<1x8x8xf32>
      %130 = tpu.matmul %129, %117, %cst_43 {dimension_numbers = #tpu.dot_dimension_numbers<[2], [1], [1], [2], [0, 0, 0, 1, 1, 2], [0], [0]>} : vector<1x8x8xbf16>, vector<1x8x8xbf16>, vector<1x8x8xf32> -> vector<1x8x8xf32>
      "tpu.trace_stop"() : () -> ()
      %131 = vector.shape_cast %130 : vector<1x8x8xf32> to vector<8x8xf32>
      %132 = arith.truncf %131 : vector<8x8xf32> to vector<8x8xbf16>
      %133 = tpu.concatenate %54, %80, %106, %132 in 1 : vector<8x8xbf16>, vector<8x8xbf16>, vector<8x8xbf16>, vector<8x8xbf16> -> vector<8x32xbf16>
      %c0_44 = arith.constant 0 : index
      %c0_45 = arith.constant 0 : index
      %134 = vector.load %arg5[%c0_44, %c0_45] : memref<32x32xbf16, #tpu.memory_space<vmem>>, vector<32x32xbf16>
      %cst_46 = arith.constant dense<0.000000e+00> : vector<8x32xf32>
      %135 = tpu.matmul %133, %134, %cst_46 {dimension_numbers = #tpu.dot_dimension_numbers<[1], [0], [0], [1], [0, 0, 1, 1], [], []>} : vector<8x32xbf16>, vector<32x32xbf16>, vector<8x32xf32> -> vector<8x32xf32>
      %c0_47 = arith.constant 0 : index
      %c0_48 = arith.constant 0 : index
      %136 = vector.load %arg6[%c0_47, %c0_48] : memref<1x32xf32, #tpu.memory_space<vmem>>, vector<1x32xf32>
      %137 = vector.broadcast %136 : vector<1x32xf32> to vector<8x32xf32>
      %138 = arith.addf %135, %137 : vector<8x32xf32>
      %139 = arith.addf %22, %138 : vector<8x32xf32>
      %cst_49 = arith.constant dense<0.000000e+00> : vector<8xf32>
      %140 = vector.multi_reduction <add>, %139, %cst_49 [1] : vector<8x32xf32> to vector<8xf32>
      %141 = vector.shape_cast %140 : vector<8xf32> to vector<8x1xf32>
      %cst_50 = arith.constant 3.200000e+01 : f32
      %142 = vector.broadcast %cst_50 : f32 to vector<8x1xf32>
      %143 = arith.divf %141, %142 : vector<8x1xf32>
      %144 = vector.broadcast %143 : vector<8x1xf32> to vector<8x32xf32>
      %145 = arith.subf %139, %144 : vector<8x32xf32>
      %146 = arith.mulf %145, %145 : vector<8x32xf32>
      %cst_51 = arith.constant dense<0.000000e+00> : vector<8xf32>
      %147 = vector.multi_reduction <add>, %146, %cst_51 [1] : vector<8x32xf32> to vector<8xf32>
      %148 = vector.shape_cast %147 : vector<8xf32> to vector<8x1xf32>
      %cst_52 = arith.constant 3.200000e+01 : f32
      %149 = vector.broadcast %cst_52 : f32 to vector<8x1xf32>
      %150 = arith.divf %148, %149 : vector<8x1xf32>
      %151 = vector.broadcast %143 : vector<8x1xf32> to vector<8x32xf32>
      %152 = arith.subf %139, %151 : vector<8x32xf32>
      %cst_53 = arith.constant 9.99999974E-6 : f32
      %153 = vector.broadcast %cst_53 : f32 to vector<8x1xf32>
      %154 = arith.addf %150, %153 : vector<8x1xf32>
      %155 = math.rsqrt %154 : vector<8x1xf32>
      %156 = vector.broadcast %155 : vector<8x1xf32> to vector<8x32xf32>
      %157 = arith.mulf %152, %156 : vector<8x32xf32>
      %c0_54 = arith.constant 0 : index
      %c0_55 = arith.constant 0 : index
      %158 = vector.load %arg7[%c0_54, %c0_55] : memref<1x32xf32, #tpu.memory_space<vmem>>, vector<1x32xf32>
      %159 = vector.broadcast %158 : vector<1x32xf32> to vector<8x32xf32>
      %160 = arith.mulf %157, %159 : vector<8x32xf32>
      %c0_56 = arith.constant 0 : index
      %c0_57 = arith.constant 0 : index
      %161 = vector.load %arg8[%c0_56, %c0_57] : memref<1x32xf32, #tpu.memory_space<vmem>>, vector<1x32xf32>
      %162 = vector.broadcast %161 : vector<1x32xf32> to vector<8x32xf32>
      %163 = arith.addf %160, %162 : vector<8x32xf32>
      %c0_58 = arith.constant 0 : index
      %c0_59 = arith.constant 0 : index
      %164 = vector.load %arg16[%c0_58, %c0_59] : memref<8x32xf32, #tpu.memory_space<vmem>>, vector<8x32xf32>
      tpu.vector_store %arg16[%c0_58, %c0_59], %163 {strides = array<i32>} : memref<8x32xf32, #tpu.memory_space<vmem>>, vector<8x32xf32>,
      %cst_60 = arith.constant 0.000000e+00 : f32
      %165 = vector.broadcast %cst_60 : f32 to vector<8x32xf32>
      %c0_61 = arith.constant 0 : index
      %c0_62 = arith.constant 0 : index
      %166 = vector.load %arg17[%c0_61, %c0_62] : memref<8x32xf32, #tpu.memory_space<vmem>>, vector<8x32xf32>
      tpu.vector_store %arg17[%c0_61, %c0_62], %165 {strides = array<i32>} : memref<8x32xf32, #tpu.memory_space<vmem>>, vector<8x32xf32>,
    } else {
    }
    %c0 = arith.constant 0 : index
    %c0_1 = arith.constant 0 : index
    %3 = vector.load %arg16[%c0, %c0_1] : memref<8x32xf32, #tpu.memory_space<vmem>>, vector<8x32xf32>
    %4 = arith.truncf %3 : vector<8x32xf32> to vector<8x32xbf16>
    %c0_2 = arith.constant 0 : index
    %c0_3 = arith.constant 0 : index
    %5 = vector.load %arg9[%c0_2, %c0_3] : memref<32x64xbf16, #tpu.memory_space<vmem>>, vector<32x64xbf16>
    %cst = arith.constant dense<0.000000e+00> : vector<8x64xf32>
    %6 = tpu.matmul %4, %5, %cst {dimension_numbers = #tpu.dot_dimension_numbers<[1], [0], [0], [1], [0, 0, 1, 1], [], []>} : vector<8x32xbf16>, vector<32x64xbf16>, vector<8x64xf32> -> vector<8x64xf32>
    %c0_4 = arith.constant 0 : index
    %c0_5 = arith.constant 0 : index
    %7 = vector.load %arg10[%c0_4, %c0_5] : memref<1x64xf32, #tpu.memory_space<vmem>>, vector<1x64xf32>
    %8 = vector.broadcast %7 : vector<1x64xf32> to vector<8x64xf32>
    %9 = arith.addf %6, %8 : vector<8x64xf32>
    %cst_6 = arith.constant 0.000000e+00 : f32
    %10 = vector.broadcast %cst_6 : f32 to vector<8x64xf32>
    %11 = arith.maximumf %9, %10 : vector<8x64xf32>
    %c0_7 = arith.constant 0 : index
    %c0_8 = arith.constant 0 : index
    %12 = vector.load %arg17[%c0_7, %c0_8] : memref<8x32xf32, #tpu.memory_space<vmem>>, vector<8x32xf32>
    %13 = arith.truncf %11 : vector<8x64xf32> to vector<8x64xbf16>
    %c0_9 = arith.constant 0 : index
    %c0_10 = arith.constant 0 : index
    %14 = vector.load %arg11[%c0_9, %c0_10] : memref<64x32xbf16, #tpu.memory_space<vmem>>, vector<64x32xbf16>
    %cst_11 = arith.constant dense<0.000000e+00> : vector<8x32xf32>
    %15 = tpu.matmul %13, %14, %cst_11 {dimension_numbers = #tpu.dot_dimension_numbers<[1], [0], [0], [1], [0, 0, 1, 1], [], []>} : vector<8x64xbf16>, vector<64x32xbf16>, vector<8x32xf32> -> vector<8x32xf32>
    %16 = arith.addf %12, %15 : vector<8x32xf32>
    %c0_12 = arith.constant 0 : index
    %c0_13 = arith.constant 0 : index
    %17 = vector.load %arg17[%c0_12, %c0_13] : memref<8x32xf32, #tpu.memory_space<vmem>>, vector<8x32xf32>
    tpu.vector_store %arg17[%c0_12, %c0_13], %16 {strides = array<i32>} : memref<8x32xf32, #tpu.memory_space<vmem>>, vector<8x32xf32>,
    %c0_i32_14 = arith.constant 0 : i32
    %18 = arith.cmpi eq, %arg1, %c0_i32_14 : i32
    %19 = arith.extui %18 : i1 to i32
    %c0_i32_15 = arith.constant 0 : i32
    %20 = arith.cmpi ne, %19, %c0_i32_15 : i32
    scf.if %20 {
      %c0_16 = arith.constant 0 : index
      %c0_17 = arith.constant 0 : index
      %21 = vector.load %arg16[%c0_16, %c0_17] : memref<8x32xf32, #tpu.memory_space<vmem>>, vector<8x32xf32>
      %c0_18 = arith.constant 0 : index
      %c0_19 = arith.constant 0 : index
      %22 = vector.load %arg17[%c0_18, %c0_19] : memref<8x32xf32, #tpu.memory_space<vmem>>, vector<8x32xf32>
      %23 = arith.addf %21, %22 : vector<8x32xf32>
      %c0_20 = arith.constant 0 : index
      %c0_21 = arith.constant 0 : index
      %24 = vector.load %arg12[%c0_20, %c0_21] : memref<1x32xf32, #tpu.memory_space<vmem>>, vector<1x32xf32>
      %25 = vector.broadcast %24 : vector<1x32xf32> to vector<8x32xf32>
      %26 = arith.addf %23, %25 : vector<8x32xf32>
      %cst_22 = arith.constant dense<0.000000e+00> : vector<8xf32>
      %27 = vector.multi_reduction <add>, %26, %cst_22 [1] : vector<8x32xf32> to vector<8xf32>
      %28 = vector.shape_cast %27 : vector<8xf32> to vector<8x1xf32>
      %cst_23 = arith.constant 3.200000e+01 : f32
      %29 = vector.broadcast %cst_23 : f32 to vector<8x1xf32>
      %30 = arith.divf %28, %29 : vector<8x1xf32>
      %31 = vector.broadcast %30 : vector<8x1xf32> to vector<8x32xf32>
      %32 = arith.subf %26, %31 : vector<8x32xf32>
      %33 = arith.mulf %32, %32 : vector<8x32xf32>
      %cst_24 = arith.constant dense<0.000000e+00> : vector<8xf32>
      %34 = vector.multi_reduction <add>, %33, %cst_24 [1] : vector<8x32xf32> to vector<8xf32>
      %35 = vector.shape_cast %34 : vector<8xf32> to vector<8x1xf32>
      %cst_25 = arith.constant 3.200000e+01 : f32
      %36 = vector.broadcast %cst_25 : f32 to vector<8x1xf32>
      %37 = arith.divf %35, %36 : vector<8x1xf32>
      %38 = vector.broadcast %30 : vector<8x1xf32> to vector<8x32xf32>
      %39 = arith.subf %26, %38 : vector<8x32xf32>
      %cst_26 = arith.constant 9.99999974E-6 : f32
      %40 = vector.broadcast %cst_26 : f32 to vector<8x1xf32>
      %41 = arith.addf %37, %40 : vector<8x1xf32>
      %42 = math.rsqrt %41 : vector<8x1xf32>
      %43 = vector.broadcast %42 : vector<8x1xf32> to vector<8x32xf32>
      %44 = arith.mulf %39, %43 : vector<8x32xf32>
      %c0_27 = arith.constant 0 : index
      %c0_28 = arith.constant 0 : index
      %45 = vector.load %arg13[%c0_27, %c0_28] : memref<1x32xf32, #tpu.memory_space<vmem>>, vector<1x32xf32>
      %46 = vector.broadcast %45 : vector<1x32xf32> to vector<8x32xf32>
      %47 = arith.mulf %44, %46 : vector<8x32xf32>
      %c0_29 = arith.constant 0 : index
      %c0_30 = arith.constant 0 : index
      %48 = vector.load %arg14[%c0_29, %c0_30] : memref<1x32xf32, #tpu.memory_space<vmem>>, vector<1x32xf32>
      %49 = vector.broadcast %48 : vector<1x32xf32> to vector<8x32xf32>
      %50 = arith.addf %47, %49 : vector<8x32xf32>
      %51 = vector.shape_cast %50 : vector<8x32xf32> to vector<1x8x32xf32>
      %c0_31 = arith.constant 0 : index
      %c0_32 = arith.constant 0 : index
      %c0_33 = arith.constant 0 : index
      %52 = vector.load %arg15[%c0_31, %c0_32, %c0_33] : memref<1x8x32xf32, #tpu.memory_space<vmem>>, vector<1x8x32xf32>
      tpu.vector_store %arg15[%c0_31, %c0_32, %c0_33], %51 {strides = array<i32>} : memref<1x8x32xf32, #tpu.memory_space<vmem>>, vector<1x8x32xf32>,
    } else {
    }
    return
  }
  func.func @transform_0(%arg0: i32, %arg1: i32) -> (i32, i32, i32) {
    %c0_i32 = arith.constant 0 : i32
    %c0_i32_0 = arith.constant 0 : i32
    %c0_i32_1 = arith.constant 0 : i32
    return %arg0, %c0_i32, %c0_i32_0 : i32, i32, i32
  }
  func.func @transform_1(%arg0: i32, %arg1: i32) -> (i32, i32) {
    %c0_i32 = arith.constant 0 : i32
    %c0_i32_0 = arith.constant 0 : i32
    %c0_i32_1 = arith.constant 0 : i32
    return %c0_i32, %c0_i32_0 : i32, i32
  }
  func.func @transform_2(%arg0: i32, %arg1: i32) -> (i32, i32) {
    %c0_i32 = arith.constant 0 : i32
    %c0_i32_0 = arith.constant 0 : i32
    %c0_i32_1 = arith.constant 0 : i32
    return %c0_i32, %c0_i32_0 : i32, i32
  }
  func.func @transform_3(%arg0: i32, %arg1: i32) -> (i32, i32) {
    %c0_i32 = arith.constant 0 : i32
    %c0_i32_0 = arith.constant 0 : i32
    %c0_i32_1 = arith.constant 0 : i32
    return %c0_i32, %c0_i32_0 : i32, i32
  }
  func.func @transform_4(%arg0: i32, %arg1: i32) -> (i32, i32) {
    %c0_i32 = arith.constant 0 : i32
    %c0_i32_0 = arith.constant 0 : i32
    %c0_i32_1 = arith.constant 0 : i32
    return %c0_i32, %c0_i32_0 : i32, i32
  }
  func.func @transform_5(%arg0: i32, %arg1: i32) -> (i32, i32) {
    %c0_i32 = arith.constant 0 : i32
    %c0_i32_0 = arith.constant 0 : i32
    %c0_i32_1 = arith.constant 0 : i32
    return %c0_i32, %c0_i32_0 : i32, i32
  }
  func.func @transform_6(%arg0: i32, %arg1: i32) -> (i32, i32) {
    %c0_i32 = arith.constant 0 : i32
    %c0_i32_0 = arith.constant 0 : i32
    %c0_i32_1 = arith.constant 0 : i32
    return %c0_i32, %c0_i32_0 : i32, i32
  }
  func.func @transform_7(%arg0: i32, %arg1: i32) -> (i32, i32) {
    %c0_i32 = arith.constant 0 : i32
    %c0_i32_0 = arith.constant 0 : i32
    return %c0_i32, %arg1 : i32, i32
  }
  func.func @transform_8(%arg0: i32, %arg1: i32) -> (i32, i32) {
    %c0_i32 = arith.constant 0 : i32
    %c0_i32_0 = arith.constant 0 : i32
    return %c0_i32, %arg1 : i32, i32
  }
  func.func @transform_9(%arg0: i32, %arg1: i32) -> (i32, i32) {
    %c0_i32 = arith.constant 0 : i32
    %c0_i32_0 = arith.constant 0 : i32
    return %arg1, %c0_i32 : i32, i32
  }
  func.func @transform_10(%arg0: i32, %arg1: i32) -> (i32, i32) {
    %c0_i32 = arith.constant 0 : i32
    %c0_i32_0 = arith.constant 0 : i32
    %c0_i32_1 = arith.constant 0 : i32
    return %c0_i32, %c0_i32_0 : i32, i32
  }
  func.func @transform_11(%arg0: i32, %arg1: i32) -> (i32, i32) {
    %c0_i32 = arith.constant 0 : i32
    %c0_i32_0 = arith.constant 0 : i32
    %c0_i32_1 = arith.constant 0 : i32
    return %c0_i32, %c0_i32_0 : i32, i32
  }
  func.func @transform_12(%arg0: i32, %arg1: i32) -> (i32, i32) {
    %c0_i32 = arith.constant 0 : i32
    %c0_i32_0 = arith.constant 0 : i32
    %c0_i32_1 = arith.constant 0 : i32
    return %c0_i32, %c0_i32_0 : i32, i32
  }
  func.func @transform_13(%arg0: i32, %arg1: i32) -> (i32, i32, i32) {
    %c0_i32 = arith.constant 0 : i32
    %c0_i32_0 = arith.constant 0 : i32
    %c0_i32_1 = arith.constant 0 : i32
    return %arg0, %c0_i32, %c0_i32_0 : i32, i32, i32
  }
}

</mosaic_0001>

<llo_original>
// kernel: tpu_custom_call.1
$region0: #{tpu_custom_call.1}
  #allocation0 [shape = 'u32[]', space=smem, size = 0x4, offset = 0x4, fixed_abs, tag = 'smem constant byte address 0x4 - core index']
  #allocation1 [shape = 'u32[72,128]{1,0:T(1,128)}', space=vmem, size = 0x9000, scoped, tag = 'internal scratch']
  #allocation2 [shape = 'f32[8,32]{1,0:T(8,128)}', space=vmem, size = 0x1000, scoped, tag = 'scratch operand']
  #allocation3 [shape = 'f32[8,32]{1,0:T(8,128)}', space=vmem, size = 0x1000, scoped, tag = 'scratch operand']
  %s0 = inlined_call_operand.vmem [shape: f32[2,8,32], index: 0, kind: input, shape index: {}]
  %s1 = inlined_call_operand.vmem [shape: bf16[32,96], index: 1, kind: input, shape index: {}]
  %s2 = inlined_call_operand.vmem [shape: f32[1,96], index: 2, kind: input, shape index: {}]
  %s3 = inlined_call_operand.vmem [shape: bf16[32,32], index: 3, kind: input, shape index: {}]
  %s4 = inlined_call_operand.vmem [shape: f32[1,32], index: 4, kind: input, shape index: {}]
  %s5 = inlined_call_operand.vmem [shape: f32[1,32], index: 5, kind: input, shape index: {}]
  %s6 = inlined_call_operand.vmem [shape: f32[1,32], index: 6, kind: input, shape index: {}]
  %s7 = inlined_call_operand.hbm [shape: bf16[32,64], index: 7, kind: input, shape index: {}]
  %s8 = inlined_call_operand.vmem [shape: f32[1,64], index: 8, kind: input, shape index: {}]
  %s9 = inlined_call_operand.vmem [shape: bf16[64,32], index: 9, kind: input, shape index: {}]
  %s10 = inlined_call_operand.vmem [shape: f32[1,32], index: 10, kind: input, shape index: {}]
  %s11 = inlined_call_operand.vmem [shape: f32[1,32], index: 11, kind: input, shape index: {}]
  %s12 = inlined_call_operand.vmem [shape: f32[1,32], index: 12, kind: input, shape index: {}]
  %s13 = inlined_call_operand.hbm [shape: f32[2,8,32], index: 13, kind: output, shape index: {}]
  %s14 = sld [smem:[#allocation0]]
  $region97: #{tpu_custom_call.1} parent=0
    _
  %s16 = ssub.s32 1, %s14
  %s17 = scalar_select 0, %s16, %s14
  $region1: #{tpu_custom_call.1} parent=0
    #allocation4 [shape = 'u8[8192]{0}', space=vmem, size = 0x2000, scoped, tag = 'input window, operand 7, single buffered']
    #allocation5 [shape = 's32[2]{0}', space=sflag, size = 0x8, scoped, tag = 'scoped memory for tpu_custom_call.1']
    #allocation6 [shape = 's32[2]{0}', space=sflag, size = 0x8, scoped, tag = 'scoped memory for tpu_custom_call.1']
    #allocation7 [shape = 'u8[8192]{0}', space=vmem, size = 0x2000, scoped, tag = 'output window, operand 0']
    %18 = vsyncpa [#allocation5], 0
    %19 = vsyncpa [#allocation6], 0
    %s20 = scalar_lea.sflag [#allocation6], 1
    %21 = vsyncpa %s20, 0
    loop: start=0, step=1, limit=4
    $region2: #{tpu_custom_call.1} parent=1 // loop_pre_header
      _
    $region3: #{tpu_custom_call.1} parent=1 // loop_header
      %s23 = sphi 0, %s27
      %p24 = scmp.ge.s32.totalorder %s23, 4
      %s30 = sphi 0, %s42
      %s31 = sphi 0, %s38
      %s32 = sphi 0, %s30
      %s33 = sphi 0, %s31
      %s34 = sphi 0, %s32
      %s35 = sphi 0, %s33
      %s45 = sphi 0, %s47
      %s48 = sphi 0, %s45
      %s49 = sphi 0, %s48
      %s65 = sphi 0, %s49
      %s69 = sphi 0, %s69
      %s71 = sphi 0, %s69
      %s72 = sphi 0, %s71
      %s86 = sphi 0, %s72
      %s90 = sphi 0, %s90
      %s92 = sphi 0, %s90
      %s93 = sphi 0, %s92
      %s107 = sphi 0, %s93
      %s111 = sphi 0, %s111
      %s113 = sphi 0, %s111
      %s114 = sphi 0, %s113
      %s128 = sphi 0, %s114
      %s132 = sphi 0, %s132
      %s134 = sphi 0, %s132
      %s135 = sphi 0, %s134
      %s149 = sphi 0, %s135
      %s153 = sphi 0, %s153
      %s155 = sphi 0, %s153
      %s156 = sphi 0, %s155
      %s170 = sphi 0, %s156
      %s174 = sphi 0, %s174
      %s176 = sphi 0, %s174
      %s177 = sphi 0, %s176
      %s191 = sphi 0, %s177
      %s197 = sphi 0, %s199
      %s200 = sphi 0, %s197
      %s201 = sphi 0, %s200
      %s217 = sphi 0, %s201
      %s223 = sphi 0, %s225
      %s226 = sphi 0, %s223
      %s227 = sphi 0, %s226
      %s243 = sphi 0, %s227
      %s249 = sphi 0, %s251
      %s252 = sphi 0, %s249
      %s253 = sphi 0, %s252
      %s269 = sphi 0, %s253
      %s273 = sphi 0, %s273
      %s275 = sphi 0, %s273
      %s276 = sphi 0, %s275
      %s290 = sphi 0, %s276
      %s294 = sphi 0, %s294
      %s296 = sphi 0, %s294
      %s297 = sphi 0, %s296
      %s311 = sphi 0, %s297
      %s315 = sphi 0, %s315
      %s317 = sphi 0, %s315
      %s318 = sphi 0, %s317
      %s332 = sphi 0, %s318
      %s338 = sphi 0, %s340
      %s341 = sphi 0, %s338
      %s342 = sphi 0, %s341
      %s358 = sphi 0, %s342
    $region4: #{tpu_custom_call.1} parent=1 // loop_header_branch
      %26 = sbr.rel (%p24) target = $region8
    $region5: #{tpu_custom_call.1} parent=1 // loop_body
      %s28 = ssub.s32 %s23, 1
      %s29 = ssub.s32 %s23, 2
      %s36 = sadd.s32 1, %s31
      %p37 = scmp.ge.s32.totalorder %s36, 1
      %s38 = scalar_select %p37, 0, %s36
      %s39 = sadd.s32 1, %s30
      %s40 = scalar_select %p37, %s39, %s30
      %p41 = scmp.ge.s32.totalorder %s40, 2
      %s42 = scalar_select %p41, 0, %s40
      %s43 = ssub.s32 %s30, %s42
      %p44 = scmp.eq.s32.totalorder %s43, 0
      %s46 = sadd.s32 %s45, 1
      %s47 = scalar_select %p44, %s45, %s46
      %p50 = pneg %p44
      %p51 = scmp.eq.s32.totalorder %s23, 1
      %p52 = por %p50, %p51
      %p53 = scmp.ne.s32.totalorder %s45, %s48
      %p54 = scmp.eq.s32.totalorder %s23, 0
      %p55 = por %p53, %p54
      %p56 = scmp.ne.s32.totalorder %s45, %s48
      %p57 = scmp.eq.s32.totalorder %s28, 1
      %p58 = por %p56, %p57
      %p59 = scmp.ne.s32.totalorder %s48, %s49
      %p60 = scmp.eq.s32.totalorder %s28, 0
      %p61 = por %p59, %p60
      %p62 = scmp.ne.s32.totalorder %s48, %s49
      %p63 = scmp.eq.s32.totalorder %s29, 1
      %p64 = por %p62, %p63
      %p66 = scmp.ne.s32.totalorder %s49, %s65
      %p67 = scmp.eq.s32.totalorder %s29, 0
      %p68 = por %p66, %p67
      %s70 = sadd.s32 %s69, 1
      %p73 = scmp.eq.s32.totalorder %s23, 1
      %p74 = scmp.ne.s32.totalorder %s69, %s71
      %p75 = scmp.eq.s32.totalorder %s23, 0
      %p76 = por %p74, %p75
      %p77 = scmp.ne.s32.totalorder %s69, %s71
      %p78 = scmp.eq.s32.totalorder %s28, 1
      %p79 = por %p77, %p78
      %p80 = scmp.ne.s32.totalorder %s71, %s72
      %p81 = scmp.eq.s32.totalorder %s28, 0
      %p82 = por %p80, %p81
      %p83 = scmp.ne.s32.totalorder %s71, %s72
      %p84 = scmp.eq.s32.totalorder %s29, 1
      %p85 = por %p83, %p84
      %p87 = scmp.ne.s32.totalorder %s72, %s86
      %p88 = scmp.eq.s32.totalorder %s29, 0
      %p89 = por %p87, %p88
      %s91 = sadd.s32 %s90, 1
      %p94 = scmp.eq.s32.totalorder %s23, 1
      %p95 = scmp.ne.s32.totalorder %s90, %s92
      %p96 = scmp.eq.s32.totalorder %s23, 0
      %p97 = por %p95, %p96
      %p98 = scmp.ne.s32.totalorder %s90, %s92
      %p99 = scmp.eq.s32.totalorder %s28, 1
      %p100 = por %p98, %p99
      %p101 = scmp.ne.s32.totalorder %s92, %s93
      %p102 = scmp.eq.s32.totalorder %s28, 0
      %p103 = por %p101, %p102
      %p104 = scmp.ne.s32.totalorder %s92, %s93
      %p105 = scmp.eq.s32.totalorder %s29, 1
      %p106 = por %p104, %p105
      %p108 = scmp.ne.s32.totalorder %s93, %s107
      %p109 = scmp.eq.s32.totalorder %s29, 0
      %p110 = por %p108, %p109
      %s112 = sadd.s32 %s111, 1
      %p115 = scmp.eq.s32.totalorder %s23, 1
      %p116 = scmp.ne.s32.totalorder %s111, %s113
      %p117 = scmp.eq.s32.totalorder %s23, 0
      %p118 = por %p116, %p117
      %p119 = scmp.ne.s32.totalorder %s111, %s113
      %p120 = scmp.eq.s32.totalorder %s28, 1
      %p121 = por %p119, %p120
      %p122 = scmp.ne.s32.totalorder %s113, %s114
      %p123 = scmp.eq.s32.totalorder %s28, 0
      %p124 = por %p122, %p123
      %p125 = scmp.ne.s32.totalorder %s113, %s114
      %p126 = scmp.eq.s32.totalorder %s29, 1
      %p127 = por %p125, %p126
      %p129 = scmp.ne.s32.totalorder %s114, %s128
      %p130 = scmp.eq.s32.totalorder %s29, 0
      %p131 = por %p129, %p130
      %s133 = sadd.s32 %s132, 1
      %p136 = scmp.eq.s32.totalorder %s23, 1
      %p137 = scmp.ne.s32.totalorder %s132, %s134
      %p138 = scmp.eq.s32.totalorder %s23, 0
      %p139 = por %p137, %p138
      %p140 = scmp.ne.s32.totalorder %s132, %s134
      %p141 = scmp.eq.s32.totalorder %s28, 1
      %p142 = por %p140, %p141
      %p143 = scmp.ne.s32.totalorder %s134, %s135
      %p144 = scmp.eq.s32.totalorder %s28, 0
      %p145 = por %p143, %p144
      %p146 = scmp.ne.s32.totalorder %s134, %s135
      %p147 = scmp.eq.s32.totalorder %s29, 1
      %p148 = por %p146, %p147
      %p150 = scmp.ne.s32.totalorder %s135, %s149
      %p151 = scmp.eq.s32.totalorder %s29, 0
      %p152 = por %p150, %p151
      %s154 = sadd.s32 %s153, 1
      %p157 = scmp.eq.s32.totalorder %s23, 1
      %p158 = scmp.ne.s32.totalorder %s153, %s155
      %p159 = scmp.eq.s32.totalorder %s23, 0
      %p160 = por %p158, %p159
      %p161 = scmp.ne.s32.totalorder %s153, %s155
      %p162 = scmp.eq.s32.totalorder %s28, 1
      %p163 = por %p161, %p162
      %p164 = scmp.ne.s32.totalorder %s155, %s156
      %p165 = scmp.eq.s32.totalorder %s28, 0
      %p166 = por %p164, %p165
      %p167 = scmp.ne.s32.totalorder %s155, %s156
      %p168 = scmp.eq.s32.totalorder %s29, 1
      %p169 = por %p167, %p168
      %p171 = scmp.ne.s32.totalorder %s156, %s170
      %p172 = scmp.eq.s32.totalorder %s29, 0
      %p173 = por %p171, %p172
      %s175 = sadd.s32 %s174, 1
      %p178 = scmp.eq.s32.totalorder %s23, 1
      %p179 = scmp.ne.s32.totalorder %s174, %s176
      %p180 = scmp.eq.s32.totalorder %s23, 0
      %p181 = por %p179, %p180
      %p182 = scmp.ne.s32.totalorder %s174, %s176
      %p183 = scmp.eq.s32.totalorder %s28, 1
      %p184 = por %p182, %p183
      %p185 = scmp.ne.s32.totalorder %s176, %s177
      %p186 = scmp.eq.s32.totalorder %s28, 0
      %p187 = por %p185, %p186
      %p188 = scmp.ne.s32.totalorder %s176, %s177
      %p189 = scmp.eq.s32.totalorder %s29, 1
      %p190 = por %p188, %p189
      %p192 = scmp.ne.s32.totalorder %s177, %s191
      %p193 = scmp.eq.s32.totalorder %s29, 0
      %p194 = por %p192, %p193
      %s195 = ssub.s32 %s31, %s38
      %p196 = scmp.eq.s32.totalorder %s195, 0
      %s198 = sadd.s32 %s197, 1
      %s199 = scalar_select %p196, %s197, %s198
      %p202 = pneg %p196
      %p203 = scmp.eq.s32.totalorder %s23, 1
      %p204 = por %p202, %p203
      %p205 = scmp.ne.s32.totalorder %s197, %s200
      %p206 = scmp.eq.s32.totalorder %s23, 0
      %p207 = por %p205, %p206
      %p208 = scmp.ne.s32.totalorder %s197, %s200
      %p209 = scmp.eq.s32.totalorder %s28, 1
      %p210 = por %p208, %p209
      %p211 = scmp.ne.s32.totalorder %s200, %s201
      %p212 = scmp.eq.s32.totalorder %s28, 0
      %p213 = por %p211, %p212
      %p214 = scmp.ne.s32.totalorder %s200, %s201
      %p215 = scmp.eq.s32.totalorder %s29, 1
      %p216 = por %p214, %p215
      %p218 = scmp.ne.s32.totalorder %s201, %s217
      %p219 = scmp.eq.s32.totalorder %s29, 0
      %p220 = por %p218, %p219
      %s221 = ssub.s32 %s31, %s38
      %p222 = scmp.eq.s32.totalorder %s221, 0
      %s224 = sadd.s32 %s223, 1
      %s225 = scalar_select %p222, %s223, %s224
      %p228 = pneg %p222
      %p229 = scmp.eq.s32.totalorder %s23, 1
      %p230 = por %p228, %p229
      %p231 = scmp.ne.s32.totalorder %s223, %s226
      %p232 = scmp.eq.s32.totalorder %s23, 0
      %p233 = por %p231, %p232
      %p234 = scmp.ne.s32.totalorder %s223, %s226
      %p235 = scmp.eq.s32.totalorder %s28, 1
      %p236 = por %p234, %p235
      %p237 = scmp.ne.s32.totalorder %s226, %s227
      %p238 = scmp.eq.s32.totalorder %s28, 0
      %p239 = por %p237, %p238
      %p240 = scmp.ne.s32.totalorder %s226, %s227
      %p241 = scmp.eq.s32.totalorder %s29, 1
      %p242 = por %p240, %p241
      %p244 = scmp.ne.s32.totalorder %s227, %s243
      %p245 = scmp.eq.s32.totalorder %s29, 0
      %p246 = por %p244, %p245
      %s247 = ssub.s32 %s31, %s38
      %p248 = scmp.eq.s32.totalorder %s247, 0
      %s250 = sadd.s32 %s249, 1
      %s251 = scalar_select %p248, %s249, %s250
      %p254 = pneg %p248
      %p255 = scmp.eq.s32.totalorder %s23, 1
      %p256 = por %p254, %p255
      %p257 = scmp.ne.s32.totalorder %s249, %s252
      %p258 = scmp.eq.s32.totalorder %s23, 0
      %p259 = por %p257, %p258
      %p260 = scmp.ne.s32.totalorder %s249, %s252
      %p261 = scmp.eq.s32.totalorder %s28, 1
      %p262 = por %p260, %p261
      %p263 = scmp.ne.s32.totalorder %s252, %s253
      %p264 = scmp.eq.s32.totalorder %s28, 0
      %p265 = por %p263, %p264
      %p266 = scmp.ne.s32.totalorder %s252, %s253
      %p267 = scmp.eq.s32.totalorder %s29, 1
      %p268 = por %p266, %p267
      %p270 = scmp.ne.s32.totalorder %s253, %s269
      %p271 = scmp.eq.s32.totalorder %s29, 0
      %p272 = por %p270, %p271
      %s274 = sadd.s32 %s273, 1
      %p277 = scmp.eq.s32.totalorder %s23, 1
      %p278 = scmp.ne.s32.totalorder %s273, %s275
      %p279 = scmp.eq.s32.totalorder %s23, 0
      %p280 = por %p278, %p279
      %p281 = scmp.ne.s32.totalorder %s273, %s275
      %p282 = scmp.eq.s32.totalorder %s28, 1
      %p283 = por %p281, %p282
      %p284 = scmp.ne.s32.totalorder %s275, %s276
      %p285 = scmp.eq.s32.totalorder %s28, 0
      %p286 = por %p284, %p285
      %p287 = scmp.ne.s32.totalorder %s275, %s276
      %p288 = scmp.eq.s32.totalorder %s29, 1
      %p289 = por %p287, %p288
      %p291 = scmp.ne.s32.totalorder %s276, %s290
      %p292 = scmp.eq.s32.totalorder %s29, 0
      %p293 = por %p291, %p292
      %s295 = sadd.s32 %s294, 1
      %p298 = scmp.eq.s32.totalorder %s23, 1
      %p299 = scmp.ne.s32.totalorder %s294, %s296
      %p300 = scmp.eq.s32.totalorder %s23, 0
      %p301 = por %p299, %p300
      %p302 = scmp.ne.s32.totalorder %s294, %s296
      %p303 = scmp.eq.s32.totalorder %s28, 1
      %p304 = por %p302, %p303
      %p305 = scmp.ne.s32.totalorder %s296, %s297
      %p306 = scmp.eq.s32.totalorder %s28, 0
      %p307 = por %p305, %p306
      %p308 = scmp.ne.s32.totalorder %s296, %s297
      %p309 = scmp.eq.s32.totalorder %s29, 1
      %p310 = por %p308, %p309
      %p312 = scmp.ne.s32.totalorder %s297, %s311
      %p313 = scmp.eq.s32.totalorder %s29, 0
      %p314 = por %p312, %p313
      %s316 = sadd.s32 %s315, 1
      %p319 = scmp.eq.s32.totalorder %s23, 1
      %p320 = scmp.ne.s32.totalorder %s315, %s317
      %p321 = scmp.eq.s32.totalorder %s23, 0
      %p322 = por %p320, %p321
      %p323 = scmp.ne.s32.totalorder %s315, %s317
      %p324 = scmp.eq.s32.totalorder %s28, 1
      %p325 = por %p323, %p324
      %p326 = scmp.ne.s32.totalorder %s317, %s318
      %p327 = scmp.eq.s32.totalorder %s28, 0
      %p328 = por %p326, %p327
      %p329 = scmp.ne.s32.totalorder %s317, %s318
      %p330 = scmp.eq.s32.totalorder %s29, 1
      %p331 = por %p329, %p330
      %p333 = scmp.ne.s32.totalorder %s318, %s332
      %p334 = scmp.eq.s32.totalorder %s29, 0
      %p335 = por %p333, %p334
      %s336 = ssub.s32 %s30, %s42
      %p337 = scmp.eq.s32.totalorder %s336, 0
      %s339 = sadd.s32 %s338, 1
      %s340 = scalar_select %p337, %s338, %s339
      %p343 = pneg %p337
      %p344 = scmp.eq.s32.totalorder %s23, 1
      %p345 = por %p343, %p344
      %p346 = scmp.ne.s32.totalorder %s338, %s341
      %p347 = scmp.eq.s32.totalorder %s23, 0
      %p348 = por %p346, %p347
      %p349 = scmp.ne.s32.totalorder %s338, %s341
      %p350 = scmp.eq.s32.totalorder %s28, 1
      %p351 = por %p349, %p350
      %p352 = scmp.ne.s32.totalorder %s341, %s342
      %p353 = scmp.eq.s32.totalorder %s28, 0
      %p354 = por %p352, %p353
      %p355 = scmp.ne.s32.totalorder %s341, %s342
      %p356 = scmp.eq.s32.totalorder %s29, 1
      %p357 = por %p355, %p356
      %p359 = scmp.ne.s32.totalorder %s342, %s358
      %p360 = scmp.eq.s32.totalorder %s29, 0
      %p361 = por %p359, %p360
      %p362 = scmp.le.s32.totalorder 1, %s23
      %p363 = scmp.lt.s32.totalorder %s23, 3
      %p364 = pnand %p362, %p363
      %p365 = pneg %p364
      // Predicated region
      $region9: #{tpu_custom_call.1} parent=5 // pred_check
        _
      $region10: #{tpu_custom_call.1} parent=5 // pred_check_branch
        %367 = sbr.rel (%p364) target = $region12
      $region11: #{tpu_custom_call.1} parent=5 // pred_region
        %s368 = ssub.s32 %s23, 1
        // Predicated region
        $region13: #{tpu_custom_call.1} parent=11 // pred_check
          %p369 = pneg %p82
        $region14: #{tpu_custom_call.1} parent=11 // pred_check_branch
          %371 = sbr.rel (%p369) target = $region16
        $region15: #{tpu_custom_call.1} parent=11 // pred_region
          _
        $region16: #{tpu_custom_call.1} parent=11 // pred_fallthru
          _
        // Predicated region
        $region17: #{tpu_custom_call.1} parent=11 // pred_check
          %p372 = pneg %p103
        $region18: #{tpu_custom_call.1} parent=11 // pred_check_branch
          %374 = sbr.rel (%p372) target = $region20
        $region19: #{tpu_custom_call.1} parent=11 // pred_region
          _
        $region20: #{tpu_custom_call.1} parent=11 // pred_fallthru
          _
        // Predicated region
        $region21: #{tpu_custom_call.1} parent=11 // pred_check
          %p375 = pneg %p124
        $region22: #{tpu_custom_call.1} parent=11 // pred_check_branch
          %377 = sbr.rel (%p375) target = $region24
        $region23: #{tpu_custom_call.1} parent=11 // pred_region
          _
        $region24: #{tpu_custom_call.1} parent=11 // pred_fallthru
          _
        // Predicated region
        $region25: #{tpu_custom_call.1} parent=11 // pred_check
          %p378 = pneg %p145
        $region26: #{tpu_custom_call.1} parent=11 // pred_check_branch
          %380 = sbr.rel (%p378) target = $region28
        $region27: #{tpu_custom_call.1} parent=11 // pred_region
          _
        $region28: #{tpu_custom_call.1} parent=11 // pred_fallthru
          _
        // Predicated region
        $region29: #{tpu_custom_call.1} parent=11 // pred_check
          %p381 = pneg %p166
        $region30: #{tpu_custom_call.1} parent=11 // pred_check_branch
          %383 = sbr.rel (%p381) target = $region32
        $region31: #{tpu_custom_call.1} parent=11 // pred_region
          _
        $region32: #{tpu_custom_call.1} parent=11 // pred_fallthru
          _
        // Predicated region
        $region33: #{tpu_custom_call.1} parent=11 // pred_check
          %p384 = pneg %p187
        $region34: #{tpu_custom_call.1} parent=11 // pred_check_branch
          %386 = sbr.rel (%p384) target = $region36
        $region35: #{tpu_custom_call.1} parent=11 // pred_region
          _
        $region36: #{tpu_custom_call.1} parent=11 // pred_fallthru
          _
        // Predicated region
        $region37: #{tpu_custom_call.1} parent=11 // pred_check
          %p387 = pneg %p213
        $region38: #{tpu_custom_call.1} parent=11 // pred_check_branch
          %389 = sbr.rel (%p387) target = $region40
        $region39: #{tpu_custom_call.1} parent=11 // pred_region
          %391 = vsyncadd [#allocation5], 0
          %s392 = smul.addr %s33, 4
          %s393 = scalar_lea.hbm %s7, %s392
          %s394 = sshll.u32 %s393, 4
          %s395 = int_to_ptr.hbm [resolvable:$true] %s394
          %s396 = sshll.u32 [#allocation4], 4
          %s397 = int_to_ptr.vmem [resolvable:$true] %s396
          %402 = dma.hbm_to_vmem [thread:$0]  %s395, 256, %s397, [#allocation5], 64, 64, 4
        $region40: #{tpu_custom_call.1} parent=11 // pred_fallthru
          _
        // Predicated region
        $region41: #{tpu_custom_call.1} parent=11 // pred_check
          %p403 = pneg %p239
        $region42: #{tpu_custom_call.1} parent=11 // pred_check_branch
          %405 = sbr.rel (%p403) target = $region44
        $region43: #{tpu_custom_call.1} parent=11 // pred_region
          %p406 = scmp.lt.s32.totalorder %s33, 0
          %s407 = scalar_select %p406, %s33, 0
          %s408 = scalar_lea.vmem %s8, %s407
        $region44: #{tpu_custom_call.1} parent=11 // pred_fallthru
          _
        // Predicated region
        $region45: #{tpu_custom_call.1} parent=11 // pred_check
          %p409 = pneg %p265
        $region46: #{tpu_custom_call.1} parent=11 // pred_check_branch
          %411 = sbr.rel (%p409) target = $region48
        $region47: #{tpu_custom_call.1} parent=11 // pred_region
          %s412 = smul.u32 8, %s33
          %p413 = scmp.lt.s32.totalorder %s412, 7
          %s414 = scalar_select %p413, %s412, 7
          %s415 = smul.addr %s414, 4
          %s416 = scalar_lea.vmem %s9, %s415
          %s417 = smul.u32 8, %s33
        $region48: #{tpu_custom_call.1} parent=11 // pred_fallthru
          _
        // Predicated region
        $region49: #{tpu_custom_call.1} parent=11 // pred_check
          %p418 = pneg %p286
        $region50: #{tpu_custom_call.1} parent=11 // pred_check_branch
          %420 = sbr.rel (%p418) target = $region52
        $region51: #{tpu_custom_call.1} parent=11 // pred_region
          _
        $region52: #{tpu_custom_call.1} parent=11 // pred_fallthru
          _
        // Predicated region
        $region53: #{tpu_custom_call.1} parent=11 // pred_check
          %p421 = pneg %p307
        $region54: #{tpu_custom_call.1} parent=11 // pred_check_branch
          %423 = sbr.rel (%p421) target = $region56
        $region55: #{tpu_custom_call.1} parent=11 // pred_region
          _
        $region56: #{tpu_custom_call.1} parent=11 // pred_fallthru
          _
        // Predicated region
        $region57: #{tpu_custom_call.1} parent=11 // pred_check
          %p424 = pneg %p328
        $region58: #{tpu_custom_call.1} parent=11 // pred_check_branch
          %426 = sbr.rel (%p424) target = $region60
        $region59: #{tpu_custom_call.1} parent=11 // pred_region
          _
        $region60: #{tpu_custom_call.1} parent=11 // pred_fallthru
          _
      $region12: #{tpu_custom_call.1} parent=5 // pred_fallthru
        _
      %p427 = scmp.lt.s32.totalorder %s23, 2
      // Predicated region
      $region61: #{tpu_custom_call.1} parent=5 // pred_check
        %p428 = pneg %p427
      $region62: #{tpu_custom_call.1} parent=5 // pred_check_branch
        %430 = sbr.rel (%p428) target = $region64
      $region63: #{tpu_custom_call.1} parent=5 // pred_region
        // Predicated region
        $region65: #{tpu_custom_call.1} parent=63 // pred_check
          %p431 = pneg %p55
        $region66: #{tpu_custom_call.1} parent=63 // pred_check_branch
          %433 = sbr.rel (%p431) target = $region68
        $region67: #{tpu_custom_call.1} parent=63 // pred_region
          %p434 = scmp.lt.s32.totalorder %s30, 1
          %s435 = scalar_select %p434, %s30, 1
          %s436 = smul.addr %s435, 8
          %s437 = scalar_lea.vmem %s0, %s436
        $region68: #{tpu_custom_call.1} parent=63 // pred_fallthru
          _
      $region64: #{tpu_custom_call.1} parent=5 // pred_fallthru
        _
      %p438 = scmp.le.s32.totalorder 1, %s23
      %p439 = scmp.lt.s32.totalorder %s23, 3
      %p440 = pnand %p438, %p439
      %p441 = pneg %p440
      // Predicated region
      $region69: #{tpu_custom_call.1} parent=5 // pred_check
        _
      $region70: #{tpu_custom_call.1} parent=5 // pred_check_branch
        %443 = sbr.rel (%p440) target = $region72
      $region71: #{tpu_custom_call.1} parent=5 // pred_region
        %s444 = ssub.s32 %s23, 1
        // Predicated region
        $region73: #{tpu_custom_call.1} parent=71 // pred_check
          %p445 = pneg %p213
        $region74: #{tpu_custom_call.1} parent=71 // pred_check_branch
          %447 = sbr.rel (%p445) target = $region76
        $region75: #{tpu_custom_call.1} parent=71 // pred_region
          %449 = dma.done [#allocation5], 256
        $region76: #{tpu_custom_call.1} parent=71 // pred_fallthru
          _
        %p450 = scmp.lt.s32.totalorder %s32, 1
        %s451 = scalar_select %p450, %s32, 1
        %s452 = smul.addr %s451, 8
        %s453 = scalar_lea.vmem %s0, %s452
        %p454 = pneg %p61
        %p455 = pneg %p58
        %p456 = pneg %p82
        %p457 = pneg %p79
        %p458 = pneg %p103
        %p459 = pneg %p100
        %p460 = pneg %p124
        %p461 = pneg %p121
        %p462 = pneg %p145
        %p463 = pneg %p142
        %p464 = pneg %p166
        %p465 = pneg %p163
        %p466 = pneg %p187
        %p467 = pneg %p184
        %p468 = pneg %p213
        %p469 = pneg %p210
        %p470 = scmp.lt.s32.totalorder %s33, 0
        %s471 = scalar_select %p470, %s33, 0
        %s472 = scalar_lea.vmem %s8, %s471
        %p473 = pneg %p239
        %p474 = pneg %p236
        %s475 = smul.u32 8, %s33
        %p476 = scmp.lt.s32.totalorder %s475, 7
        %s477 = scalar_select %p476, %s475, 7
        %s478 = smul.addr %s477, 4
        %s479 = scalar_lea.vmem %s9, %s478
        %p480 = pneg %p265
        %p481 = pneg %p262
        %p482 = pneg %p286
        %p483 = pneg %p283
        %p484 = pneg %p307
        %p485 = pneg %p304
        %p486 = pneg %p328
        %p487 = pneg %p325
        %p488 = pneg %p354
        %p489 = pneg %p351
        %s490 = sand.u32 %s341, 1
        %s491 = scalar_lea.sflag [#allocation6], %s490
        %s492 = sand.u32 %s341, 1
        %s493 = smul.addr %s492, 8
        %s494 = scalar_lea.vmem [#allocation7], %s493
        %p495 = scmp.lt.s32.totalorder %s32, 1
        %s496 = scalar_select %p495, %s32, 1
        %s497 = smul.addr %s496, 8
        %s498 = scalar_lea.vmem %s0, %s497
        %p499 = scmp.lt.s32.totalorder %s33, 0
        %s500 = scalar_select %p499, %s33, 0
        %s501 = scalar_lea.vmem %s8, %s500
        %s502 = smul.u32 8, %s33
        %p503 = scmp.lt.s32.totalorder %s502, 7
        %s504 = scalar_select %p503, %s502, 7
        %s505 = smul.addr %s504, 4
        %s506 = scalar_lea.vmem %s9, %s505
        %s507 = smul.u32 8, %s33
        %p509 = scmp.eq.s32.totalorder %s33, 0
        // Predicated region
        $region77: #{tpu_custom_call.1} parent=71 // pred_check
          %p510 = pneg %p509
        $region78: #{tpu_custom_call.1} parent=71 // pred_check_branch
          %512 = sbr.rel (%p510) target = $region80
        $region79: #{tpu_custom_call.1} parent=71 // pred_region
          %v513 = vld [vmem:[%s498] sm:$0xff]
          %v514 = vpack.c.bf16 %v513, %v513
          %v515 = vld [vmem:[%s1] sm:$0xf]
          %v516 = vld [vmem:[%s1 + $0x4] sm:$0xf]
          %v517 = vld [vmem:[%s1 + $0x8] sm:$0xf]
          %v518 = vld [vmem:[%s1 + $0xc] sm:$0xf]
          %v519 = vld [vmem:[%s2] sm:$0x1]
          %v521 = vperm.slane %v519, 0
          %v527 = vunpack.c.l.b16 %v515
          %v528 = vunpack.c.l.b16 %v516
          %v529 = vunpack.c.l.b16 %v517
          %v530 = vunpack.c.l.b16 %v518
          %v531 = vpack.c.b16 %v528, %v527
          %v532 = vpack.c.b16 %v530, %v529
          %vm535 = vcmask 261120
          %v537 = vsel %vm535, %v514, 0
          %539 = vmatpush.bf16.msra.mxu0 0
          %540 = vmatpush.bf16.msra.mxu0 0
          %541 = vmatpush.bf16.msra.mxu0 0
          %542 = vmatpush.bf16.msra.mxu0 0
          %543 = vmatpush.bf16.msra.mxu0 0
          %544 = vmatpush.bf16.msra.mxu0 0
          %545 = vmatpush.bf16.msra.mxu0 %v532
          %546 = vmatpush.bf16.msra.mxu0 %v531
          %547 = vmatmul.bf16.gmra.mxu0 %v537
          %v548 = vpop.f32.mrf.mxu0
          %v549 = vadd.f32 %v521, %v548
          %v550 = vpop.f32.mrf.mxu0
          %551 = vdwg.mxu0
          %v552 = vmul.f32 %v549, 0.35355338
          %v553 = vpack.c.bf16 %v552, %v552
          %v554 = vpack.c.bf16 %v549, %v549
          %v556 = vunpack.c.l.b16 %v554
          %v557 = vpack.c.b16 %v556, %v556
          %558 = vrot.lane.b32.xlu0 %v557, 96
          %v559 = vpop.permute.xlu0 %558
          %vm560 = vcmask 64512
          %v562 = vsel %vm560, %v553, 0
          %v565 = vsel %vm560, %v559, 0
          %567 = vmatpush.bf16.xpose.msra.mxu0 0
          %568 = vmatpush.bf16.xpose.msra.mxu0 0
          %569 = vmatpush.bf16.xpose.msra.mxu0 0
          %570 = vmatpush.bf16.xpose.msra.mxu0 0
          %571 = vmatpush.bf16.xpose.msra.mxu0 0
          %572 = vmatpush.bf16.xpose.msra.mxu0 0
          %573 = vmatpush.bf16.xpose.msra.mxu0 0
          %574 = vmatpush.bf16.xpose.msra.mxu0 %v565
          %575 = vmatmul.bf16.gmra.mxu0 %v562
          %v576 = vpop.f32.mrf.mxu0
          %v577 = vadd.f32 0.0, %v576
          %v578 = vpop.f32.mrf.mxu0
          %579 = vdwg.mxu0
          %v580 = vsel %vm560, %v577, -inf
          %581 = vmax.xlane.f32.xlu0 %v580
          %v582 = vpop.xlane.xlu0 %581
          %v583 = vsub.f32 %v577, %v582
          %v584 = vmul.f32 %v583, 1.442695
          %v585 = vpow.pop %v584
          %v586 = vsel %vm560, %v585, 0.0
          %587 = vadd.xlane.f32.xlu0 %v586
          %v588 = vpop.xlane.xlu0 %587
          %v589 = vrcp.pop %v588
          %v590 = vmul.f32 %v585, %v589
          %v591 = vpack.c.bf16 %v590, %v590
          %592 = vrot.lane.b32.xlu0 %v557, 64
          %v593 = vpop.permute.xlu0 %592
          %v595 = vsel %vm560, %v591, 0
          %vm597 = vcmask 1043456
          %v599 = vsel %vm597, %v593, 0
          %601 = vmatpush.bf16.msra.mxu0 0
          %602 = vmatpush.bf16.msra.mxu0 0
          %603 = vmatpush.bf16.msra.mxu0 0
          %604 = vmatpush.bf16.msra.mxu0 0
          %605 = vmatpush.bf16.msra.mxu0 0
          %606 = vmatpush.bf16.msra.mxu0 0
          %607 = vmatpush.bf16.msra.mxu0 0
          %608 = vmatpush.bf16.msra.mxu0 %v599
          %609 = vmatmul.bf16.gmra.mxu0 %v595
          %v610 = vpop.f32.mrf.mxu0
          %v611 = vadd.f32 0.0, %v610
          %v612 = vpop.f32.mrf.mxu0
          %613 = vdwg.mxu0
          %v614 = vpack.c.bf16 %v611, %v611
          %v616 = vunpack.c.l.b16 %v553
          %v617 = vpack.c.b16 %v616, %v616
          %618 = vrot.lane.b32.xlu0 %v617, 120
          %v619 = vpop.permute.xlu0 %618
          %620 = vrot.lane.b32.xlu0 %v557, 88
          %v621 = vpop.permute.xlu0 %620
          %v623 = vsel %vm560, %v619, 0
          %v626 = vsel %vm560, %v621, 0
          %628 = vmatpush.bf16.xpose.msra.mxu0 0
          %629 = vmatpush.bf16.xpose.msra.mxu0 0
          %630 = vmatpush.bf16.xpose.msra.mxu0 0
          %631 = vmatpush.bf16.xpose.msra.mxu0 0
          %632 = vmatpush.bf16.xpose.msra.mxu0 0
          %633 = vmatpush.bf16.xpose.msra.mxu0 0
          %634 = vmatpush.bf16.xpose.msra.mxu0 0
          %635 = vmatpush.bf16.xpose.msra.mxu0 %v626
          %636 = vmatmul.bf16.gmra.mxu0 %v623
          %v637 = vpop.f32.mrf.mxu0
          %v638 = vadd.f32 0.0, %v637
          %v639 = vpop.f32.mrf.mxu0
          %640 = vdwg.mxu0
          %v641 = vsel %vm560, %v638, -inf
          %642 = vmax.xlane.f32.xlu0 %v641
          %v643 = vpop.xlane.xlu0 %642
          %v644 = vsub.f32 %v638, %v643
          %v645 = vmul.f32 %v644, 1.442695
          %v646 = vpow.pop %v645
          %v647 = vsel %vm560, %v646, 0.0
          %648 = vadd.xlane.f32.xlu0 %v647
          %v649 = vpop.xlane.xlu0 %648
          %v650 = vrcp.pop %v649
          %v651 = vmul.f32 %v646, %v650
          %v652 = vpack.c.bf16 %v651, %v651
          %653 = vrot.lane.b32.xlu0 %v557, 56
          %v654 = vpop.permute.xlu0 %653
          %v656 = vsel %vm560, %v652, 0
          %v659 = vsel %vm597, %v654, 0
          %661 = vmatpush.bf16.msra.mxu0 0
          %662 = vmatpush.bf16.msra.mxu0 0
          %663 = vmatpush.bf16.msra.mxu0 0
          %664 = vmatpush.bf16.msra.mxu0 0
          %665 = vmatpush.bf16.msra.mxu0 0
          %666 = vmatpush.bf16.msra.mxu0 0
          %667 = vmatpush.bf16.msra.mxu0 0
          %668 = vmatpush.bf16.msra.mxu0 %v659
          %669 = vmatmul.bf16.gmra.mxu0 %v656
          %v670 = vpop.f32.mrf.mxu0
          %v671 = vadd.f32 0.0, %v670
          %v672 = vpop.f32.mrf.mxu0
          %673 = vdwg.mxu0
          %v674 = vpack.c.bf16 %v671, %v671
          %675 = vrot.lane.b32.xlu0 %v617, 112
          %v676 = vpop.permute.xlu0 %675
          %677 = vrot.lane.b32.xlu0 %v557, 80
          %v678 = vpop.permute.xlu0 %677
          %v680 = vsel %vm560, %v676, 0
          %v683 = vsel %vm560, %v678, 0
          %685 = vmatpush.bf16.xpose.msra.mxu0 0
          %686 = vmatpush.bf16.xpose.msra.mxu0 0
          %687 = vmatpush.bf16.xpose.msra.mxu0 0
          %688 = vmatpush.bf16.xpose.msra.mxu0 0
          %689 = vmatpush.bf16.xpose.msra.mxu0 0
          %690 = vmatpush.bf16.xpose.msra.mxu0 0
          %691 = vmatpush.bf16.xpose.msra.mxu0 0
          %692 = vmatpush.bf16.xpose.msra.mxu0 %v683
          %693 = vmatmul.bf16.gmra.mxu0 %v680
          %v694 = vpop.f32.mrf.mxu0
          %v695 = vadd.f32 0.0, %v694
          %v696 = vpop.f32.mrf.mxu0
          %697 = vdwg.mxu0
          %v698 = vsel %vm560, %v695, -inf
          %699 = vmax.xlane.f32.xlu0 %v698
          %v700 = vpop.xlane.xlu0 %699
          %v701 = vsub.f32 %v695, %v700
          %v702 = vmul.f32 %v701, 1.442695
          %v703 = vpow.pop %v702
          %v704 = vsel %vm560, %v703, 0.0
          %705 = vadd.xlane.f32.xlu0 %v704
          %v706 = vpop.xlane.xlu0 %705
          %v707 = vrcp.pop %v706
          %v708 = vmul.f32 %v703, %v707
          %v709 = vpack.c.bf16 %v708, %v708
          %710 = vrot.lane.b32.xlu0 %v557, 48
          %v711 = vpop.permute.xlu0 %710
          %v713 = vsel %vm560, %v709, 0
          %v716 = vsel %vm597, %v711, 0
          %718 = vmatpush.bf16.msra.mxu0 0
          %719 = vmatpush.bf16.msra.mxu0 0
          %720 = vmatpush.bf16.msra.mxu0 0
          %721 = vmatpush.bf16.msra.mxu0 0
          %722 = vmatpush.bf16.msra.mxu0 0
          %723 = vmatpush.bf16.msra.mxu0 0
          %724 = vmatpush.bf16.msra.mxu0 0
          %725 = vmatpush.bf16.msra.mxu0 %v716
          %726 = vmatmul.bf16.gmra.mxu0 %v713
          %v727 = vpop.f32.mrf.mxu0
          %v728 = vadd.f32 0.0, %v727
          %v729 = vpop.f32.mrf.mxu0
          %730 = vdwg.mxu0
          %v731 = vpack.c.bf16 %v728, %v728
          %732 = vrot.lane.b32.xlu0 %v617, 104
          %v733 = vpop.permute.xlu0 %732
          %734 = vrot.lane.b32.xlu0 %v557, 72
          %v735 = vpop.permute.xlu0 %734
          %v737 = vsel %vm560, %v733, 0
          %v740 = vsel %vm560, %v735, 0
          %742 = vmatpush.bf16.xpose.msra.mxu0 0
          %743 = vmatpush.bf16.xpose.msra.mxu0 0
          %744 = vmatpush.bf16.xpose.msra.mxu0 0
          %745 = vmatpush.bf16.xpose.msra.mxu0 0
          %746 = vmatpush.bf16.xpose.msra.mxu0 0
          %747 = vmatpush.bf16.xpose.msra.mxu0 0
          %748 = vmatpush.bf16.xpose.msra.mxu0 0
          %749 = vmatpush.bf16.xpose.msra.mxu0 %v740
          %750 = vmatmul.bf16.gmra.mxu0 %v737
          %v751 = vpop.f32.mrf.mxu0
          %v752 = vadd.f32 0.0, %v751
          %v753 = vpop.f32.mrf.mxu0
          %754 = vdwg.mxu0
          %v755 = vsel %vm560, %v752, -inf
          %756 = vmax.xlane.f32.xlu0 %v755
          %v757 = vpop.xlane.xlu0 %756
          %v758 = vsub.f32 %v752, %v757
          %v759 = vmul.f32 %v758, 1.442695
          %v760 = vpow.pop %v759
          %v761 = vsel %vm560, %v760, 0.0
          %762 = vadd.xlane.f32.xlu0 %v761
          %v763 = vpop.xlane.xlu0 %762
          %v764 = vrcp.pop %v763
          %v765 = vmul.f32 %v760, %v764
          %v766 = vpack.c.bf16 %v765, %v765
          %767 = vrot.lane.b32.xlu0 %v557, 40
          %v768 = vpop.permute.xlu0 %767
          %v770 = vsel %vm560, %v766, 0
          %v773 = vsel %vm597, %v768, 0
          %775 = vmatpush.bf16.msra.mxu0 0
          %776 = vmatpush.bf16.msra.mxu0 0
          %777 = vmatpush.bf16.msra.mxu0 0
          %778 = vmatpush.bf16.msra.mxu0 0
          %779 = vmatpush.bf16.msra.mxu0 0
          %780 = vmatpush.bf16.msra.mxu0 0
          %781 = vmatpush.bf16.msra.mxu0 0
          %782 = vmatpush.bf16.msra.mxu0 %v773
          %783 = vmatmul.bf16.gmra.mxu0 %v770
          %v784 = vpop.f32.mrf.mxu0
          %v785 = vadd.f32 0.0, %v784
          %v786 = vpop.f32.mrf.mxu0
          %787 = vdwg.mxu0
          %v788 = vpack.c.bf16 %v785, %v785
          %v790 = vunpack.c.l.b16 %v674
          %v791 = vpack.c.b16 %v790, %v790
          %792 = vrot.lane.b32.xlu0 %v791, 8
          %v793 = vpop.permute.xlu0 %792
          %v795 = vunpack.c.l.b16 %v731
          %v796 = vpack.c.b16 %v795, %v795
          %797 = vrot.lane.b32.xlu0 %v796, 16
          %v798 = vpop.permute.xlu0 %797
          %v800 = vunpack.c.l.b16 %v788
          %v801 = vpack.c.b16 %v800, %v800
          %802 = vrot.lane.b32.xlu0 %v801, 24
          %v803 = vpop.permute.xlu0 %802
          %v806 = vsel %vm560, %v614, %v793
          %vm807 = vcmask 130048
          %v809 = vsel %vm807, %v806, %v798
          %vm810 = vcmask 195584
          %v812 = vsel %vm810, %v809, %v803
          %v813 = vld [vmem:[%s3] sm:$0xf]
          %v814 = vld [vmem:[%s3 + $0x4] sm:$0xf]
          %v815 = vld [vmem:[%s3 + $0x8] sm:$0xf]
          %v816 = vld [vmem:[%s3 + $0xc] sm:$0xf]
          %v817 = vld [vmem:[%s4] sm:$0x1]
          %v819 = vperm.slane %v817, 0
          %v825 = vunpack.c.l.b16 %v813
          %v826 = vunpack.c.l.b16 %v814
          %v827 = vunpack.c.l.b16 %v815
          %v828 = vunpack.c.l.b16 %v816
          %v829 = vpack.c.b16 %v826, %v825
          %v830 = vpack.c.b16 %v828, %v827
          %v833 = vsel %vm535, %v812, 0
          %835 = vmatpush.bf16.msra.mxu0 0
          %836 = vmatpush.bf16.msra.mxu0 0
          %837 = vmatpush.bf16.msra.mxu0 0
          %838 = vmatpush.bf16.msra.mxu0 0
          %839 = vmatpush.bf16.msra.mxu0 0
          %840 = vmatpush.bf16.msra.mxu0 0
          %841 = vmatpush.bf16.msra.mxu0 %v830
          %842 = vmatpush.bf16.msra.mxu0 %v829
          %843 = vmatmul.bf16.gmra.mxu0 %v833
          %v844 = vpop.f32.mrf.mxu0
          %v845 = vadd.f32 %v819, %v844
          %v846 = vpop.f32.mrf.mxu0
          %847 = vdwg.mxu0
          %v848 = vadd.f32 %v513, %v845
          %v849 = vsel %vm535, %v848, 0.0
          %850 = vadd.xlane.f32.xlu0 %v849
          %v851 = vpop.xlane.xlu0 %850
          %v852 = vrcp.pop 32.0
          %v853 = vmul.f32 32.0, %v852
          %v854 = vsub.f32 1.0, %v853
          %v855 = vmul.f32 %v852, %v854
          %v856 = vadd.f32 %v852, %v855
          %vm857 = vweird.f32 %v852
          %v858 = vsel %vm857, %v852, %v856
          %v859 = vmul.f32 %v851, %v858
          %v860 = vsub.f32 %v848, %v859
          %v861 = vmul.f32 %v860, %v860
          %v862 = vsel %vm535, %v861, 0.0
          %863 = vadd.xlane.f32.xlu0 %v862
          %v864 = vpop.xlane.xlu0 %863
          %v865 = vmul.f32 %v864, %v858
          %v866 = vadd.f32 %v865, 1e-05
          %v867 = vrsqrt.pop %v866
          %v868 = vmul.f32 %v867, %v866
          %v869 = vmul.f32 %v868, %v867
          %v870 = vmul.f32 0.5, %v869
          %v871 = vsub.f32 1.5, %v870
          %v872 = vmul.f32 %v867, %v871
          %vm873 = vweird.f32 %v866
          %vm874 = vweird.f32 %v867
          %vm875 = vmor %vm873, %vm874
          %v876 = vsel %vm875, %v867, %v872
          %v877 = vmul.f32 %v860, %v876
          %v878 = vld [vmem:[%s5] sm:$0x1]
          %v880 = vperm.slane %v878, 0
          %v882 = vmul.f32 %v877, %v880
          %v883 = vld [vmem:[%s6] sm:$0x1]
          %v885 = vperm.slane %v883, 0
          %v887 = vadd.f32 %v882, %v885
          %888 = vst.msk [vmem:[#allocation2] sm:$0xff] %vm535, %v887
          %889 = vst.msk [vmem:[#allocation3] sm:$0xff] %vm535, 0.0
        $region80: #{tpu_custom_call.1} parent=71 // pred_fallthru
          _
        %v890 = vld [vmem:[#allocation2] sm:$0xff]
        %v891 = vpack.c.bf16 %v890, %v890
        %v892 = vld [vmem:[#allocation4] sm:$0xf]
        %v893 = vld [vmem:[#allocation4 + $0x4] sm:$0xf]
        %v894 = vld [vmem:[#allocation4 + $0x8] sm:$0xf]
        %v895 = vld [vmem:[#allocation4 + $0xc] sm:$0xf]
        %v896 = vld [vmem:[%s501] sm:$0x1]
        %v898 = vperm.slane %v896, 0
        %v904 = vunpack.c.l.b16 %v892
        %v905 = vunpack.c.l.b16 %v893
        %v906 = vunpack.c.l.b16 %v894
        %v907 = vunpack.c.l.b16 %v895
        %v908 = vpack.c.b16 %v905, %v904
        %v909 = vpack.c.b16 %v907, %v906
        %vm912 = vcmask 261120
        %v914 = vsel %vm912, %v891, 0
        %916 = vmatpush.bf16.msra.mxu0 0
        %917 = vmatpush.bf16.msra.mxu0 0
        %918 = vmatpush.bf16.msra.mxu0 0
        %919 = vmatpush.bf16.msra.mxu0 0
        %920 = vmatpush.bf16.msra.mxu0 0
        %921 = vmatpush.bf16.msra.mxu0 0
        %922 = vmatpush.bf16.msra.mxu0 %v909
        %923 = vmatpush.bf16.msra.mxu0 %v908
        %924 = vmatmul.bf16.gmra.mxu0 %v914
        %v925 = vpop.f32.mrf.mxu0
        %v926 = vadd.f32 %v898, %v925
        %v927 = vpop.f32.mrf.mxu0
        %928 = vdwg.mxu0
        %v929 = vmax.f32 %v926, 0.0
        %v930 = vld [vmem:[#allocation3] sm:$0xff]
        %v931 = vpack.c.bf16 %v929, %v929
        %v932 = vld [vmem:[%s506] sm:$0xf]
        %v933 = vld [vmem:[%s506 + $0x4] sm:$0xf]
        %v934 = vld [vmem:[%s506 + $0x8] sm:$0xf]
        %v935 = vld [vmem:[%s506 + $0xc] sm:$0xf]
        %v936 = vld [vmem:[%s506 + $0x10] sm:$0xf]
        %v937 = vld [vmem:[%s506 + $0x14] sm:$0xf]
        %v938 = vld [vmem:[%s506 + $0x18] sm:$0xf]
        %v939 = vld [vmem:[%s506 + $0x1c] sm:$0xf]
        %v948 = vunpack.c.l.b16 %v932
        %v949 = vunpack.c.l.b16 %v933
        %v950 = vunpack.c.l.b16 %v934
        %v951 = vunpack.c.l.b16 %v935
        %v952 = vunpack.c.l.b16 %v936
        %v953 = vunpack.c.l.b16 %v937
        %v954 = vunpack.c.l.b16 %v938
        %v955 = vunpack.c.l.b16 %v939
        %v956 = vpack.c.b16 %v949, %v948
        %v957 = vpack.c.b16 %v951, %v950
        %v958 = vpack.c.b16 %v953, %v952
        %v959 = vpack.c.b16 %v955, %v954
        %vm964 = vcmask 523264
        %v966 = vsel %vm964, %v931, 0
        %968 = vmatpush.bf16.msra.mxu0 0
        %969 = vmatpush.bf16.msra.mxu0 0
        %970 = vmatpush.bf16.msra.mxu0 0
        %971 = vmatpush.bf16.msra.mxu0 0
        %972 = vmatpush.bf16.msra.mxu0 %v959
        %973 = vmatpush.bf16.msra.mxu0 %v958
        %974 = vmatpush.bf16.msra.mxu0 %v957
        %975 = vmatpush.bf16.msra.mxu0 %v956
        %976 = vmatmul.bf16.gmra.mxu0 %v966
        %v977 = vpop.f32.mrf.mxu0
        %v978 = vadd.f32 0.0, %v977
        %v979 = vpop.f32.mrf.mxu0
        %980 = vdwg.mxu0
        %v981 = vadd.f32 %v930, %v978
        %982 = vst.msk [vmem:[#allocation3] sm:$0xff] %vm912, %v981
        // Predicated region
        $region81: #{tpu_custom_call.1} parent=71 // pred_check
          %p983 = pneg %p509
        $region82: #{tpu_custom_call.1} parent=71 // pred_check_branch
          %985 = sbr.rel (%p983) target = $region84
        $region83: #{tpu_custom_call.1} parent=71 // pred_region
          %v986 = vld [vmem:[#allocation2] sm:$0xff]
          %v987 = vld [vmem:[#allocation3] sm:$0xff]
          %v988 = vadd.f32 %v986, %v987
          %v989 = vld [vmem:[%s10] sm:$0x1]
          %v991 = vperm.slane %v989, 0
          %v993 = vadd.f32 %v988, %v991
          %v994 = vsel %vm912, %v993, 0.0
          %995 = vadd.xlane.f32.xlu0 %v994
          %v996 = vpop.xlane.xlu0 %995
          %v997 = vrcp.pop 32.0
          %v998 = vmul.f32 32.0, %v997
          %v999 = vsub.f32 1.0, %v998
          %v1000 = vmul.f32 %v997, %v999
          %v1001 = vadd.f32 %v997, %v1000
          %vm1002 = vweird.f32 %v997
          %v1003 = vsel %vm1002, %v997, %v1001
          %v1004 = vmul.f32 %v996, %v1003
          %v1005 = vsub.f32 %v993, %v1004
          %v1006 = vmul.f32 %v1005, %v1005
          %v1007 = vsel %vm912, %v1006, 0.0
          %1008 = vadd.xlane.f32.xlu0 %v1007
          %v1009 = vpop.xlane.xlu0 %1008
          %v1010 = vmul.f32 %v1009, %v1003
          %v1011 = vadd.f32 %v1010, 1e-05
          %v1012 = vrsqrt.pop %v1011
          %v1013 = vmul.f32 %v1012, %v1011
          %v1014 = vmul.f32 %v1013, %v1012
          %v1015 = vmul.f32 0.5, %v1014
          %v1016 = vsub.f32 1.5, %v1015
          %v1017 = vmul.f32 %v1012, %v1016
          %vm1018 = vweird.f32 %v1011
          %vm1019 = vweird.f32 %v1012
          %vm1020 = vmor %vm1018, %vm1019
          %v1021 = vsel %vm1020, %v1012, %v1017
          %v1022 = vmul.f32 %v1005, %v1021
          %v1023 = vld [vmem:[%s11] sm:$0x1]
          %v1025 = vperm.slane %v1023, 0
          %v1027 = vmul.f32 %v1022, %v1025
          %v1028 = vld [vmem:[%s12] sm:$0x1]
          %v1030 = vperm.slane %v1028, 0
          %v1032 = vadd.f32 %v1027, %v1030
          %1033 = vst.msk [vmem:[%s494] sm:$0xff] %vm912, %v1032
        $region84: #{tpu_custom_call.1} parent=71 // pred_fallthru
          _
        %s1034 = sand.u32 %s341, 1
        %s1035 = scalar_lea.sflag [#allocation6], %s1034
        %s1036 = sand.u32 %s341, 1
        %s1037 = smul.addr %s1036, 8
        %s1038 = scalar_lea.vmem [#allocation7], %s1037
        // Predicated region
        $region85: #{tpu_custom_call.1} parent=71 // pred_check
          %p1039 = pneg %p351
        $region86: #{tpu_custom_call.1} parent=71 // pred_check_branch
          %1041 = sbr.rel (%p1039) target = $region88
        $region87: #{tpu_custom_call.1} parent=71 // pred_region
          %1043 = vsyncadd %s1035, 0
          %s1044 = smul.addr %s32, 8
          %s1045 = scalar_lea.hbm %s13, %s1044
          %s1047 = sshll.u32 %s1038, 4
          %s1048 = int_to_ptr.vmem [resolvable:$true] %s1047
          %s1049 = sshll.u32 %s1045, 4
          %s1050 = int_to_ptr.hbm [resolvable:$true] %s1049
          %1052 = dma.vmem_to_hbm [thread:$0]  %s1048, 128, %s1050, %s1035
        $region88: #{tpu_custom_call.1} parent=71 // pred_fallthru
          _
      $region72: #{tpu_custom_call.1} parent=5 // pred_fallthru
        _
      %p1053 = scmp.le.s32.totalorder 2, %s23
      // Predicated region
      $region89: #{tpu_custom_call.1} parent=5 // pred_check
        %p1054 = pneg %p1053
      $region90: #{tpu_custom_call.1} parent=5 // pred_check_branch
        %1056 = sbr.rel (%p1054) target = $region92
      $region91: #{tpu_custom_call.1} parent=5 // pred_region
        %s1057 = ssub.s32 %s23, 2
        // Predicated region
        $region93: #{tpu_custom_call.1} parent=91 // pred_check
          %p1058 = pneg %p357
        $region94: #{tpu_custom_call.1} parent=91 // pred_check_branch
          %1060 = sbr.rel (%p1058) target = $region96
        $region95: #{tpu_custom_call.1} parent=91 // pred_region
          %s1061 = sand.u32 %s342, 1
          %s1062 = scalar_lea.sflag [#allocation6], %s1061
          %s1063 = sand.u32 %s342, 1
          %s1064 = smul.addr %s1063, 8
          %s1065 = scalar_lea.vmem [#allocation7], %s1064
          %1067 = dma.done %s1062, 128
        $region96: #{tpu_custom_call.1} parent=91 // pred_fallthru
          _
      $region92: #{tpu_custom_call.1} parent=5 // pred_fallthru
        _
    $region6: #{tpu_custom_call.1} parent=1 // loop_footer
      %s27 = sadd.s32 1, %s23
    $region7: #{tpu_custom_call.1} parent=1 // loop_footer_branch
      %22 = sbr.rel target = $region3
    $region8: #{tpu_custom_call.1} parent=1 // loop_exit
      _
    %1068 = vsyncpa [#allocation5], 1
    %s1069 = scalar_lea.sflag [#allocation5], 1
    %1070 = vsyncpa %s1069, 1
    %1071 = vsyncpa [#allocation6], 1
    %s1072 = scalar_lea.sflag [#allocation6], 1
    %1073 = vsyncpa %s1072, 1

// kernel: tpu_custom_call.1
$region0: #{tpu_custom_call.1}
  #allocation0 [shape = 'u32[]', space=smem, size = 0x4, offset = 0x4, fixed_abs, tag = 'smem constant byte address 0x4 - core index']
  #allocation1 [shape = 'u32[72,128]{1,0:T(1,128)}', space=vmem, size = 0x9000, scoped, tag = 'internal scratch']
  #allocation2 [shape = 'f32[8,32]{1,0:T(8,128)}', space=vmem, size = 0x1000, scoped, tag = 'scratch operand']
  #allocation3 [shape = 'f32[8,32]{1,0:T(8,128)}', space=vmem, size = 0x1000, scoped, tag = 'scratch operand']
  %s0 = inlined_call_operand.vmem [shape: f32[2,8,32], index: 0, kind: input, shape index: {}]
  %s1 = inlined_call_operand.vmem [shape: bf16[32,96], index: 1, kind: input, shape index: {}]
  %s2 = inlined_call_operand.vmem [shape: f32[1,96], index: 2, kind: input, shape index: {}]
  %s3 = inlined_call_operand.vmem [shape: bf16[32,32], index: 3, kind: input, shape index: {}]
  %s4 = inlined_call_operand.vmem [shape: f32[1,32], index: 4, kind: input, shape index: {}]
  %s5 = inlined_call_operand.vmem [shape: f32[1,32], index: 5, kind: input, shape index: {}]
  %s6 = inlined_call_operand.vmem [shape: f32[1,32], index: 6, kind: input, shape index: {}]
  %s7 = inlined_call_operand.hbm [shape: bf16[32,64], index: 7, kind: input, shape index: {}]
  %s8 = inlined_call_operand.vmem [shape: f32[1,64], index: 8, kind: input, shape index: {}]
  %s9 = inlined_call_operand.vmem [shape: bf16[64,32], index: 9, kind: input, shape index: {}]
  %s10 = inlined_call_operand.vmem [shape: f32[1,32], index: 10, kind: input, shape index: {}]
  %s11 = inlined_call_operand.vmem [shape: f32[1,32], index: 11, kind: input, shape index: {}]
  %s12 = inlined_call_operand.vmem [shape: f32[1,32], index: 12, kind: input, shape index: {}]
  %s13 = inlined_call_operand.hbm [shape: f32[2,8,32], index: 13, kind: output, shape index: {}]
  %s14 = sld [smem:[#allocation0]]
  $region97: #{tpu_custom_call.1} parent=0
    _
  %s16 = ssub.s32 1, %s14
  %s17 = scalar_select 0, %s16, %s14
  $region1: #{tpu_custom_call.1} parent=0
    #allocation4 [shape = 'u8[8192]{0}', space=vmem, size = 0x2000, scoped, tag = 'input window, operand 7, single buffered']
    #allocation5 [shape = 's32[2]{0}', space=sflag, size = 0x8, scoped, tag = 'scoped memory for tpu_custom_call.1']
    #allocation6 [shape = 's32[2]{0}', space=sflag, size = 0x8, scoped, tag = 'scoped memory for tpu_custom_call.1']
    #allocation7 [shape = 'u8[8192]{0}', space=vmem, size = 0x2000, scoped, tag = 'output window, operand 0']
    %18 = vsyncpa [#allocation5], 0
    %19 = vsyncpa [#allocation6], 0
    %s20 = scalar_lea.sflag [#allocation6], 1
    %21 = vsyncpa %s20, 0
    loop: start=0, step=1, limit=4
    $region2: #{tpu_custom_call.1} parent=1 // loop_pre_header
      _
    $region3: #{tpu_custom_call.1} parent=1 // loop_header
      %s23 = sphi 0, %s27
      %p24 = scmp.ge.s32.totalorder %s23, 4
      %s30 = sphi 0, %s42
      %s31 = sphi 0, %s38
      %s32 = sphi 0, %s30
      %s33 = sphi 0, %s31
      %s34 = sphi 0, %s32
      %s35 = sphi 0, %s33
      %s45 = sphi 0, %s47
      %s48 = sphi 0, %s45
      %s49 = sphi 0, %s48
      %s65 = sphi 0, %s49
      %s69 = sphi 0, %s69
      %s71 = sphi 0, %s69
      %s72 = sphi 0, %s71
      %s86 = sphi 0, %s72
      %s90 = sphi 0, %s90
      %s92 = sphi 0, %s90
      %s93 = sphi 0, %s92
      %s107 = sphi 0, %s93
      %s111 = sphi 0, %s111
      %s113 = sphi 0, %s111
      %s114 = sphi 0, %s113
      %s128 = sphi 0, %s114
      %s132 = sphi 0, %s132
      %s134 = sphi 0, %s132
      %s135 = sphi 0, %s134
      %s149 = sphi 0, %s135
      %s153 = sphi 0, %s153
      %s155 = sphi 0, %s153
      %s156 = sphi 0, %s155
      %s170 = sphi 0, %s156
      %s174 = sphi 0, %s174
      %s176 = sphi 0, %s174
      %s177 = sphi 0, %s176
      %s191 = sphi 0, %s177
      %s197 = sphi 0, %s199
      %s200 = sphi 0, %s197
      %s201 = sphi 0, %s200
      %s217 = sphi 0, %s201
      %s223 = sphi 0, %s225
      %s226 = sphi 0, %s223
      %s227 = sphi 0, %s226
      %s243 = sphi 0, %s227
      %s249 = sphi 0, %s251
      %s252 = sphi 0, %s249
      %s253 = sphi 0, %s252
      %s269 = sphi 0, %s253
      %s273 = sphi 0, %s273
      %s275 = sphi 0, %s273
      %s276 = sphi 0, %s275
      %s290 = sphi 0, %s276
      %s294 = sphi 0, %s294
      %s296 = sphi 0, %s294
      %s297 = sphi 0, %s296
      %s311 = sphi 0, %s297
      %s315 = sphi 0, %s315
      %s317 = sphi 0, %s315
      %s318 = sphi 0, %s317
      %s332 = sphi 0, %s318
      %s338 = sphi 0, %s340
      %s341 = sphi 0, %s338
      %s342 = sphi 0, %s341
      %s358 = sphi 0, %s342
    $region4: #{tpu_custom_call.1} parent=1 // loop_header_branch
      %26 = sbr.rel (%p24) target = $region8
    $region5: #{tpu_custom_call.1} parent=1 // loop_body
      %s28 = ssub.s32 %s23, 1
      %s29 = ssub.s32 %s23, 2
      %s36 = sadd.s32 1, %s31
      %p37 = scmp.ge.s32.totalorder %s36, 1
      %s38 = scalar_select %p37, 0, %s36
      %s39 = sadd.s32 1, %s30
      %s40 = scalar_select %p37, %s39, %s30
      %p41 = scmp.ge.s32.totalorder %s40, 2
      %s42 = scalar_select %p41, 0, %s40
      %s43 = ssub.s32 %s30, %s42
      %p44 = scmp.eq.s32.totalorder %s43, 0
      %s46 = sadd.s32 %s45, 1
      %s47 = scalar_select %p44, %s45, %s46
      %p50 = pneg %p44
      %p51 = scmp.eq.s32.totalorder %s23, 1
      %p52 = por %p50, %p51
      %p53 = scmp.ne.s32.totalorder %s45, %s48
      %p54 = scmp.eq.s32.totalorder %s23, 0
      %p55 = por %p53, %p54
      %p56 = scmp.ne.s32.totalorder %s45, %s48
      %p57 = scmp.eq.s32.totalorder %s28, 1
      %p58 = por %p56, %p57
      %p59 = scmp.ne.s32.totalorder %s48, %s49
      %p60 = scmp.eq.s32.totalorder %s28, 0
      %p61 = por %p59, %p60
      %p62 = scmp.ne.s32.totalorder %s48, %s49
      %p63 = scmp.eq.s32.totalorder %s29, 1
      %p64 = por %p62, %p63
      %p66 = scmp.ne.s32.totalorder %s49, %s65
      %p67 = scmp.eq.s32.totalorder %s29, 0
      %p68 = por %p66, %p67
      %s70 = sadd.s32 %s69, 1
      %p73 = scmp.eq.s32.totalorder %s23, 1
      %p74 = scmp.ne.s32.totalorder %s69, %s71
      %p75 = scmp.eq.s32.totalorder %s23, 0
      %p76 = por %p74, %p75
      %p77 = scmp.ne.s32.totalorder %s69, %s71
      %p78 = scmp.eq.s32.totalorder %s28, 1
      %p79 = por %p77, %p78
      %p80 = scmp.ne.s32.totalorder %s71, %s72
      %p81 = scmp.eq.s32.totalorder %s28, 0
      %p82 = por %p80, %p81
      %p83 = scmp.ne.s32.totalorder %s71, %s72
      %p84 = scmp.eq.s32.totalorder %s29, 1
      %p85 = por %p83, %p84
      %p87 = scmp.ne.s32.totalorder %s72, %s86
      %p88 = scmp.eq.s32.totalorder %s29, 0
      %p89 = por %p87, %p88
      %s91 = sadd.s32 %s90, 1
      %p94 = scmp.eq.s32.totalorder %s23, 1
      %p95 = scmp.ne.s32.totalorder %s90, %s92
      %p96 = scmp.eq.s32.totalorder %s23, 0
      %p97 = por %p95, %p96
      %p98 = scmp.ne.s32.totalorder %s90, %s92
      %p99 = scmp.eq.s32.totalorder %s28, 1
      %p100 = por %p98, %p99
      %p101 = scmp.ne.s32.totalorder %s92, %s93
      %p102 = scmp.eq.s32.totalorder %s28, 0
      %p103 = por %p101, %p102
      %p104 = scmp.ne.s32.totalorder %s92, %s93
      %p105 = scmp.eq.s32.totalorder %s29, 1
      %p106 = por %p104, %p105
      %p108 = scmp.ne.s32.totalorder %s93, %s107
      %p109 = scmp.eq.s32.totalorder %s29, 0
      %p110 = por %p108, %p109
      %s112 = sadd.s32 %s111, 1
      %p115 = scmp.eq.s32.totalorder %s23, 1
      %p116 = scmp.ne.s32.totalorder %s111, %s113
      %p117 = scmp.eq.s32.totalorder %s23, 0
      %p118 = por %p116, %p117
      %p119 = scmp.ne.s32.totalorder %s111, %s113
      %p120 = scmp.eq.s32.totalorder %s28, 1
      %p121 = por %p119, %p120
      %p122 = scmp.ne.s32.totalorder %s113, %s114
      %p123 = scmp.eq.s32.totalorder %s28, 0
      %p124 = por %p122, %p123
      %p125 = scmp.ne.s32.totalorder %s113, %s114
      %p126 = scmp.eq.s32.totalorder %s29, 1
      %p127 = por %p125, %p126
      %p129 = scmp.ne.s32.totalorder %s114, %s128
      %p130 = scmp.eq.s32.totalorder %s29, 0
      %p131 = por %p129, %p130
      %s133 = sadd.s32 %s132, 1
      %p136 = scmp.eq.s32.totalorder %s23, 1
      %p137 = scmp.ne.s32.totalorder %s132, %s134
      %p138 = scmp.eq.s32.totalorder %s23, 0
      %p139 = por %p137, %p138
      %p140 = scmp.ne.s32.totalorder %s132, %s134
      %p141 = scmp.eq.s32.totalorder %s28, 1
      %p142 = por %p140, %p141
      %p143 = scmp.ne.s32.totalorder %s134, %s135
      %p144 = scmp.eq.s32.totalorder %s28, 0
      %p145 = por %p143, %p144
      %p146 = scmp.ne.s32.totalorder %s134, %s135
      %p147 = scmp.eq.s32.totalorder %s29, 1
      %p148 = por %p146, %p147
      %p150 = scmp.ne.s32.totalorder %s135, %s149
      %p151 = scmp.eq.s32.totalorder %s29, 0
      %p152 = por %p150, %p151
      %s154 = sadd.s32 %s153, 1
      %p157 = scmp.eq.s32.totalorder %s23, 1
      %p158 = scmp.ne.s32.totalorder %s153, %s155
      %p159 = scmp.eq.s32.totalorder %s23, 0
      %p160 = por %p158, %p159
      %p161 = scmp.ne.s32.totalorder %s153, %s155
      %p162 = scmp.eq.s32.totalorder %s28, 1
      %p163 = por %p161, %p162
      %p164 = scmp.ne.s32.totalorder %s155, %s156
      %p165 = scmp.eq.s32.totalorder %s28, 0
      %p166 = por %p164, %p165
      %p167 = scmp.ne.s32.totalorder %s155, %s156
      %p168 = scmp.eq.s32.totalorder %s29, 1
      %p169 = por %p167, %p168
      %p171 = scmp.ne.s32.totalorder %s156, %s170
      %p172 = scmp.eq.s32.totalorder %s29, 0
      %p173 = por %p171, %p172
      %s175 = sadd.s32 %s174, 1
      %p178 = scmp.eq.s32.totalorder %s23, 1
      %p179 = scmp.ne.s32.totalorder %s174, %s176
      %p180 = scmp.eq.s32.totalorder %s23, 0
      %p181 = por %p179, %p180
      %p182 = scmp.ne.s32.totalorder %s174, %s176
      %p183 = scmp.eq.s32.totalorder %s28, 1
      %p184 = por %p182, %p183
      %p185 = scmp.ne.s32.totalorder %s176, %s177
      %p186 = scmp.eq.s32.totalorder %s28, 0
      %p187 = por %p185, %p186
      %p188 = scmp.ne.s32.totalorder %s176, %s177
      %p189 = scmp.eq.s32.totalorder %s29, 1
      %p190 = por %p188, %p189
      %p192 = scmp.ne.s32.totalorder %s177, %s191
      %p193 = scmp.eq.s32.totalorder %s29, 0
      %p194 = por %p192, %p193
      %s195 = ssub.s32 %s31, %s38
      %p196 = scmp.eq.s32.totalorder %s195, 0
      %s198 = sadd.s32 %s197, 1
      %s199 = scalar_select %p196, %s197, %s198
      %p202 = pneg %p196
      %p203 = scmp.eq.s32.totalorder %s23, 1
      %p204 = por %p202, %p203
      %p205 = scmp.ne.s32.totalorder %s197, %s200
      %p206 = scmp.eq.s32.totalorder %s23, 0
      %p207 = por %p205, %p206
      %p208 = scmp.ne.s32.totalorder %s197, %s200
      %p209 = scmp.eq.s32.totalorder %s28, 1
      %p210 = por %p208, %p209
      %p211 = scmp.ne.s32.totalorder %s200, %s201
      %p212 = scmp.eq.s32.totalorder %s28, 0
      %p213 = por %p211, %p212
      %p214 = scmp.ne.s32.totalorder %s200, %s201
      %p215 = scmp.eq.s32.totalorder %s29, 1
      %p216 = por %p214, %p215
      %p218 = scmp.ne.s32.totalorder %s201, %s217
      %p219 = scmp.eq.s32.totalorder %s29, 0
      %p220 = por %p218, %p219
      %s221 = ssub.s32 %s31, %s38
      %p222 = scmp.eq.s32.totalorder %s221, 0
      %s224 = sadd.s32 %s223, 1
      %s225 = scalar_select %p222, %s223, %s224
      %p228 = pneg %p222
      %p229 = scmp.eq.s32.totalorder %s23, 1
      %p230 = por %p228, %p229
      %p231 = scmp.ne.s32.totalorder %s223, %s226
      %p232 = scmp.eq.s32.totalorder %s23, 0
      %p233 = por %p231, %p232
      %p234 = scmp.ne.s32.totalorder %s223, %s226
      %p235 = scmp.eq.s32.totalorder %s28, 1
      %p236 = por %p234, %p235
      %p237 = scmp.ne.s32.totalorder %s226, %s227
      %p238 = scmp.eq.s32.totalorder %s28, 0
      %p239 = por %p237, %p238
      %p240 = scmp.ne.s32.totalorder %s226, %s227
      %p241 = scmp.eq.s32.totalorder %s29, 1
      %p242 = por %p240, %p241
      %p244 = scmp.ne.s32.totalorder %s227, %s243
      %p245 = scmp.eq.s32.totalorder %s29, 0
      %p246 = por %p244, %p245
      %s247 = ssub.s32 %s31, %s38
      %p248 = scmp.eq.s32.totalorder %s247, 0
      %s250 = sadd.s32 %s249, 1
      %s251 = scalar_select %p248, %s249, %s250
      %p254 = pneg %p248
      %p255 = scmp.eq.s32.totalorder %s23, 1
      %p256 = por %p254, %p255
      %p257 = scmp.ne.s32.totalorder %s249, %s252
      %p258 = scmp.eq.s32.totalorder %s23, 0
      %p259 = por %p257, %p258
      %p260 = scmp.ne.s32.totalorder %s249, %s252
      %p261 = scmp.eq.s32.totalorder %s28, 1
      %p262 = por %p260, %p261
      %p263 = scmp.ne.s32.totalorder %s252, %s253
      %p264 = scmp.eq.s32.totalorder %s28, 0
      %p265 = por %p263, %p264
      %p266 = scmp.ne.s32.totalorder %s252, %s253
      %p267 = scmp.eq.s32.totalorder %s29, 1
      %p268 = por %p266, %p267
      %p270 = scmp.ne.s32.totalorder %s253, %s269
      %p271 = scmp.eq.s32.totalorder %s29, 0
      %p272 = por %p270, %p271
      %s274 = sadd.s32 %s273, 1
      %p277 = scmp.eq.s32.totalorder %s23, 1
      %p278 = scmp.ne.s32.totalorder %s273, %s275
      %p279 = scmp.eq.s32.totalorder %s23, 0
      %p280 = por %p278, %p279
      %p281 = scmp.ne.s32.totalorder %s273, %s275
      %p282 = scmp.eq.s32.totalorder %s28, 1
      %p283 = por %p281, %p282
      %p284 = scmp.ne.s32.totalorder %s275, %s276
      %p285 = scmp.eq.s32.totalorder %s28, 0
      %p286 = por %p284, %p285
      %p287 = scmp.ne.s32.totalorder %s275, %s276
      %p288 = scmp.eq.s32.totalorder %s29, 1
      %p289 = por %p287, %p288
      %p291 = scmp.ne.s32.totalorder %s276, %s290
      %p292 = scmp.eq.s32.totalorder %s29, 0
      %p293 = por %p291, %p292
      %s295 = sadd.s32 %s294, 1
      %p298 = scmp.eq.s32.totalorder %s23, 1
      %p299 = scmp.ne.s32.totalorder %s294, %s296
      %p300 = scmp.eq.s32.totalorder %s23, 0
      %p301 = por %p299, %p300
      %p302 = scmp.ne.s32.totalorder %s294, %s296
      %p303 = scmp.eq.s32.totalorder %s28, 1
      %p304 = por %p302, %p303
      %p305 = scmp.ne.s32.totalorder %s296, %s297
      %p306 = scmp.eq.s32.totalorder %s28, 0
      %p307 = por %p305, %p306
      %p308 = scmp.ne.s32.totalorder %s296, %s297
      %p309 = scmp.eq.s32.totalorder %s29, 1
      %p310 = por %p308, %p309
      %p312 = scmp.ne.s32.totalorder %s297, %s311
      %p313 = scmp.eq.s32.totalorder %s29, 0
      %p314 = por %p312, %p313
      %s316 = sadd.s32 %s315, 1
      %p319 = scmp.eq.s32.totalorder %s23, 1
      %p320 = scmp.ne.s32.totalorder %s315, %s317
      %p321 = scmp.eq.s32.totalorder %s23, 0
      %p322 = por %p320, %p321
      %p323 = scmp.ne.s32.totalorder %s315, %s317
      %p324 = scmp.eq.s32.totalorder %s28, 1
      %p325 = por %p323, %p324
      %p326 = scmp.ne.s32.totalorder %s317, %s318
      %p327 = scmp.eq.s32.totalorder %s28, 0
      %p328 = por %p326, %p327
      %p329 = scmp.ne.s32.totalorder %s317, %s318
      %p330 = scmp.eq.s32.totalorder %s29, 1
      %p331 = por %p329, %p330
      %p333 = scmp.ne.s32.totalorder %s318, %s332
      %p334 = scmp.eq.s32.totalorder %s29, 0
      %p335 = por %p333, %p334
      %s336 = ssub.s32 %s30, %s42
      %p337 = scmp.eq.s32.totalorder %s336, 0
      %s339 = sadd.s32 %s338, 1
      %s340 = scalar_select %p337, %s338, %s339
      %p343 = pneg %p337
      %p344 = scmp.eq.s32.totalorder %s23, 1
      %p345 = por %p343, %p344
      %p346 = scmp.ne.s32.totalorder %s338, %s341
      %p347 = scmp.eq.s32.totalorder %s23, 0
      %p348 = por %p346, %p347
      %p349 = scmp.ne.s32.totalorder %s338, %s341
      %p350 = scmp.eq.s32.totalorder %s28, 1
      %p351 = por %p349, %p350
      %p352 = scmp.ne.s32.totalorder %s341, %s342
      %p353 = scmp.eq.s32.totalorder %s28, 0
      %p354 = por %p352, %p353
      %p355 = scmp.ne.s32.totalorder %s341, %s342
      %p356 = scmp.eq.s32.totalorder %s29, 1
      %p357 = por %p355, %p356
      %p359 = scmp.ne.s32.totalorder %s342, %s358
      %p360 = scmp.eq.s32.totalorder %s29, 0
      %p361 = por %p359, %p360
      %p362 = scmp.le.s32.totalorder 1, %s23
      %p363 = scmp.lt.s32.totalorder %s23, 3
      %p364 = pnand %p362, %p363
      %p365 = pneg %p364
      // Predicated region
      $region9: #{tpu_custom_call.1} parent=5 // pred_check
        _
      $region10: #{tpu_custom_call.1} parent=5 // pred_check_branch
        %367 = sbr.rel (%p364) target = $region12
      $region11: #{tpu_custom_call.1} parent=5 // pred_region
        %s368 = ssub.s32 %s23, 1
        // Predicated region
        $region13: #{tpu_custom_call.1} parent=11 // pred_check
          %p369 = pneg %p82
        $region14: #{tpu_custom_call.1} parent=11 // pred_check_branch
          %371 = sbr.rel (%p369) target = $region16
        $region15: #{tpu_custom_call.1} parent=11 // pred_region
          _
        $region16: #{tpu_custom_call.1} parent=11 // pred_fallthru
          _
        // Predicated region
        $region17: #{tpu_custom_call.1} parent=11 // pred_check
          %p372 = pneg %p103
        $region18: #{tpu_custom_call.1} parent=11 // pred_check_branch
          %374 = sbr.rel (%p372) target = $region20
        $region19: #{tpu_custom_call.1} parent=11 // pred_region
          _
        $region20: #{tpu_custom_call.1} parent=11 // pred_fallthru
          _
        // Predicated region
        $region21: #{tpu_custom_call.1} parent=11 // pred_check
          %p375 = pneg %p124
        $region22: #{tpu_custom_call.1} parent=11 // pred_check_branch
          %377 = sbr.rel (%p375) target = $region24
        $region23: #{tpu_custom_call.1} parent=11 // pred_region
          _
        $region24: #{tpu_custom_call.1} parent=11 // pred_fallthru
          _
        // Predicated region
        $region25: #{tpu_custom_call.1} parent=11 // pred_check
          %p378 = pneg %p145
        $region26: #{tpu_custom_call.1} parent=11 // pred_check_branch
          %380 = sbr.rel (%p378) target = $region28
        $region27: #{tpu_custom_call.1} parent=11 // pred_region
          _
        $region28: #{tpu_custom_call.1} parent=11 // pred_fallthru
          _
        // Predicated region
        $region29: #{tpu_custom_call.1} parent=11 // pred_check
          %p381 = pneg %p166
        $region30: #{tpu_custom_call.1} parent=11 // pred_check_branch
          %383 = sbr.rel (%p381) target = $region32
        $region31: #{tpu_custom_call.1} parent=11 // pred_region
          _
        $region32: #{tpu_custom_call.1} parent=11 // pred_fallthru
          _
        // Predicated region
        $region33: #{tpu_custom_call.1} parent=11 // pred_check
          %p384 = pneg %p187
        $region34: #{tpu_custom_call.1} parent=11 // pred_check_branch
          %386 = sbr.rel (%p384) target = $region36
        $region35: #{tpu_custom_call.1} parent=11 // pred_region
          _
        $region36: #{tpu_custom_call.1} parent=11 // pred_fallthru
          _
        // Predicated region
        $region37: #{tpu_custom_call.1} parent=11 // pred_check
          %p387 = pneg %p213
        $region38: #{tpu_custom_call.1} parent=11 // pred_check_branch
          %389 = sbr.rel (%p387) target = $region40
        $region39: #{tpu_custom_call.1} parent=11 // pred_region
          %391 = vsyncadd [#allocation5], 0
          %s392 = smul.addr %s33, 4
          %s393 = scalar_lea.hbm %s7, %s392
          %s394 = sshll.u32 %s393, 4
          %s395 = int_to_ptr.hbm [resolvable:$true] %s394
          %s396 = sshll.u32 [#allocation4], 4
          %s397 = int_to_ptr.vmem [resolvable:$true] %s396
          %402 = dma.hbm_to_vmem [thread:$0]  %s395, 256, %s397, [#allocation5], 64, 64, 4
        $region40: #{tpu_custom_call.1} parent=11 // pred_fallthru
          _
        // Predicated region
        $region41: #{tpu_custom_call.1} parent=11 // pred_check
          %p403 = pneg %p239
        $region42: #{tpu_custom_call.1} parent=11 // pred_check_branch
          %405 = sbr.rel (%p403) target = $region44
        $region43: #{tpu_custom_call.1} parent=11 // pred_region
          %p406 = scmp.lt.s32.totalorder %s33, 0
          %s407 = scalar_select %p406, %s33, 0
          %s408 = scalar_lea.vmem %s8, %s407
        $region44: #{tpu_custom_call.1} parent=11 // pred_fallthru
          _
        // Predicated region
        $region45: #{tpu_custom_call.1} parent=11 // pred_check
          %p409 = pneg %p265
        $region46: #{tpu_custom_call.1} parent=11 // pred_check_branch
          %411 = sbr.rel (%p409) target = $region48
        $region47: #{tpu_custom_call.1} parent=11 // pred_region
          %s412 = smul.u32 8, %s33
          %p413 = scmp.lt.s32.totalorder %s412, 7
          %s414 = scalar_select %p413, %s412, 7
          %s415 = smul.addr %s414, 4
          %s416 = scalar_lea.vmem %s9, %s415
          %s417 = smul.u32 8, %s33
        $region48: #{tpu_custom_call.1} parent=11 // pred_fallthru
          _
        // Predicated region
        $region49: #{tpu_custom_call.1} parent=11 // pred_check
          %p418 = pneg %p286
        $region50: #{tpu_custom_call.1} parent=11 // pred_check_branch
          %420 = sbr.rel (%p418) target = $region52
        $region51: #{tpu_custom_call.1} parent=11 // pred_region
          _
        $region52: #{tpu_custom_call.1} parent=11 // pred_fallthru
          _
        // Predicated region
        $region53: #{tpu_custom_call.1} parent=11 // pred_check
          %p421 = pneg %p307
        $region54: #{tpu_custom_call.1} parent=11 // pred_check_branch
          %423 = sbr.rel (%p421) target = $region56
        $region55: #{tpu_custom_call.1} parent=11 // pred_region
          _
        $region56: #{tpu_custom_call.1} parent=11 // pred_fallthru
          _
        // Predicated region
        $region57: #{tpu_custom_call.1} parent=11 // pred_check
          %p424 = pneg %p328
        $region58: #{tpu_custom_call.1} parent=11 // pred_check_branch
          %426 = sbr.rel (%p424) target = $region60
        $region59: #{tpu_custom_call.1} parent=11 // pred_region
          _
        $region60: #{tpu_custom_call.1} parent=11 // pred_fallthru
          _
      $region12: #{tpu_custom_call.1} parent=5 // pred_fallthru
        _
      %p427 = scmp.lt.s32.totalorder %s23, 2
      // Predicated region
      $region61: #{tpu_custom_call.1} parent=5 // pred_check
        %p428 = pneg %p427
      $region62: #{tpu_custom_call.1} parent=5 // pred_check_branch
        %430 = sbr.rel (%p428) target = $region64
      $region63: #{tpu_custom_call.1} parent=5 // pred_region
        // Predicated region
        $region65: #{tpu_custom_call.1} parent=63 // pred_check
          %p431 = pneg %p55
        $region66: #{tpu_custom_call.1} parent=63 // pred_check_branch
          %433 = sbr.rel (%p431) target = $region68
        $region67: #{tpu_custom_call.1} parent=63 // pred_region
          %p434 = scmp.lt.s32.totalorder %s30, 1
          %s435 = scalar_select %p434, %s30, 1
          %s436 = smul.addr %s435, 8
          %s437 = scalar_lea.vmem %s0, %s436
        $region68: #{tpu_custom_call.1} parent=63 // pred_fallthru
          _
      $region64: #{tpu_custom_call.1} parent=5 // pred_fallthru
        _
      %p438 = scmp.le.s32.totalorder 1, %s23
      %p439 = scmp.lt.s32.totalorder %s23, 3
      %p440 = pnand %p438, %p439
      %p441 = pneg %p440
      // Predicated region
      $region69: #{tpu_custom_call.1} parent=5 // pred_check
        _
      $region70: #{tpu_custom_call.1} parent=5 // pred_check_branch
        %443 = sbr.rel (%p440) target = $region72
      $region71: #{tpu_custom_call.1} parent=5 // pred_region
        %s444 = ssub.s32 %s23, 1
        // Predicated region
        $region73: #{tpu_custom_call.1} parent=71 // pred_check
          %p445 = pneg %p213
        $region74: #{tpu_custom_call.1} parent=71 // pred_check_branch
          %447 = sbr.rel (%p445) target = $region76
        $region75: #{tpu_custom_call.1} parent=71 // pred_region
          %449 = dma.done [#allocation5], 256
        $region76: #{tpu_custom_call.1} parent=71 // pred_fallthru
          _
        %p450 = scmp.lt.s32.totalorder %s32, 1
        %s451 = scalar_select %p450, %s32, 1
        %s452 = smul.addr %s451, 8
        %s453 = scalar_lea.vmem %s0, %s452
        %p454 = pneg %p61
        %p455 = pneg %p58
        %p456 = pneg %p82
        %p457 = pneg %p79
        %p458 = pneg %p103
        %p459 = pneg %p100
        %p460 = pneg %p124
        %p461 = pneg %p121
        %p462 = pneg %p145
        %p463 = pneg %p142
        %p464 = pneg %p166
        %p465 = pneg %p163
        %p466 = pneg %p187
        %p467 = pneg %p184
        %p468 = pneg %p213
        %p469 = pneg %p210
        %p470 = scmp.lt.s32.totalorder %s33, 0
        %s471 = scalar_select %p470, %s33, 0
        %s472 = scalar_lea.vmem %s8, %s471
        %p473 = pneg %p239
        %p474 = pneg %p236
        %s475 = smul.u32 8, %s33
        %p476 = scmp.lt.s32.totalorder %s475, 7
        %s477 = scalar_select %p476, %s475, 7
        %s478 = smul.addr %s477, 4
        %s479 = scalar_lea.vmem %s9, %s478
        %p480 = pneg %p265
        %p481 = pneg %p262
        %p482 = pneg %p286
        %p483 = pneg %p283
        %p484 = pneg %p307
        %p485 = pneg %p304
        %p486 = pneg %p328
        %p487 = pneg %p325
        %p488 = pneg %p354
        %p489 = pneg %p351
        %s490 = sand.u32 %s341, 1
        %s491 = scalar_lea.sflag [#allocation6], %s490
        %s492 = sand.u32 %s341, 1
        %s493 = smul.addr %s492, 8
        %s494 = scalar_lea.vmem [#allocation7], %s493
        %p495 = scmp.lt.s32.totalorder %s32, 1
        %s496 = scalar_select %p495, %s32, 1
        %s497 = smul.addr %s496, 8
        %s498 = scalar_lea.vmem %s0, %s497
        %p499 = scmp.lt.s32.totalorder %s33, 0
        %s500 = scalar_select %p499, %s33, 0
        %s501 = scalar_lea.vmem %s8, %s500
        %s502 = smul.u32 8, %s33
        %p503 = scmp.lt.s32.totalorder %s502, 7
        %s504 = scalar_select %p503, %s502, 7
        %s505 = smul.addr %s504, 4
        %s506 = scalar_lea.vmem %s9, %s505
        %s507 = smul.u32 8, %s33
        %p509 = scmp.eq.s32.totalorder %s33, 0
        // Predicated region
        $region77: #{tpu_custom_call.1} parent=71 // pred_check
          %p510 = pneg %p509
        $region78: #{tpu_custom_call.1} parent=71 // pred_check_branch
          %512 = sbr.rel (%p510) target = $region80
        $region79: #{tpu_custom_call.1} parent=71 // pred_region
          %v513 = vld [vmem:[%s498] sm:$0xff]
          %v514 = vpack.c.bf16 %v513, %v513
          %v515 = vld [vmem:[%s1] sm:$0xf]
          %v516 = vld [vmem:[%s1 + $0x4] sm:$0xf]
          %v517 = vld [vmem:[%s1 + $0x8] sm:$0xf]
          %v518 = vld [vmem:[%s1 + $0xc] sm:$0xf]
          %v519 = vld [vmem:[%s2] sm:$0x1]
          %v521 = vperm.slane %v519, 0
          %v527 = vunpack.c.l.b16 %v515
          %v528 = vunpack.c.l.b16 %v516
          %v529 = vunpack.c.l.b16 %v517
          %v530 = vunpack.c.l.b16 %v518
          %v531 = vpack.c.b16 %v528, %v527
          %v532 = vpack.c.b16 %v530, %v529
          %vm535 = vcmask 261120
          %v537 = vsel %vm535, %v514, 0
          %539 = vmatpush.bf16.msra.mxu0 0
          %540 = vmatpush.bf16.msra.mxu0 0
          %541 = vmatpush.bf16.msra.mxu0 0
          %542 = vmatpush.bf16.msra.mxu0 0
          %543 = vmatpush.bf16.msra.mxu0 0
          %544 = vmatpush.bf16.msra.mxu0 0
          %545 = vmatpush.bf16.msra.mxu0 %v532
          %546 = vmatpush.bf16.msra.mxu0 %v531
          %547 = vmatmul.bf16.gmra.mxu0 %v537
          %v548 = vpop.f32.mrf.mxu0
          %v549 = vadd.f32 %v521, %v548
          %v550 = vpop.f32.mrf.mxu0
          %551 = vdwg.mxu0
          %v552 = vmul.f32 %v549, 0.35355338
          %v553 = vpack.c.bf16 %v552, %v552
          %v554 = vpack.c.bf16 %v549, %v549
          %v556 = vunpack.c.l.b16 %v554
          %v557 = vpack.c.b16 %v556, %v556
          %558 = vrot.lane.b32.xlu0 %v557, 96
          %v559 = vpop.permute.xlu0 %558
          %vm560 = vcmask 64512
          %v562 = vsel %vm560, %v553, 0
          %v565 = vsel %vm560, %v559, 0
          %567 = vmatpush.bf16.xpose.msra.mxu0 0
          %568 = vmatpush.bf16.xpose.msra.mxu0 0
          %569 = vmatpush.bf16.xpose.msra.mxu0 0
          %570 = vmatpush.bf16.xpose.msra.mxu0 0
          %571 = vmatpush.bf16.xpose.msra.mxu0 0
          %572 = vmatpush.bf16.xpose.msra.mxu0 0
          %573 = vmatpush.bf16.xpose.msra.mxu0 0
          %574 = vmatpush.bf16.xpose.msra.mxu0 %v565
          %575 = vmatmul.bf16.gmra.mxu0 %v562
          %v576 = vpop.f32.mrf.mxu0
          %v577 = vadd.f32 0.0, %v576
          %v578 = vpop.f32.mrf.mxu0
          %579 = vdwg.mxu0
          %v580 = vsel %vm560, %v577, -inf
          %581 = vmax.xlane.f32.xlu0 %v580
          %v582 = vpop.xlane.xlu0 %581
          %v583 = vsub.f32 %v577, %v582
          %v584 = vmul.f32 %v583, 1.442695
          %v585 = vpow.pop %v584
          %v586 = vsel %vm560, %v585, 0.0
          %587 = vadd.xlane.f32.xlu0 %v586
          %v588 = vpop.xlane.xlu0 %587
          %v589 = vrcp.pop %v588
          %v590 = vmul.f32 %v585, %v589
          %v591 = vpack.c.bf16 %v590, %v590
          %592 = vrot.lane.b32.xlu0 %v557, 64
          %v593 = vpop.permute.xlu0 %592
          %v595 = vsel %vm560, %v591, 0
          %vm597 = vcmask 1043456
          %v599 = vsel %vm597, %v593, 0
          %601 = vmatpush.bf16.msra.mxu0 0
          %602 = vmatpush.bf16.msra.mxu0 0
          %603 = vmatpush.bf16.msra.mxu0 0
          %604 = vmatpush.bf16.msra.mxu0 0
          %605 = vmatpush.bf16.msra.mxu0 0
          %606 = vmatpush.bf16.msra.mxu0 0
          %607 = vmatpush.bf16.msra.mxu0 0
          %608 = vmatpush.bf16.msra.mxu0 %v599
          %609 = vmatmul.bf16.gmra.mxu0 %v595
          %v610 = vpop.f32.mrf.mxu0
          %v611 = vadd.f32 0.0, %v610
          %v612 = vpop.f32.mrf.mxu0
          %613 = vdwg.mxu0
          %v614 = vpack.c.bf16 %v611, %v611
          %v616 = vunpack.c.l.b16 %v553
          %v617 = vpack.c.b16 %v616, %v616
          %618 = vrot.lane.b32.xlu0 %v617, 120
          %v619 = vpop.permute.xlu0 %618
          %620 = vrot.lane.b32.xlu0 %v557, 88
          %v621 = vpop.permute.xlu0 %620
          %v623 = vsel %vm560, %v619, 0
          %v626 = vsel %vm560, %v621, 0
          %628 = vmatpush.bf16.xpose.msra.mxu0 0
          %629 = vmatpush.bf16.xpose.msra.mxu0 0
          %630 = vmatpush.bf16.xpose.msra.mxu0 0
          %631 = vmatpush.bf16.xpose.msra.mxu0 0
          %632 = vmatpush.bf16.xpose.msra.mxu0 0
          %633 = vmatpush.bf16.xpose.msra.mxu0 0
          %634 = vmatpush.bf16.xpose.msra.mxu0 0
          %635 = vmatpush.bf16.xpose.msra.mxu0 %v626
          %636 = vmatmul.bf16.gmra.mxu0 %v623
          %v637 = vpop.f32.mrf.mxu0
          %v638 = vadd.f32 0.0, %v637
          %v639 = vpop.f32.mrf.mxu0
          %640 = vdwg.mxu0
          %v641 = vsel %vm560, %v638, -inf
          %642 = vmax.xlane.f32.xlu0 %v641
          %v643 = vpop.xlane.xlu0 %642
          %v644 = vsub.f32 %v638, %v643
          %v645 = vmul.f32 %v644, 1.442695
          %v646 = vpow.pop %v645
          %v647 = vsel %vm560, %v646, 0.0
          %648 = vadd.xlane.f32.xlu0 %v647
          %v649 = vpop.xlane.xlu0 %648
          %v650 = vrcp.pop %v649
          %v651 = vmul.f32 %v646, %v650
          %v652 = vpack.c.bf16 %v651, %v651
          %653 = vrot.lane.b32.xlu0 %v557, 56
          %v654 = vpop.permute.xlu0 %653
          %v656 = vsel %vm560, %v652, 0
          %v659 = vsel %vm597, %v654, 0
          %661 = vmatpush.bf16.msra.mxu0 0
          %662 = vmatpush.bf16.msra.mxu0 0
          %663 = vmatpush.bf16.msra.mxu0 0
          %664 = vmatpush.bf16.msra.mxu0 0
          %665 = vmatpush.bf16.msra.mxu0 0
          %666 = vmatpush.bf16.msra.mxu0 0
          %667 = vmatpush.bf16.msra.mxu0 0
          %668 = vmatpush.bf16.msra.mxu0 %v659
          %669 = vmatmul.bf16.gmra.mxu0 %v656
          %v670 = vpop.f32.mrf.mxu0
          %v671 = vadd.f32 0.0, %v670
          %v672 = vpop.f32.mrf.mxu0
          %673 = vdwg.mxu0
          %v674 = vpack.c.bf16 %v671, %v671
          %675 = vrot.lane.b32.xlu0 %v617, 112
          %v676 = vpop.permute.xlu0 %675
          %677 = vrot.lane.b32.xlu0 %v557, 80
          %v678 = vpop.permute.xlu0 %677
          %v680 = vsel %vm560, %v676, 0
          %v683 = vsel %vm560, %v678, 0
          %685 = vmatpush.bf16.xpose.msra.mxu0 0
          %686 = vmatpush.bf16.xpose.msra.mxu0 0
          %687 = vmatpush.bf16.xpose.msra.mxu0 0
          %688 = vmatpush.bf16.xpose.msra.mxu0 0
          %689 = vmatpush.bf16.xpose.msra.mxu0 0
          %690 = vmatpush.bf16.xpose.msra.mxu0 0
          %691 = vmatpush.bf16.xpose.msra.mxu0 0
          %692 = vmatpush.bf16.xpose.msra.mxu0 %v683
          %693 = vmatmul.bf16.gmra.mxu0 %v680
          %v694 = vpop.f32.mrf.mxu0
          %v695 = vadd.f32 0.0, %v694
          %v696 = vpop.f32.mrf.mxu0
          %697 = vdwg.mxu0
          %v698 = vsel %vm560, %v695, -inf
          %699 = vmax.xlane.f32.xlu0 %v698
          %v700 = vpop.xlane.xlu0 %699
          %v701 = vsub.f32 %v695, %v700
          %v702 = vmul.f32 %v701, 1.442695
          %v703 = vpow.pop %v702
          %v704 = vsel %vm560, %v703, 0.0
          %705 = vadd.xlane.f32.xlu0 %v704
          %v706 = vpop.xlane.xlu0 %705
          %v707 = vrcp.pop %v706
          %v708 = vmul.f32 %v703, %v707
          %v709 = vpack.c.bf16 %v708, %v708
          %710 = vrot.lane.b32.xlu0 %v557, 48
          %v711 = vpop.permute.xlu0 %710
          %v713 = vsel %vm560, %v709, 0
          %v716 = vsel %vm597, %v711, 0
          %718 = vmatpush.bf16.msra.mxu0 0
          %719 = vmatpush.bf16.msra.mxu0 0
          %720 = vmatpush.bf16.msra.mxu0 0
          %721 = vmatpush.bf16.msra.mxu0 0
          %722 = vmatpush.bf16.msra.mxu0 0
          %723 = vmatpush.bf16.msra.mxu0 0
          %724 = vmatpush.bf16.msra.mxu0 0
          %725 = vmatpush.bf16.msra.mxu0 %v716
          %726 = vmatmul.bf16.gmra.mxu0 %v713
          %v727 = vpop.f32.mrf.mxu0
          %v728 = vadd.f32 0.0, %v727
          %v729 = vpop.f32.mrf.mxu0
          %730 = vdwg.mxu0
          %v731 = vpack.c.bf16 %v728, %v728
          %732 = vrot.lane.b32.xlu0 %v617, 104
          %v733 = vpop.permute.xlu0 %732
          %734 = vrot.lane.b32.xlu0 %v557, 72
          %v735 = vpop.permute.xlu0 %734
          %v737 = vsel %vm560, %v733, 0
          %v740 = vsel %vm560, %v735, 0
          %742 = vmatpush.bf16.xpose.msra.mxu0 0
          %743 = vmatpush.bf16.xpose.msra.mxu0 0
          %744 = vmatpush.bf16.xpose.msra.mxu0 0
          %745 = vmatpush.bf16.xpose.msra.mxu0 0
          %746 = vmatpush.bf16.xpose.msra.mxu0 0
          %747 = vmatpush.bf16.xpose.msra.mxu0 0
          %748 = vmatpush.bf16.xpose.msra.mxu0 0
          %749 = vmatpush.bf16.xpose.msra.mxu0 %v740
          %750 = vmatmul.bf16.gmra.mxu0 %v737
          %v751 = vpop.f32.mrf.mxu0
          %v752 = vadd.f32 0.0, %v751
          %v753 = vpop.f32.mrf.mxu0
          %754 = vdwg.mxu0
          %v755 = vsel %vm560, %v752, -inf
          %756 = vmax.xlane.f32.xlu0 %v755
          %v757 = vpop.xlane.xlu0 %756
          %v758 = vsub.f32 %v752, %v757
          %v759 = vmul.f32 %v758, 1.442695
          %v760 = vpow.pop %v759
          %v761 = vsel %vm560, %v760, 0.0
          %762 = vadd.xlane.f32.xlu0 %v761
          %v763 = vpop.xlane.xlu0 %762
          %v764 = vrcp.pop %v763
          %v765 = vmul.f32 %v760, %v764
          %v766 = vpack.c.bf16 %v765, %v765
          %767 = vrot.lane.b32.xlu0 %v557, 40
          %v768 = vpop.permute.xlu0 %767
          %v770 = vsel %vm560, %v766, 0
          %v773 = vsel %vm597, %v768, 0
          %775 = vmatpush.bf16.msra.mxu0 0
          %776 = vmatpush.bf16.msra.mxu0 0
          %777 = vmatpush.bf16.msra.mxu0 0
          %778 = vmatpush.bf16.msra.mxu0 0
          %779 = vmatpush.bf16.msra.mxu0 0
          %780 = vmatpush.bf16.msra.mxu0 0
          %781 = vmatpush.bf16.msra.mxu0 0
          %782 = vmatpush.bf16.msra.mxu0 %v773
          %783 = vmatmul.bf16.gmra.mxu0 %v770
          %v784 = vpop.f32.mrf.mxu0
          %v785 = vadd.f32 0.0, %v784
          %v786 = vpop.f32.mrf.mxu0
          %787 = vdwg.mxu0
          %v788 = vpack.c.bf16 %v785, %v785
          %v790 = vunpack.c.l.b16 %v674
          %v791 = vpack.c.b16 %v790, %v790
          %792 = vrot.lane.b32.xlu0 %v791, 8
          %v793 = vpop.permute.xlu0 %792
          %v795 = vunpack.c.l.b16 %v731
          %v796 = vpack.c.b16 %v795, %v795
          %797 = vrot.lane.b32.xlu0 %v796, 16
          %v798 = vpop.permute.xlu0 %797
          %v800 = vunpack.c.l.b16 %v788
          %v801 = vpack.c.b16 %v800, %v800
          %802 = vrot.lane.b32.xlu0 %v801, 24
          %v803 = vpop.permute.xlu0 %802
          %v806 = vsel %vm560, %v614, %v793
          %vm807 = vcmask 130048
          %v809 = vsel %vm807, %v806, %v798
          %vm810 = vcmask 195584
          %v812 = vsel %vm810, %v809, %v803
          %v813 = vld [vmem:[%s3] sm:$0xf]
          %v814 = vld [vmem:[%s3 + $0x4] sm:$0xf]
          %v815 = vld [vmem:[%s3 + $0x8] sm:$0xf]
          %v816 = vld [vmem:[%s3 + $0xc] sm:$0xf]
          %v817 = vld [vmem:[%s4] sm:$0x1]
          %v819 = vperm.slane %v817, 0
          %v825 = vunpack.c.l.b16 %v813
          %v826 = vunpack.c.l.b16 %v814
          %v827 = vunpack.c.l.b16 %v815
          %v828 = vunpack.c.l.b16 %v816
          %v829 = vpack.c.b16 %v826, %v825
          %v830 = vpack.c.b16 %v828, %v827
          %v833 = vsel %vm535, %v812, 0
          %835 = vmatpush.bf16.msra.mxu0 0
          %836 = vmatpush.bf16.msra.mxu0 0
          %837 = vmatpush.bf16.msra.mxu0 0
          %838 = vmatpush.bf16.msra.mxu0 0
          %839 = vmatpush.bf16.msra.mxu0 0
          %840 = vmatpush.bf16.msra.mxu0 0
          %841 = vmatpush.bf16.msra.mxu0 %v830
          %842 = vmatpush.bf16.msra.mxu0 %v829
          %843 = vmatmul.bf16.gmra.mxu0 %v833
          %v844 = vpop.f32.mrf.mxu0
          %v845 = vadd.f32 %v819, %v844
          %v846 = vpop.f32.mrf.mxu0
          %847 = vdwg.mxu0
          %v848 = vadd.f32 %v513, %v845
          %v849 = vsel %vm535, %v848, 0.0
          %850 = vadd.xlane.f32.xlu0 %v849
          %v851 = vpop.xlane.xlu0 %850
          %v852 = vrcp.pop 32.0
          %v853 = vmul.f32 32.0, %v852
          %v854 = vsub.f32 1.0, %v853
          %v855 = vmul.f32 %v852, %v854
          %v856 = vadd.f32 %v852, %v855
          %vm857 = vweird.f32 %v852
          %v858 = vsel %vm857, %v852, %v856
          %v859 = vmul.f32 %v851, %v858
          %v860 = vsub.f32 %v848, %v859
          %v861 = vmul.f32 %v860, %v860
          %v862 = vsel %vm535, %v861, 0.0
          %863 = vadd.xlane.f32.xlu0 %v862
          %v864 = vpop.xlane.xlu0 %863
          %v865 = vmul.f32 %v864, %v858
          %v866 = vadd.f32 %v865, 1e-05
          %v867 = vrsqrt.pop %v866
          %v868 = vmul.f32 %v867, %v866
          %v869 = vmul.f32 %v868, %v867
          %v870 = vmul.f32 0.5, %v869
          %v871 = vsub.f32 1.5, %v870
          %v872 = vmul.f32 %v867, %v871
          %vm873 = vweird.f32 %v866
          %vm874 = vweird.f32 %v867
          %vm875 = vmor %vm873, %vm874
          %v876 = vsel %vm875, %v867, %v872
          %v877 = vmul.f32 %v860, %v876
          %v878 = vld [vmem:[%s5] sm:$0x1]
          %v880 = vperm.slane %v878, 0
          %v882 = vmul.f32 %v877, %v880
          %v883 = vld [vmem:[%s6] sm:$0x1]
          %v885 = vperm.slane %v883, 0
          %v887 = vadd.f32 %v882, %v885
          %888 = vst.msk [vmem:[#allocation2] sm:$0xff] %vm535, %v887
          %889 = vst.msk [vmem:[#allocation3] sm:$0xff] %vm535, 0.0
        $region80: #{tpu_custom_call.1} parent=71 // pred_fallthru
          _
        %v890 = vld [vmem:[#allocation2] sm:$0xff]
        %v891 = vpack.c.bf16 %v890, %v890
        %v892 = vld [vmem:[#allocation4] sm:$0xf]
        %v893 = vld [vmem:[#allocation4 + $0x4] sm:$0xf]
        %v894 = vld [vmem:[#allocation4 + $0x8] sm:$0xf]
        %v895 = vld [vmem:[#allocation4 + $0xc] sm:$0xf]
        %v896 = vld [vmem:[%s501] sm:$0x1]
        %v898 = vperm.slane %v896, 0
        %v904 = vunpack.c.l.b16 %v892
        %v905 = vunpack.c.l.b16 %v893
        %v906 = vunpack.c.l.b16 %v894
        %v907 = vunpack.c.l.b16 %v895
        %v908 = vpack.c.b16 %v905, %v904
        %v909 = vpack.c.b16 %v907, %v906
        %vm912 = vcmask 261120
        %v914 = vsel %vm912, %v891, 0
        %916 = vmatpush.bf16.msra.mxu0 0
        %917 = vmatpush.bf16.msra.mxu0 0
        %918 = vmatpush.bf16.msra.mxu0 0
        %919 = vmatpush.bf16.msra.mxu0 0
        %920 = vmatpush.bf16.msra.mxu0 0
        %921 = vmatpush.bf16.msra.mxu0 0
        %922 = vmatpush.bf16.msra.mxu0 %v909
        %923 = vmatpush.bf16.msra.mxu0 %v908
        %924 = vmatmul.bf16.gmra.mxu0 %v914
        %v925 = vpop.f32.mrf.mxu0
        %v926 = vadd.f32 %v898, %v925
        %v927 = vpop.f32.mrf.mxu0
        %928 = vdwg.mxu0
        %v929 = vmax.f32 %v926, 0.0
        %v930 = vld [vmem:[#allocation3] sm:$0xff]
        %v931 = vpack.c.bf16 %v929, %v929
        %v932 = vld [vmem:[%s506] sm:$0xf]
        %v933 = vld [vmem:[%s506 + $0x4] sm:$0xf]
        %v934 = vld [vmem:[%s506 + $0x8] sm:$0xf]
        %v935 = vld [vmem:[%s506 + $0xc] sm:$0xf]
        %v936 = vld [vmem:[%s506 + $0x10] sm:$0xf]
        %v937 = vld [vmem:[%s506 + $0x14] sm:$0xf]
        %v938 = vld [vmem:[%s506 + $0x18] sm:$0xf]
        %v939 = vld [vmem:[%s506 + $0x1c] sm:$0xf]
        %v948 = vunpack.c.l.b16 %v932
        %v949 = vunpack.c.l.b16 %v933
        %v950 = vunpack.c.l.b16 %v934
        %v951 = vunpack.c.l.b16 %v935
        %v952 = vunpack.c.l.b16 %v936
        %v953 = vunpack.c.l.b16 %v937
        %v954 = vunpack.c.l.b16 %v938
        %v955 = vunpack.c.l.b16 %v939
        %v956 = vpack.c.b16 %v949, %v948
        %v957 = vpack.c.b16 %v951, %v950
        %v958 = vpack.c.b16 %v953, %v952
        %v959 = vpack.c.b16 %v955, %v954
        %vm964 = vcmask 523264
        %v966 = vsel %vm964, %v931, 0
        %968 = vmatpush.bf16.msra.mxu0 0
        %969 = vmatpush.bf16.msra.mxu0 0
        %970 = vmatpush.bf16.msra.mxu0 0
        %971 = vmatpush.bf16.msra.mxu0 0
        %972 = vmatpush.bf16.msra.mxu0 %v959
        %973 = vmatpush.bf16.msra.mxu0 %v958
        %974 = vmatpush.bf16.msra.mxu0 %v957
        %975 = vmatpush.bf16.msra.mxu0 %v956
        %976 = vmatmul.bf16.gmra.mxu0 %v966
        %v977 = vpop.f32.mrf.mxu0
        %v978 = vadd.f32 0.0, %v977
        %v979 = vpop.f32.mrf.mxu0
        %980 = vdwg.mxu0
        %v981 = vadd.f32 %v930, %v978
        %982 = vst.msk [vmem:[#allocation3] sm:$0xff] %vm912, %v981
        // Predicated region
        $region81: #{tpu_custom_call.1} parent=71 // pred_check
          %p983 = pneg %p509
        $region82: #{tpu_custom_call.1} parent=71 // pred_check_branch
          %985 = sbr.rel (%p983) target = $region84
        $region83: #{tpu_custom_call.1} parent=71 // pred_region
          %v986 = vld [vmem:[#allocation2] sm:$0xff]
          %v987 = vld [vmem:[#allocation3] sm:$0xff]
          %v988 = vadd.f32 %v986, %v987
          %v989 = vld [vmem:[%s10] sm:$0x1]
          %v991 = vperm.slane %v989, 0
          %v993 = vadd.f32 %v988, %v991
          %v994 = vsel %vm912, %v993, 0.0
          %995 = vadd.xlane.f32.xlu0 %v994
          %v996 = vpop.xlane.xlu0 %995
          %v997 = vrcp.pop 32.0
          %v998 = vmul.f32 32.0, %v997
          %v999 = vsub.f32 1.0, %v998
          %v1000 = vmul.f32 %v997, %v999
          %v1001 = vadd.f32 %v997, %v1000
          %vm1002 = vweird.f32 %v997
          %v1003 = vsel %vm1002, %v997, %v1001
          %v1004 = vmul.f32 %v996, %v1003
          %v1005 = vsub.f32 %v993, %v1004
          %v1006 = vmul.f32 %v1005, %v1005
          %v1007 = vsel %vm912, %v1006, 0.0
          %1008 = vadd.xlane.f32.xlu0 %v1007
          %v1009 = vpop.xlane.xlu0 %1008
          %v1010 = vmul.f32 %v1009, %v1003
          %v1011 = vadd.f32 %v1010, 1e-05
          %v1012 = vrsqrt.pop %v1011
          %v1013 = vmul.f32 %v1012, %v1011
          %v1014 = vmul.f32 %v1013, %v1012
          %v1015 = vmul.f32 0.5, %v1014
          %v1016 = vsub.f32 1.5, %v1015
          %v1017 = vmul.f32 %v1012, %v1016
          %vm1018 = vweird.f32 %v1011
          %vm1019 = vweird.f32 %v1012
          %vm1020 = vmor %vm1018, %vm1019
          %v1021 = vsel %vm1020, %v1012, %v1017
          %v1022 = vmul.f32 %v1005, %v1021
          %v1023 = vld [vmem:[%s11] sm:$0x1]
          %v1025 = vperm.slane %v1023, 0
          %v1027 = vmul.f32 %v1022, %v1025
          %v1028 = vld [vmem:[%s12] sm:$0x1]
          %v1030 = vperm.slane %v1028, 0
          %v1032 = vadd.f32 %v1027, %v1030
          %1033 = vst.msk [vmem:[%s494] sm:$0xff] %vm912, %v1032
        $region84: #{tpu_custom_call.1} parent=71 // pred_fallthru
          _
        %s1034 = sand.u32 %s341, 1
        %s1035 = scalar_lea.sflag [#allocation6], %s1034
        %s1036 = sand.u32 %s341, 1
        %s1037 = smul.addr %s1036, 8
        %s1038 = scalar_lea.vmem [#allocation7], %s1037
        // Predicated region
        $region85: #{tpu_custom_call.1} parent=71 // pred_check
          %p1039 = pneg %p351
        $region86: #{tpu_custom_call.1} parent=71 // pred_check_branch
          %1041 = sbr.rel (%p1039) target = $region88
        $region87: #{tpu_custom_call.1} parent=71 // pred_region
          %1043 = vsyncadd %s1035, 0
          %s1044 = smul.addr %s32, 8
          %s1045 = scalar_lea.hbm %s13, %s1044
          %s1047 = sshll.u32 %s1038, 4
          %s1048 = int_to_ptr.vmem [resolvable:$true] %s1047
          %s1049 = sshll.u32 %s1045, 4
          %s1050 = int_to_ptr.hbm [resolvable:$true] %s1049
          %1052 = dma.vmem_to_hbm [thread:$0]  %s1048, 128, %s1050, %s1035
        $region88: #{tpu_custom_call.1} parent=71 // pred_fallthru
          _
      $region72: #{tpu_custom_call.1} parent=5 // pred_fallthru
        _
      %p1053 = scmp.le.s32.totalorder 2, %s23
      // Predicated region
      $region89: #{tpu_custom_call.1} parent=5 // pred_check
        %p1054 = pneg %p1053
      $region90: #{tpu_custom_call.1} parent=5 // pred_check_branch
        %1056 = sbr.rel (%p1054) target = $region92
      $region91: #{tpu_custom_call.1} parent=5 // pred_region
        %s1057 = ssub.s32 %s23, 2
        // Predicated region
        $region93: #{tpu_custom_call.1} parent=91 // pred_check
          %p1058 = pneg %p357
        $region94: #{tpu_custom_call.1} parent=91 // pred_check_branch
          %1060 = sbr.rel (%p1058) target = $region96
        $region95: #{tpu_custom_call.1} parent=91 // pred_region
          %s1061 = sand.u32 %s342, 1
          %s1062 = scalar_lea.sflag [#allocation6], %s1061
          %s1063 = sand.u32 %s342, 1
          %s1064 = smul.addr %s1063, 8
          %s1065 = scalar_lea.vmem [#allocation7], %s1064
          %1067 = dma.done %s1062, 128
        $region96: #{tpu_custom_call.1} parent=91 // pred_fallthru
          _
      $region92: #{tpu_custom_call.1} parent=5 // pred_fallthru
        _
    $region6: #{tpu_custom_call.1} parent=1 // loop_footer
      %s27 = sadd.s32 1, %s23
    $region7: #{tpu_custom_call.1} parent=1 // loop_footer_branch
      %22 = sbr.rel target = $region3
    $region8: #{tpu_custom_call.1} parent=1 // loop_exit
      _
    %1068 = vsyncpa [#allocation5], 1
    %s1069 = scalar_lea.sflag [#allocation5], 1
    %1070 = vsyncpa %s1069, 1
    %1071 = vsyncpa [#allocation6], 1
    %s1072 = scalar_lea.sflag [#allocation6], 1
    %1073 = vsyncpa %s1072, 1

</llo_original>
